<compile_context>
chip_gen: v7x
topology: tpu7x:2x2x1
jax: 0.10.0
libtpu: 0.0.40
codegen_flags: <defaults>
</compile_context>

<pallas_src>
import functools
import math
from types import SimpleNamespace

import jax
import jax.numpy as jnp
from jax.experimental import pallas as pl
from jax.experimental.pallas import tpu as pltpu

NEG_INF = -1e10
_VMEM_LIMIT = 48 * 1024 * 1024   # safe on v7x (64 MiB phys), > v5e/v6e defaults


def _mosaic_params(sem):
  return pltpu.CompilerParams(dimension_semantics=sem,
                              vmem_limit_bytes=_VMEM_LIMIT)


# ----------------------------- tiling helper -----------------------------

def _pick_tile(dim, cap, align):
  """Largest multiple of `align` <= cap that divides dim, else the full dim."""
  if dim <= cap:
    return dim
  t = (cap // align) * align
  while t >= align:
    if dim % t == 0:
      return t
    t -= align
  return dim   # no aligned divisor under the cap -> do not tile this axis


# --------------------------- fused linear kernel ---------------------------
# y = [LN(x)] @ W (+ bias) (relu?) (* scale) (+ residual); bf16 MXU operands,
# f32 accumulation across K tiles.  When LN is fused the normalized x is
# computed once per M tile (at j == 0) into a bf16 VMEM scratch.

def _linear_kernel(*refs, nk, has_bias, has_ln, has_res, activation, scale,
                   eps):
  idx = 0
  x_ref = refs[idx]; idx += 1
  w_ref = refs[idx]; idx += 1
  b_ref = g_ref = be_ref = r_ref = None
  if has_bias:
    b_ref = refs[idx]; idx += 1
  if has_ln:
    g_ref = refs[idx]; be_ref = refs[idx + 1]; idx += 2
  if has_res:
    r_ref = refs[idx]; idx += 1
  o_ref = refs[idx]; idx += 1
  acc_ref = xn_ref = None
  if nk > 1:
    acc_ref = refs[idx]; idx += 1
  if has_ln:
    xn_ref = refs[idx]; idx += 1

  def epilogue(y):
    if has_bias:
      y = y + b_ref[...].astype(jnp.float32)
    if activation == "relu":
      y = jnp.maximum(y, 0.0)
    if scale != 1.0:
      y = y * scale
    if has_res:
      y = y + r_ref[...].astype(jnp.float32)
    return y.astype(o_ref.dtype)

  if has_ln:
    # K is not tiled when LN is fused (nk == 1): full rows in one block.
    j = pl.program_id(1)

    @pl.when(j == 0)          # LN computed once per M tile, reused for j > 0
    def _():
      xf = x_ref[...].astype(jnp.float32)
      mean = jnp.mean(xf, axis=-1, keepdims=True)
      var = jnp.mean(jnp.square(xf - mean), axis=-1, keepdims=True)
      xn = (xf - mean) * jax.lax.rsqrt(var + eps) * g_ref[...] + be_ref[...]
      xn_ref[...] = xn.astype(jnp.bfloat16)

    y = jnp.dot(xn_ref[...], w_ref[...], preferred_element_type=jnp.float32)
    o_ref[...] = epilogue(y)
  elif nk == 1:
    y = jnp.dot(x_ref[...].astype(jnp.bfloat16), w_ref[...],
                preferred_element_type=jnp.float32)
    o_ref[...] = epilogue(y)
  else:
    k = pl.program_id(2)

    @pl.when(k == 0)
    def _():
      acc_ref[...] = jnp.zeros_like(acc_ref)

    acc_ref[...] += jnp.dot(x_ref[...].astype(jnp.bfloat16), w_ref[...],
                            preferred_element_type=jnp.float32)

    @pl.when(k == nk - 1)
    def _():
      o_ref[...] = epilogue(acc_ref[...])


def pallas_linear(x, w, b=None, residual=None, ln=None, activation=None,
                  scale=1.0, out_dtype=jnp.float32,
                  tm_cap=512, tn_cap=1024, tk_cap=512):
  """x: (M, K), w: (K, N) bf16. Optional fused LN / bias / activation / residual."""
  M, K = x.shape
  K2, N = w.shape
  assert K == K2
  has_bias = b is not None
  has_ln = ln is not None
  has_res = residual is not None
  eps = float(ln[2]) if has_ln else 0.0

  tm = _pick_tile(M, tm_cap, 8)
  tn = _pick_tile(N, tn_cap, 128)
  tk = K if has_ln else _pick_tile(K, tk_cap, 128)   # LN needs the full K row
  nk = K // tk
  grid = (M // tm, N // tn, nk)

  in_specs = [pl.BlockSpec((tm, tk), lambda i, j, k: (i, k)),
              pl.BlockSpec((tk, tn), lambda i, j, k: (k, j))]
  args = [x, w]
  if has_bias:
    in_specs.append(pl.BlockSpec((1, tn), lambda i, j, k: (0, j)))
    args.append(b.reshape(1, N).astype(jnp.float32))
  if has_ln:
    in_specs.append(pl.BlockSpec((1, tk), lambda i, j, k: (0, k)))
    in_specs.append(pl.BlockSpec((1, tk), lambda i, j, k: (0, k)))
    args.append(ln[0].reshape(1, K).astype(jnp.float32))
    args.append(ln[1].reshape(1, K).astype(jnp.float32))
  if has_res:
    in_specs.append(pl.BlockSpec((tm, tn), lambda i, j, k: (i, j)))
    args.append(residual)

  scratch = []
  if nk > 1:
    scratch.append(pltpu.VMEM((tm, tn), jnp.float32))
  if has_ln:
    scratch.append(pltpu.VMEM((tm, tk), jnp.bfloat16))

  # With LN fused, the j axis must stay on one core (j == 0 fills the scratch).
  sem = ("parallel", "arbitrary", "arbitrary") if has_ln else \
        ("parallel", "parallel", "arbitrary")

  return pl.pallas_call(
      functools.partial(_linear_kernel, nk=nk, has_bias=has_bias,
                        has_ln=has_ln, has_res=has_res,
                        activation=activation, scale=scale, eps=eps),
      grid=grid,
      in_specs=in_specs,
      out_specs=pl.BlockSpec((tm, tn), lambda i, j, k: (i, j)),
      out_shape=jax.ShapeDtypeStruct((M, N), out_dtype),
      scratch_shapes=scratch,
      compiler_params=_mosaic_params(sem),
  )(*args)


# ------------------------------ fused FFN kernel ------------------------------
# out = LN(x) @ W1 + b1 -> relu -> @ W2 + b2 + x, F tiled as the reduction axis
# so the (tm, F) hidden never leaves VMEM.

def _ffn_kernel(x_ref, w1_ref, b1_ref, w2_ref, b2_ref, g_ref, be_ref, o_ref,
                acc_ref, xn_ref, *, nf, eps):
  f = pl.program_id(1)

  @pl.when(f == 0)
  def _():
    acc_ref[...] = jnp.zeros_like(acc_ref)
    x = x_ref[...].astype(jnp.float32)
    mean = jnp.mean(x, axis=-1, keepdims=True)
    var = jnp.mean(jnp.square(x - mean), axis=-1, keepdims=True)
    xn = (x - mean) * jax.lax.rsqrt(var + eps) * g_ref[...] + be_ref[...]
    xn_ref[...] = xn.astype(jnp.bfloat16)

  h = jnp.dot(xn_ref[...], w1_ref[...], preferred_element_type=jnp.float32)
  h = jnp.maximum(h + b1_ref[...], 0.0)
  acc_ref[...] += jnp.dot(h.astype(jnp.bfloat16), w2_ref[...],
                          preferred_element_type=jnp.float32)

  @pl.when(f == nf - 1)
  def _():
    o_ref[...] = (acc_ref[...] + b2_ref[...] +
                  x_ref[...].astype(jnp.float32)).astype(o_ref.dtype)


def pallas_ffn(x, w1, b1, w2, b2, g, beta, eps, *, tm_cap=512, tf_cap=1024):
  M, E = x.shape
  E1, F = w1.shape
  assert E1 == E and w2.shape == (F, E)
  tm = _pick_tile(M, tm_cap, 8)
  tf = _pick_tile(F, tf_cap, 128)
  nf = F // tf
  return pl.pallas_call(
      functools.partial(_ffn_kernel, nf=nf, eps=float(eps)),
      grid=(M // tm, nf),
      in_specs=[
          pl.BlockSpec((tm, E), lambda i, f: (i, 0)),   # x (f32, also residual)
          pl.BlockSpec((E, tf), lambda i, f: (0, f)),   # W1 (bf16)
          pl.BlockSpec((1, tf), lambda i, f: (0, f)),   # b1
          pl.BlockSpec((tf, E), lambda i, f: (f, 0)),   # W2 (bf16)
          pl.BlockSpec((1, E), lambda i, f: (0, 0)),    # b2
          pl.BlockSpec((1, E), lambda i, f: (0, 0)),    # LN gamma
          pl.BlockSpec((1, E), lambda i, f: (0, 0)),    # LN beta
      ],
      out_specs=pl.BlockSpec((tm, E), lambda i, f: (i, 0)),
      out_shape=jax.ShapeDtypeStruct((M, E), jnp.float32),
      scratch_shapes=[pltpu.VMEM((tm, E), jnp.float32),
                      pltpu.VMEM((tm, E), jnp.bfloat16)],
      compiler_params=_mosaic_params(("parallel", "arbitrary")),
  )(x, w1, b1.reshape(1, F).astype(jnp.float32),
    w2, b2.reshape(1, E).astype(jnp.float32),
    g.reshape(1, E).astype(jnp.float32), beta.reshape(1, E).astype(jnp.float32))


# ------------------------------ attention kernel ------------------------------
# grid = (batch, head); head is the reduction axis.  Per step: one head's
# (L, S) f32 scores, softmax (EUP reciprocal), o_h = p @ v_h, then fused
# out-projection accumulate  acc += o_h @ W_out[h]  into a resident (L, E)
# accumulator.  At the last head, residual is added and a single lane-dense
# (L, E) store writes the result.  The additive mask is built in-kernel from
# tiny validity vectors + iota and cached in VMEM scratch at h == 0.

def _attn_kernel(q_ref, k_ref, v_ref, vq_ref, vk_ref, wo_ref, res_ref, o_ref,
                 mask_ref, acc_ref, *, nheads, causal, scale):
  h = pl.program_id(1)

  @pl.when(h == 0)
  def _():
    acc_ref[...] = jnp.zeros_like(acc_ref)
    vq = vq_ref[0]                         # (L, 1) f32 (1 = valid)
    vk = vk_ref[0]                         # (1, S) f32
    keep = (vq > 0.5) & (vk > 0.5)         # (L, S) bool
    if causal:
      L, S = mask_ref.shape
      li = jax.lax.broadcasted_iota(jnp.int32, (L, S), 0)
      si = jax.lax.broadcasted_iota(jnp.int32, (L, S), 1)
      keep = keep & (li >= si)
    mask_ref[...] = jnp.where(keep, 0.0, NEG_INF).astype(jnp.float32)

  # 1/sqrt(Dh) folded into the (L, Dh) q tile instead of the (L, S) scores.
  q = (q_ref[0, 0].astype(jnp.float32) * scale).astype(jnp.bfloat16)  # (L, Dh)
  k = k_ref[0, 0]                                                     # (S, Dh)
  v = v_ref[0, 0]                                                     # (S, Dh)

  s = jax.lax.dot_general(q, k, (((1,), (1,)), ((), ())),
                          preferred_element_type=jnp.float32)         # (L, S)
  s = s + mask_ref[...]
  m = jnp.max(s, axis=-1, keepdims=True)
  p = jnp.exp(s - m)
  denom = jnp.sum(p, axis=-1, keepdims=True)
  p = p * pl.reciprocal(denom, approx=True)

  oh = jnp.dot(p.astype(jnp.bfloat16), v,
               preferred_element_type=jnp.float32)                    # (L, Dh)
  acc_ref[...] += jnp.dot(oh.astype(jnp.bfloat16), wo_ref[0],
                          preferred_element_type=jnp.float32)         # (L, E)

  @pl.when(h == nheads - 1)
  def _():
    o_ref[0] = (acc_ref[...] + res_ref[0].astype(jnp.float32)).astype(o_ref.dtype)


def pallas_attention(q, k, v, vq_col, vk_row, w_out, residual, *, causal):
  """q: (B,H,L,Dh) bf16, k/v: (B,H,S,Dh) bf16, vq_col: (B,L,1) f32,
  vk_row: (B,1,S) f32, w_out: (H,Dh,E) bf16, residual: (B,L,E) f32.
  Returns residual + MultiHeadAttention(...) as (B, L, E) f32."""
  B, H, L, Dh = q.shape
  S = k.shape[2]
  E = w_out.shape[2]
  scale = 1.0 / math.sqrt(Dh)
  return pl.pallas_call(
      functools.partial(_attn_kernel, nheads=H, causal=causal, scale=scale),
      grid=(B, H),
      in_specs=[
          pl.BlockSpec((1, 1, L, Dh), lambda b, h: (b, h, 0, 0)),   # q
          pl.BlockSpec((1, 1, S, Dh), lambda b, h: (b, h, 0, 0)),   # k
          pl.BlockSpec((1, 1, S, Dh), lambda b, h: (b, h, 0, 0)),   # v
          pl.BlockSpec((1, L, 1), lambda b, h: (b, 0, 0)),          # query validity
          pl.BlockSpec((1, 1, S), lambda b, h: (b, 0, 0)),          # key validity
          pl.BlockSpec((1, Dh, E), lambda b, h: (h, 0, 0)),         # W_out[h]
          pl.BlockSpec((1, L, E), lambda b, h: (b, 0, 0)),          # residual
      ],
      out_specs=pl.BlockSpec((1, L, E), lambda b, h: (b, 0, 0)),
      out_shape=jax.ShapeDtypeStruct((B, L, E), jnp.float32),
      scratch_shapes=[pltpu.VMEM((L, S), jnp.float32),    # additive mask
                      pltpu.VMEM((L, E), jnp.float32)],   # out-proj accumulator
      compiler_params=_mosaic_params(("parallel", "arbitrary")),
  )(q, k, v, vq_col, vk_row, w_out, residual)


# ------------------------------ reference ops ------------------------------
# Pure-JAX implementations with matching bf16/f32 numerics for verification.

def ref_linear(x, w, b=None, residual=None, ln=None, activation=None,
               scale=1.0, out_dtype=jnp.float32):
  xf = x.astype(jnp.float32)
  if ln is not None:
    g, beta, eps = ln
    m = jnp.mean(xf, axis=-1, keepdims=True)
    v = jnp.mean(jnp.square(xf - m), axis=-1, keepdims=True)
    xf = (xf - m) * jax.lax.rsqrt(v + eps) * g.reshape(1, -1) + beta.reshape(1, -1)
  y = jnp.dot(xf.astype(jnp.bfloat16), w, preferred_element_type=jnp.float32)
  if b is not None:
    y = y + b.astype(jnp.float32)
  if activation == "relu":
    y = jnp.maximum(y, 0.0)
  if scale != 1.0:
    y = y * scale
  if residual is not None:
    y = y + residual.astype(jnp.float32)
  return y.astype(out_dtype)


def ref_ffn(x, w1, b1, w2, b2, g, beta, eps):
  xf = x.astype(jnp.float32)
  m = jnp.mean(xf, axis=-1, keepdims=True)
  v = jnp.mean(jnp.square(xf - m), axis=-1, keepdims=True)
  xn = (xf - m) * jax.lax.rsqrt(v + eps) * g.reshape(1, -1) + beta.reshape(1, -1)
  h = jnp.dot(xn.astype(jnp.bfloat16), w1,
              preferred_element_type=jnp.float32) + b1
  h = jnp.maximum(h, 0.0)
  y = jnp.dot(h.astype(jnp.bfloat16), w2,
              preferred_element_type=jnp.float32) + b2
  return (y + xf).astype(jnp.float32)


def ref_attention(q, k, v, vq_col, vk_row, w_out, residual, *, causal):
  B, H, L, Dh = q.shape
  S = k.shape[2]
  scale = 1.0 / math.sqrt(Dh)
  qf = (q.astype(jnp.float32) * scale).astype(jnp.bfloat16)
  s = jnp.einsum("bhld,bhsd->bhls", qf, k, preferred_element_type=jnp.float32)
  keep = (vq_col[:, None, :, :] > 0.5) & (vk_row[:, None, :, :] > 0.5)
  if causal:
    li = jnp.arange(L)[:, None]
    si = jnp.arange(S)[None, :]
    keep = keep & (li >= si)[None, None]
  s = s + jnp.where(keep, 0.0, NEG_INF)
  p = jax.nn.softmax(s, axis=-1)
  o = jnp.einsum("bhls,bhsd->bhld", p.astype(jnp.bfloat16), v,
                 preferred_element_type=jnp.float32)
  out = jnp.einsum("bhld,hde->ble", o.astype(jnp.bfloat16), w_out,
                   preferred_element_type=jnp.float32)
  return out + residual.astype(jnp.float32)


def make_ops(use_pallas):
  if use_pallas:
    return SimpleNamespace(linear=pallas_linear, attention=pallas_attention,
                           ffn=pallas_ffn)
  return SimpleNamespace(linear=ref_linear, attention=ref_attention,
                         ffn=ref_ffn)


# ------------------------------- model glue -------------------------------

def sinusoidal_pe(max_len, d_model):
  position = jnp.arange(max_len, dtype=jnp.float32)[:, None]
  scale_factor = -math.log(10000.0) / (d_model // 2 - 1)
  div_term = jnp.exp(jnp.arange(d_model // 2, dtype=jnp.float32) * scale_factor)
  pe = jnp.zeros((max_len, d_model), jnp.float32)
  pe = pe.at[:, : d_model // 2].set(jnp.sin(position * div_term))
  pe = pe.at[:, d_model // 2: 2 * (d_model // 2)].set(jnp.cos(position * div_term))
  return pe


def xavier(key, shape):
  fan_in, fan_out = shape
  limit = math.sqrt(6.0 / (fan_in + fan_out))
  return jax.random.uniform(key, shape, jnp.float32, -limit, limit)


def init_params(key, cfg):
  E, H, F = cfg["d_model"], cfg["nhead"], cfg["d_hid"]
  NL, V = cfg["nlayers"], cfg["vocab"]
  Dh = E // H
  keys = iter(jax.random.split(key, 2 + NL * 8))
  emb = jax.random.normal(next(keys), (V, E), jnp.float32)
  params = {
      "embedding": emb,                                   # f32 lookup table
      "embedding_T": emb.T.astype(jnp.bfloat16),          # pre-transposed+cast
      "pos_enc": sinusoidal_pe(cfg["max_len"], E),
      "final_ln_g": jnp.ones((E,), jnp.float32),
      "final_ln_b": jnp.zeros((E,), jnp.float32),
      "layers": [],
  }
  bf = jnp.bfloat16
  for _ in range(NL):
    lp = {
        "in_proj_w": xavier(next(keys), (E, 3 * E)).astype(bf),
        # out-projections pre-reshaped head-major for the fused attention kernel
        "out_proj_w": xavier(next(keys), (E, E)).reshape(H, Dh, E).astype(bf),
        "q_proj_w": xavier(next(keys), (E, E)).astype(bf),
        "kv_proj_w": xavier(next(keys), (E, 2 * E)).astype(bf),
        "out_proj_w_cross": xavier(next(keys), (E, E)).reshape(H, Dh, E).astype(bf),
        "lin1_w": xavier(next(keys), (E, F)).astype(bf),
        "lin1_b": jax.random.normal(next(keys), (F,), jnp.float32) * 1e-6,
        "lin2_w": xavier(next(keys), (F, E)).astype(bf),
        "lin2_b": jnp.zeros((E,), jnp.float32),
        "ln1_g": jnp.ones((E,), jnp.float32), "ln1_b": jnp.zeros((E,), jnp.float32),
        "ln2_g": jnp.ones((E,), jnp.float32), "ln2_b": jnp.zeros((E,), jnp.float32),
        "ln3_g": jnp.ones((E,), jnp.float32), "ln3_b": jnp.zeros((E,), jnp.float32),
    }
    params["layers"].append(lp)
  return params


def decoder_forward(params, tgt_tokens, memory, src_tokens, cfg, ops):
  """decode=False forward of Decoder (pre-LN transformer decoder + tied logits)."""
  E, H, eps = cfg["d_model"], cfg["nhead"], cfg["layer_norm_eps"]
  Dh = E // H
  B, L = tgt_tokens.shape
  S = src_tokens.shape[1]

  tgt_i = tgt_tokens.astype(jnp.int32)
  src_i = src_tokens.astype(jnp.int32)
  # Tiny validity vectors; the additive masks are built inside the kernel.
  tgt_valid = (tgt_i > 0).astype(jnp.float32)
  src_valid = (src_i > 0).astype(jnp.float32)
  tgt_valid_col = tgt_valid.reshape(B, L, 1)
  tgt_valid_row = tgt_valid.reshape(B, 1, L)
  src_valid_row = src_valid.reshape(B, 1, S)

  # shift_right + shared embedding + positional encoding (glue)
  shifted = jnp.pad(tgt_i, ((0, 0), (1, 0)))[:, :-1]
  x = params["embedding"][shifted] + params["pos_enc"][None, :L, :]
  x = x.astype(jnp.float32)
  mem2d = memory.astype(jnp.float32).reshape(B * S, E)

  def split_heads(t, n):
    # t: (B*T, n*E) -> n tensors of shape (B, H, T, Dh) (layout plumbing, XLA)
    T = t.shape[0] // B
    t = t.reshape(B, T, n, H, Dh)
    return [jnp.transpose(t[:, :, i], (0, 2, 1, 3)) for i in range(n)]

  for lp in params["layers"]:
    # --- self-attention block (LN1 fused into QKV proj; out_proj+residual fused) ---
    x2d = x.reshape(B * L, E)
    qkv = ops.linear(x2d, lp["in_proj_w"],
                     ln=(lp["ln1_g"], lp["ln1_b"], eps),
                     out_dtype=jnp.bfloat16)                  # (B*L, 3E)
    q, k, v = split_heads(qkv, 3)
    x = ops.attention(q, k, v, tgt_valid_col, tgt_valid_row,
                      lp["out_proj_w"], x, causal=True)       # (B, L, E) f32

    # --- cross-attention block (LN2 fused into q proj) ---
    x2d = x.reshape(B * L, E)
    q = split_heads(ops.linear(x2d, lp["q_proj_w"],
                               ln=(lp["ln2_g"], lp["ln2_b"], eps),
                               out_dtype=jnp.bfloat16), 1)[0]
    kv = ops.linear(mem2d, lp["kv_proj_w"], out_dtype=jnp.bfloat16)
    k, v = split_heads(kv, 2)
    x = ops.attention(q, k, v, tgt_valid_col, src_valid_row,
                      lp["out_proj_w_cross"], x, causal=False)

    # --- feed-forward block (LN3 + lin1 + relu + lin2 + residual, one kernel) ---
    x = ops.ffn(x.reshape(B * L, E), lp["lin1_w"], lp["lin1_b"],
                lp["lin2_w"], lp["lin2_b"], lp["ln3_g"], lp["ln3_b"],
                eps).reshape(B, L, E)

  # final LN fused into tied-embedding logits: LN(x) @ W_emb.T / sqrt(E)
  logits = ops.linear(x.reshape(B * L, E), params["embedding_T"],
                      ln=(params["final_ln_g"], params["final_ln_b"], eps),
                      scale=1.0 / math.sqrt(E), out_dtype=jnp.float32)
  return logits.reshape(B, L, cfg["vocab"])


# --------------------------------- main ---------------------------------

if __name__ == "__main__":
  cfg = dict(d_model=32, nhead=4, d_hid=64, nlayers=2, vocab=16,
             layer_norm_eps=1e-6, max_len=32)
  key = jax.random.PRNGKey(0)
  kp, kt, ks, km = jax.random.split(key, 4)
  params = init_params(kp, cfg)

  B, L, S = 2, 8, 8
  tgt = jax.random.randint(kt, (B, L), 0, cfg["vocab"])   # token ids (0 = pad)
  src = jax.random.randint(ks, (B, S), 0, cfg["vocab"])
  memory = jax.random.normal(km, (B, S, cfg["d_model"]), jnp.float32)

  pallas_ops = make_ops(use_pallas=True)
  ref_ops = make_ops(use_pallas=False)

  fwd = jax.jit(lambda p, t, m, s: decoder_forward(p, t, m, s, cfg, pallas_ops))
  out = fwd(params, tgt, memory, src)
  jax.block_until_ready(out)

  ref = decoder_forward(params, tgt, memory, src, cfg, ref_ops)
  assert out.shape == (B, L, cfg["vocab"]), out.shape
  max_err = float(jnp.max(jnp.abs(out - ref)))
  assert jnp.allclose(out, ref, atol=2e-2, rtol=2e-2), f"max_err={max_err}"
  print("KERNEL_OK")
</pallas_src>

<mosaic_0001>
module attributes {stable_mosaic.version = 11 : i64} {
  func.func @_linear_kernel(%arg0: i32, %arg1: i32, %arg2: i32, %arg3: memref<16x32xf32, #tpu.memory_space<vmem>>, %arg4: memref<32x96xbf16, #tpu.memory_space<vmem>>, %arg5: memref<1x32xf32, #tpu.memory_space<vmem>>, %arg6: memref<1x32xf32, #tpu.memory_space<vmem>>, %arg7: memref<16x96xbf16, #tpu.memory_space<vmem>>, %arg8: memref<16x32xbf16, #tpu.memory_space<vmem>>) attributes {dimension_semantics = [#tpu.dimension_semantics<parallel>, #tpu.dimension_semantics<arbitrary>, #tpu.dimension_semantics<arbitrary>], iteration_bounds = array<i64: 1, 1, 1>, scalar_prefetch = 0 : i64, scratch_operands = 1 : i64, tpu.core_type = #tpu.core_type<tc>, window_params = [{transform_indices = @transform_0, window_bounds = array<i64: 16, 32>}, {transform_indices = @transform_1, window_bounds = array<i64: 32, 96>}, {transform_indices = @transform_2, window_bounds = array<i64: 1, 32>}, {transform_indices = @transform_3, window_bounds = array<i64: 1, 32>}, {transform_indices = @transform_4, window_bounds = array<i64: 16, 96>}]} {
    %c0_i32 = arith.constant 0 : i32
    %0 = arith.cmpi eq, %arg1, %c0_i32 : i32
    %1 = arith.extui %0 : i1 to i32
    %c0_i32_0 = arith.constant 0 : i32
    %2 = arith.cmpi ne, %1, %c0_i32_0 : i32
    scf.if %2 {
      %c0_6 = arith.constant 0 : index
      %c0_7 = arith.constant 0 : index
      %8 = vector.load %arg3[%c0_6, %c0_7] : memref<16x32xf32, #tpu.memory_space<vmem>>, vector<16x32xf32>
      %cst_8 = arith.constant dense<0.000000e+00> : vector<16xf32>
      %9 = vector.multi_reduction <add>, %8, %cst_8 [1] : vector<16x32xf32> to vector<16xf32>
      %10 = vector.shape_cast %9 : vector<16xf32> to vector<16x1xf32>
      %cst_9 = arith.constant 3.200000e+01 : f32
      %11 = vector.broadcast %cst_9 : f32 to vector<16x1xf32>
      %12 = arith.divf %10, %11 : vector<16x1xf32>
      %13 = vector.broadcast %12 : vector<16x1xf32> to vector<16x32xf32>
      %14 = arith.subf %8, %13 : vector<16x32xf32>
      %15 = arith.mulf %14, %14 : vector<16x32xf32>
      %cst_10 = arith.constant dense<0.000000e+00> : vector<16xf32>
      %16 = vector.multi_reduction <add>, %15, %cst_10 [1] : vector<16x32xf32> to vector<16xf32>
      %17 = vector.shape_cast %16 : vector<16xf32> to vector<16x1xf32>
      %cst_11 = arith.constant 3.200000e+01 : f32
      %18 = vector.broadcast %cst_11 : f32 to vector<16x1xf32>
      %19 = arith.divf %17, %18 : vector<16x1xf32>
      %20 = vector.broadcast %12 : vector<16x1xf32> to vector<16x32xf32>
      %21 = arith.subf %8, %20 : vector<16x32xf32>
      %cst_12 = arith.constant 9.99999997E-7 : f32
      %22 = vector.broadcast %cst_12 : f32 to vector<16x1xf32>
      %23 = arith.addf %19, %22 : vector<16x1xf32>
      %24 = math.rsqrt %23 : vector<16x1xf32>
      %25 = vector.broadcast %24 : vector<16x1xf32> to vector<16x32xf32>
      %26 = arith.mulf %21, %25 : vector<16x32xf32>
      %c0_13 = arith.constant 0 : index
      %c0_14 = arith.constant 0 : index
      %27 = vector.load %arg5[%c0_13, %c0_14] : memref<1x32xf32, #tpu.memory_space<vmem>>, vector<1x32xf32>
      %28 = vector.broadcast %27 : vector<1x32xf32> to vector<16x32xf32>
      %29 = arith.mulf %26, %28 : vector<16x32xf32>
      %c0_15 = arith.constant 0 : index
      %c0_16 = arith.constant 0 : index
      %30 = vector.load %arg6[%c0_15, %c0_16] : memref<1x32xf32, #tpu.memory_space<vmem>>, vector<1x32xf32>
      %31 = vector.broadcast %30 : vector<1x32xf32> to vector<16x32xf32>
      %32 = arith.addf %29, %31 : vector<16x32xf32>
      %33 = arith.truncf %32 : vector<16x32xf32> to vector<16x32xbf16>
      %c0_17 = arith.constant 0 : index
      %c0_18 = arith.constant 0 : index
      %34 = vector.load %arg8[%c0_17, %c0_18] : memref<16x32xbf16, #tpu.memory_space<vmem>>, vector<16x32xbf16>
      tpu.vector_store %arg8[%c0_17, %c0_18], %33 {strides = array<i32>} : memref<16x32xbf16, #tpu.memory_space<vmem>>, vector<16x32xbf16>,
    } else {
    }
    %c0 = arith.constant 0 : index
    %c0_1 = arith.constant 0 : index
    %3 = vector.load %arg8[%c0, %c0_1] : memref<16x32xbf16, #tpu.memory_space<vmem>>, vector<16x32xbf16>
    %c0_2 = arith.constant 0 : index
    %c0_3 = arith.constant 0 : index
    %4 = vector.load %arg4[%c0_2, %c0_3] : memref<32x96xbf16, #tpu.memory_space<vmem>>, vector<32x96xbf16>
    %cst = arith.constant dense<0.000000e+00> : vector<16x96xf32>
    %5 = tpu.matmul %3, %4, %cst {dimension_numbers = #tpu.dot_dimension_numbers<[1], [0], [0], [1], [0, 0, 1, 1], [], []>} : vector<16x32xbf16>, vector<32x96xbf16>, vector<16x96xf32> -> vector<16x96xf32>
    %6 = arith.truncf %5 : vector<16x96xf32> to vector<16x96xbf16>
    %c0_4 = arith.constant 0 : index
    %c0_5 = arith.constant 0 : index
    %7 = vector.load %arg7[%c0_4, %c0_5] : memref<16x96xbf16, #tpu.memory_space<vmem>>, vector<16x96xbf16>
    tpu.vector_store %arg7[%c0_4, %c0_5], %6 {strides = array<i32>} : memref<16x96xbf16, #tpu.memory_space<vmem>>, vector<16x96xbf16>,
    return
  }
  func.func @transform_0(%arg0: i32, %arg1: i32, %arg2: i32) -> (i32, i32) {
    %c0_i32 = arith.constant 0 : i32
    return %arg0, %arg2 : i32, i32
  }
  func.func @transform_1(%arg0: i32, %arg1: i32, %arg2: i32) -> (i32, i32) {
    %c0_i32 = arith.constant 0 : i32
    return %arg2, %arg1 : i32, i32
  }
  func.func @transform_2(%arg0: i32, %arg1: i32, %arg2: i32) -> (i32, i32) {
    %c0_i32 = arith.constant 0 : i32
    %c0_i32_0 = arith.constant 0 : i32
    return %c0_i32, %arg2 : i32, i32
  }
  func.func @transform_3(%arg0: i32, %arg1: i32, %arg2: i32) -> (i32, i32) {
    %c0_i32 = arith.constant 0 : i32
    %c0_i32_0 = arith.constant 0 : i32
    return %c0_i32, %arg2 : i32, i32
  }
  func.func @transform_4(%arg0: i32, %arg1: i32, %arg2: i32) -> (i32, i32) {
    %c0_i32 = arith.constant 0 : i32
    return %arg0, %arg1 : i32, i32
  }
}

module attributes {stable_mosaic.version = 11 : i64} {
  func.func @_linear_kernel(%arg0: i32, %arg1: i32, %arg2: i32, %arg3: memref<16x32xf32, #tpu.memory_space<vmem>>, %arg4: memref<32x32xbf16, #tpu.memory_space<vmem>>, %arg5: memref<1x32xf32, #tpu.memory_space<vmem>>, %arg6: memref<1x32xf32, #tpu.memory_space<vmem>>, %arg7: memref<16x32xbf16, #tpu.memory_space<vmem>>, %arg8: memref<16x32xbf16, #tpu.memory_space<vmem>>) attributes {dimension_semantics = [#tpu.dimension_semantics<parallel>, #tpu.dimension_semantics<arbitrary>, #tpu.dimension_semantics<arbitrary>], iteration_bounds = array<i64: 1, 1, 1>, scalar_prefetch = 0 : i64, scratch_operands = 1 : i64, tpu.core_type = #tpu.core_type<tc>, window_params = [{transform_indices = @transform_0, window_bounds = array<i64: 16, 32>}, {transform_indices = @transform_1, window_bounds = array<i64: 32, 32>}, {transform_indices = @transform_2, window_bounds = array<i64: 1, 32>}, {transform_indices = @transform_3, window_bounds = array<i64: 1, 32>}, {transform_indices = @transform_4, window_bounds = array<i64: 16, 32>}]} {
    %c0_i32 = arith.constant 0 : i32
    %0 = arith.cmpi eq, %arg1, %c0_i32 : i32
    %1 = arith.extui %0 : i1 to i32
    %c0_i32_0 = arith.constant 0 : i32
    %2 = arith.cmpi ne, %1, %c0_i32_0 : i32
    scf.if %2 {
      %c0_6 = arith.constant 0 : index
      %c0_7 = arith.constant 0 : index
      %8 = vector.load %arg3[%c0_6, %c0_7] : memref<16x32xf32, #tpu.memory_space<vmem>>, vector<16x32xf32>
      %cst_8 = arith.constant dense<0.000000e+00> : vector<16xf32>
      %9 = vector.multi_reduction <add>, %8, %cst_8 [1] : vector<16x32xf32> to vector<16xf32>
      %10 = vector.shape_cast %9 : vector<16xf32> to vector<16x1xf32>
      %cst_9 = arith.constant 3.200000e+01 : f32
      %11 = vector.broadcast %cst_9 : f32 to vector<16x1xf32>
      %12 = arith.divf %10, %11 : vector<16x1xf32>
      %13 = vector.broadcast %12 : vector<16x1xf32> to vector<16x32xf32>
      %14 = arith.subf %8, %13 : vector<16x32xf32>
      %15 = arith.mulf %14, %14 : vector<16x32xf32>
      %cst_10 = arith.constant dense<0.000000e+00> : vector<16xf32>
      %16 = vector.multi_reduction <add>, %15, %cst_10 [1] : vector<16x32xf32> to vector<16xf32>
      %17 = vector.shape_cast %16 : vector<16xf32> to vector<16x1xf32>
      %cst_11 = arith.constant 3.200000e+01 : f32
      %18 = vector.broadcast %cst_11 : f32 to vector<16x1xf32>
      %19 = arith.divf %17, %18 : vector<16x1xf32>
      %20 = vector.broadcast %12 : vector<16x1xf32> to vector<16x32xf32>
      %21 = arith.subf %8, %20 : vector<16x32xf32>
      %cst_12 = arith.constant 9.99999997E-7 : f32
      %22 = vector.broadcast %cst_12 : f32 to vector<16x1xf32>
      %23 = arith.addf %19, %22 : vector<16x1xf32>
      %24 = math.rsqrt %23 : vector<16x1xf32>
      %25 = vector.broadcast %24 : vector<16x1xf32> to vector<16x32xf32>
      %26 = arith.mulf %21, %25 : vector<16x32xf32>
      %c0_13 = arith.constant 0 : index
      %c0_14 = arith.constant 0 : index
      %27 = vector.load %arg5[%c0_13, %c0_14] : memref<1x32xf32, #tpu.memory_space<vmem>>, vector<1x32xf32>
      %28 = vector.broadcast %27 : vector<1x32xf32> to vector<16x32xf32>
      %29 = arith.mulf %26, %28 : vector<16x32xf32>
      %c0_15 = arith.constant 0 : index
      %c0_16 = arith.constant 0 : index
      %30 = vector.load %arg6[%c0_15, %c0_16] : memref<1x32xf32, #tpu.memory_space<vmem>>, vector<1x32xf32>
      %31 = vector.broadcast %30 : vector<1x32xf32> to vector<16x32xf32>
      %32 = arith.addf %29, %31 : vector<16x32xf32>
      %33 = arith.truncf %32 : vector<16x32xf32> to vector<16x32xbf16>
      %c0_17 = arith.constant 0 : index
      %c0_18 = arith.constant 0 : index
      %34 = vector.load %arg8[%c0_17, %c0_18] : memref<16x32xbf16, #tpu.memory_space<vmem>>, vector<16x32xbf16>
      tpu.vector_store %arg8[%c0_17, %c0_18], %33 {strides = array<i32>} : memref<16x32xbf16, #tpu.memory_space<vmem>>, vector<16x32xbf16>,
    } else {
    }
    %c0 = arith.constant 0 : index
    %c0_1 = arith.constant 0 : index
    %3 = vector.load %arg8[%c0, %c0_1] : memref<16x32xbf16, #tpu.memory_space<vmem>>, vector<16x32xbf16>
    %c0_2 = arith.constant 0 : index
    %c0_3 = arith.constant 0 : index
    %4 = vector.load %arg4[%c0_2, %c0_3] : memref<32x32xbf16, #tpu.memory_space<vmem>>, vector<32x32xbf16>
    %cst = arith.constant dense<0.000000e+00> : vector<16x32xf32>
    %5 = tpu.matmul %3, %4, %cst {dimension_numbers = #tpu.dot_dimension_numbers<[1], [0], [0], [1], [0, 0, 1, 1], [], []>} : vector<16x32xbf16>, vector<32x32xbf16>, vector<16x32xf32> -> vector<16x32xf32>
    %6 = arith.truncf %5 : vector<16x32xf32> to vector<16x32xbf16>
    %c0_4 = arith.constant 0 : index
    %c0_5 = arith.constant 0 : index
    %7 = vector.load %arg7[%c0_4, %c0_5] : memref<16x32xbf16, #tpu.memory_space<vmem>>, vector<16x32xbf16>
    tpu.vector_store %arg7[%c0_4, %c0_5], %6 {strides = array<i32>} : memref<16x32xbf16, #tpu.memory_space<vmem>>, vector<16x32xbf16>,
    return
  }
  func.func @transform_0(%arg0: i32, %arg1: i32, %arg2: i32) -> (i32, i32) {
    %c0_i32 = arith.constant 0 : i32
    return %arg0, %arg2 : i32, i32
  }
  func.func @transform_1(%arg0: i32, %arg1: i32, %arg2: i32) -> (i32, i32) {
    %c0_i32 = arith.constant 0 : i32
    return %arg2, %arg1 : i32, i32
  }
  func.func @transform_2(%arg0: i32, %arg1: i32, %arg2: i32) -> (i32, i32) {
    %c0_i32 = arith.constant 0 : i32
    %c0_i32_0 = arith.constant 0 : i32
    return %c0_i32, %arg2 : i32, i32
  }
  func.func @transform_3(%arg0: i32, %arg1: i32, %arg2: i32) -> (i32, i32) {
    %c0_i32 = arith.constant 0 : i32
    %c0_i32_0 = arith.constant 0 : i32
    return %c0_i32, %arg2 : i32, i32
  }
  func.func @transform_4(%arg0: i32, %arg1: i32, %arg2: i32) -> (i32, i32) {
    %c0_i32 = arith.constant 0 : i32
    return %arg0, %arg1 : i32, i32
  }
}

module attributes {stable_mosaic.version = 11 : i64} {
  func.func @_attn_kernel(%arg0: i32, %arg1: i32, %arg2: memref<1x1x8x8xbf16, #tpu.memory_space<vmem>>, %arg3: memref<1x1x8x8xbf16, #tpu.memory_space<vmem>>, %arg4: memref<1x1x8x8xbf16, #tpu.memory_space<vmem>>, %arg5: memref<1x8x1xf32, #tpu.memory_space<vmem>>, %arg6: memref<1x1x8xf32, #tpu.memory_space<vmem>>, %arg7: memref<1x8x32xbf16, #tpu.memory_space<vmem>>, %arg8: memref<1x8x32xf32, #tpu.memory_space<vmem>>, %arg9: memref<1x8x32xf32, #tpu.memory_space<vmem>>, %arg10: memref<8x8xf32, #tpu.memory_space<vmem>>, %arg11: memref<8x32xf32, #tpu.memory_space<vmem>>) attributes {dimension_semantics = [#tpu.dimension_semantics<parallel>, #tpu.dimension_semantics<arbitrary>], iteration_bounds = array<i64: 2, 4>, scalar_prefetch = 0 : i64, scratch_operands = 2 : i64, tpu.core_type = #tpu.core_type<tc>, window_params = [{transform_indices = @transform_0, window_bounds = array<i64: 1, 1, 8, 8>}, {transform_indices = @transform_1, window_bounds = array<i64: 1, 1, 8, 8>}, {transform_indices = @transform_2, window_bounds = array<i64: 1, 1, 8, 8>}, {transform_indices = @transform_3, window_bounds = array<i64: 1, 8, 1>}, {transform_indices = @transform_4, window_bounds = array<i64: 1, 1, 8>}, {transform_indices = @transform_5, window_bounds = array<i64: 1, 8, 32>}, {transform_indices = @transform_6, window_bounds = array<i64: 1, 8, 32>}, {transform_indices = @transform_7, window_bounds = array<i64: 1, 8, 32>}]} {
    %c0_i32 = arith.constant 0 : i32
    %0 = arith.cmpi eq, %arg1, %c0_i32 : i32
    %1 = arith.extui %0 : i1 to i32
    %c0_i32_0 = arith.constant 0 : i32
    %2 = arith.cmpi ne, %1, %c0_i32_0 : i32
    scf.if %2 {
      %cst_27 = arith.constant 0.000000e+00 : f32
      %38 = vector.broadcast %cst_27 : f32 to vector<8x32xf32>
      %c0_28 = arith.constant 0 : index
      %c0_29 = arith.constant 0 : index
      %39 = vector.load %arg11[%c0_28, %c0_29] : memref<8x32xf32, #tpu.memory_space<vmem>>, vector<8x32xf32>
      tpu.vector_store %arg11[%c0_28, %c0_29], %38 {strides = array<i32>} : memref<8x32xf32, #tpu.memory_space<vmem>>, vector<8x32xf32>,
      %c0_30 = arith.constant 0 : index
      %c0_31 = arith.constant 0 : index
      %c0_32 = arith.constant 0 : index
      %40 = vector.load %arg5[%c0_30, %c0_31, %c0_32] : memref<1x8x1xf32, #tpu.memory_space<vmem>>, vector<1x8x1xf32>
      %41 = vector.shape_cast %40 : vector<1x8x1xf32> to vector<8x1xf32>
      %c0_33 = arith.constant 0 : index
      %c0_34 = arith.constant 0 : index
      %c0_35 = arith.constant 0 : index
      %42 = vector.load %arg6[%c0_33, %c0_34, %c0_35] : memref<1x1x8xf32, #tpu.memory_space<vmem>>, vector<1x1x8xf32>
      %43 = vector.shape_cast %42 : vector<1x1x8xf32> to vector<1x8xf32>
      %cst_36 = arith.constant 5.000000e-01 : f32
      %44 = vector.broadcast %cst_36 : f32 to vector<8x1xf32>
      %45 = arith.cmpf ogt, %41, %44 : vector<8x1xf32>
      %cst_37 = arith.constant 5.000000e-01 : f32
      %46 = vector.broadcast %cst_37 : f32 to vector<1x8xf32>
      %47 = arith.cmpf ogt, %43, %46 : vector<1x8xf32>
      %48 = vector.broadcast %45 : vector<8x1xi1> to vector<8x8xi1>
      %49 = vector.broadcast %47 : vector<1x8xi1> to vector<8x8xi1>
      %50 = arith.andi %48, %49 : vector<8x8xi1>
      %51 = tpu.iota {dimensions = array<i32: 0>} : vector<8x8xi32>
      %52 = tpu.iota {dimensions = array<i32: 1>} : vector<8x8xi32>
      %53 = arith.cmpi sge, %51, %52 : vector<8x8xi32>
      %54 = arith.andi %50, %53 : vector<8x8xi1>
      %cst_38 = arith.constant 0.000000e+00 : f32
      %cst_39 = arith.constant -1.000000e+10 : f32
      %55 = vector.broadcast %cst_38 : f32 to vector<8x8xf32>
      %56 = vector.broadcast %cst_39 : f32 to vector<8x8xf32>
      %57 = arith.select %54, %55, %56 : vector<8x8xi1>, vector<8x8xf32>
      %c0_40 = arith.constant 0 : index
      %c0_41 = arith.constant 0 : index
      %58 = vector.load %arg10[%c0_40, %c0_41] : memref<8x8xf32, #tpu.memory_space<vmem>>, vector<8x8xf32>
      tpu.vector_store %arg10[%c0_40, %c0_41], %57 {strides = array<i32>} : memref<8x8xf32, #tpu.memory_space<vmem>>, vector<8x8xf32>,
    } else {
    }
    %c0 = arith.constant 0 : index
    %c0_1 = arith.constant 0 : index
    %c0_2 = arith.constant 0 : index
    %c0_3 = arith.constant 0 : index
    %3 = vector.load %arg2[%c0, %c0_1, %c0_2, %c0_3] : memref<1x1x8x8xbf16, #tpu.memory_space<vmem>>, vector<1x1x8x8xbf16>
    %4 = vector.shape_cast %3 : vector<1x1x8x8xbf16> to vector<8x8xbf16>
    %5 = arith.extf %4 : vector<8x8xbf16> to vector<8x8xf32>
    %cst = arith.constant 0.353553385 : f32
    %6 = vector.broadcast %cst : f32 to vector<8x8xf32>
    %7 = arith.mulf %5, %6 : vector<8x8xf32>
    %8 = arith.truncf %7 : vector<8x8xf32> to vector<8x8xbf16>
    %c0_4 = arith.constant 0 : index
    %c0_5 = arith.constant 0 : index
    %c0_6 = arith.constant 0 : index
    %c0_7 = arith.constant 0 : index
    %9 = vector.load %arg3[%c0_4, %c0_5, %c0_6, %c0_7] : memref<1x1x8x8xbf16, #tpu.memory_space<vmem>>, vector<1x1x8x8xbf16>
    %10 = vector.shape_cast %9 : vector<1x1x8x8xbf16> to vector<8x8xbf16>
    %c0_8 = arith.constant 0 : index
    %c0_9 = arith.constant 0 : index
    %c0_10 = arith.constant 0 : index
    %c0_11 = arith.constant 0 : index
    %11 = vector.load %arg4[%c0_8, %c0_9, %c0_10, %c0_11] : memref<1x1x8x8xbf16, #tpu.memory_space<vmem>>, vector<1x1x8x8xbf16>
    %12 = vector.shape_cast %11 : vector<1x1x8x8xbf16> to vector<8x8xbf16>
    %cst_12 = arith.constant dense<0.000000e+00> : vector<8x8xf32>
    %13 = tpu.matmul %8, %10, %cst_12 {dimension_numbers = #tpu.dot_dimension_numbers<[1], [1], [0], [0], [0, 0, 1, 0], [], []>} : vector<8x8xbf16>, vector<8x8xbf16>, vector<8x8xf32> -> vector<8x8xf32>
    %c0_13 = arith.constant 0 : index
    %c0_14 = arith.constant 0 : index
    %14 = vector.load %arg10[%c0_13, %c0_14] : memref<8x8xf32, #tpu.memory_space<vmem>>, vector<8x8xf32>
    %15 = arith.addf %13, %14 : vector<8x8xf32>
    %cst_15 = arith.constant dense<0xFF800000> : vector<8xf32>
    %16 = vector.multi_reduction <maximumf>, %15, %cst_15 [1] : vector<8x8xf32> to vector<8xf32>
    %17 = vector.shape_cast %16 : vector<8xf32> to vector<8x1xf32>
    %18 = vector.broadcast %17 : vector<8x1xf32> to vector<8x8xf32>
    %19 = arith.subf %15, %18 : vector<8x8xf32>
    %20 = math.exp %19 : vector<8x8xf32>
    %cst_16 = arith.constant dense<0.000000e+00> : vector<8xf32>
    %21 = vector.multi_reduction <add>, %20, %cst_16 [1] : vector<8x8xf32> to vector<8xf32>
    %22 = vector.shape_cast %21 : vector<8xf32> to vector<8x1xf32>
    %23 = tpu.reciprocal %22 {approx = true} : vector<8x1xf32> -> vector<8x1xf32>
    %24 = vector.broadcast %23 : vector<8x1xf32> to vector<8x8xf32>
    %25 = arith.mulf %20, %24 : vector<8x8xf32>
    %26 = arith.truncf %25 : vector<8x8xf32> to vector<8x8xbf16>
    %cst_17 = arith.constant dense<0.000000e+00> : vector<8x8xf32>
    %27 = tpu.matmul %26, %12, %cst_17 {dimension_numbers = #tpu.dot_dimension_numbers<[1], [0], [0], [1], [0, 0, 1, 1], [], []>} : vector<8x8xbf16>, vector<8x8xbf16>, vector<8x8xf32> -> vector<8x8xf32>
    %c0_18 = arith.constant 0 : index
    %c0_19 = arith.constant 0 : index
    %28 = vector.load %arg11[%c0_18, %c0_19] : memref<8x32xf32, #tpu.memory_space<vmem>>, vector<8x32xf32>
    %29 = arith.truncf %27 : vector<8x8xf32> to vector<8x8xbf16>
    %c0_20 = arith.constant 0 : index
    %c0_21 = arith.constant 0 : index
    %c0_22 = arith.constant 0 : index
    %30 = vector.load %arg7[%c0_20, %c0_21, %c0_22] : memref<1x8x32xbf16, #tpu.memory_space<vmem>>, vector<1x8x32xbf16>
    %31 = vector.shape_cast %30 : vector<1x8x32xbf16> to vector<8x32xbf16>
    %cst_23 = arith.constant dense<0.000000e+00> : vector<8x32xf32>
    %32 = tpu.matmul %29, %31, %cst_23 {dimension_numbers = #tpu.dot_dimension_numbers<[1], [0], [0], [1], [0, 0, 1, 1], [], []>} : vector<8x8xbf16>, vector<8x32xbf16>, vector<8x32xf32> -> vector<8x32xf32>
    %33 = arith.addf %28, %32 : vector<8x32xf32>
    %c0_24 = arith.constant 0 : index
    %c0_25 = arith.constant 0 : index
    %34 = vector.load %arg11[%c0_24, %c0_25] : memref<8x32xf32, #tpu.memory_space<vmem>>, vector<8x32xf32>
    tpu.vector_store %arg11[%c0_24, %c0_25], %33 {strides = array<i32>} : memref<8x32xf32, #tpu.memory_space<vmem>>, vector<8x32xf32>,
    %c3_i32 = arith.constant 3 : i32
    %35 = arith.cmpi eq, %arg1, %c3_i32 : i32
    %36 = arith.extui %35 : i1 to i32
    %c0_i32_26 = arith.constant 0 : i32
    %37 = arith.cmpi ne, %36, %c0_i32_26 : i32
    scf.if %37 {
      %c0_27 = arith.constant 0 : index
      %c0_28 = arith.constant 0 : index
      %38 = vector.load %arg11[%c0_27, %c0_28] : memref<8x32xf32, #tpu.memory_space<vmem>>, vector<8x32xf32>
      %c0_29 = arith.constant 0 : index
      %c0_30 = arith.constant 0 : index
      %c0_31 = arith.constant 0 : index
      %39 = vector.load %arg8[%c0_29, %c0_30, %c0_31] : memref<1x8x32xf32, #tpu.memory_space<vmem>>, vector<1x8x32xf32>
      %40 = vector.shape_cast %39 : vector<1x8x32xf32> to vector<8x32xf32>
      %41 = arith.addf %38, %40 : vector<8x32xf32>
      %c0_32 = arith.constant 0 : index
      %c0_33 = arith.constant 0 : index
      %c0_34 = arith.constant 0 : index
      %42 = vector.load %arg9[%c0_32, %c0_33, %c0_34] : memref<1x8x32xf32, #tpu.memory_space<vmem>>, vector<1x8x32xf32>
      %43 = vector.shape_cast %42 : vector<1x8x32xf32> to vector<8x32xf32>
      %44 = vector.shape_cast %41 : vector<8x32xf32> to vector<1x8x32xf32>
      tpu.vector_store %arg9[%c0_32, %c0_33, %c0_34], %44 {strides = array<i32>} : memref<1x8x32xf32, #tpu.memory_space<vmem>>, vector<1x8x32xf32>,
    } else {
    }
    return
  }
  func.func @transform_0(%arg0: i32, %arg1: i32) -> (i32, i32, i32, i32) {
    %c0_i32 = arith.constant 0 : i32
    %c0_i32_0 = arith.constant 0 : i32
    %c0_i32_1 = arith.constant 0 : i32
    return %arg0, %arg1, %c0_i32, %c0_i32_0 : i32, i32, i32, i32
  }
  func.func @transform_1(%arg0: i32, %arg1: i32) -> (i32, i32, i32, i32) {
    %c0_i32 = arith.constant 0 : i32
    %c0_i32_0 = arith.constant 0 : i32
    %c0_i32_1 = arith.constant 0 : i32
    return %arg0, %arg1, %c0_i32, %c0_i32_0 : i32, i32, i32, i32
  }
  func.func @transform_2(%arg0: i32, %arg1: i32) -> (i32, i32, i32, i32) {
    %c0_i32 = arith.constant 0 : i32
    %c0_i32_0 = arith.constant 0 : i32
    %c0_i32_1 = arith.constant 0 : i32
    return %arg0, %arg1, %c0_i32, %c0_i32_0 : i32, i32, i32, i32
  }
  func.func @transform_3(%arg0: i32, %arg1: i32) -> (i32, i32, i32) {
    %c0_i32 = arith.constant 0 : i32
    %c0_i32_0 = arith.constant 0 : i32
    %c0_i32_1 = arith.constant 0 : i32
    return %arg0, %c0_i32, %c0_i32_0 : i32, i32, i32
  }
  func.func @transform_4(%arg0: i32, %arg1: i32) -> (i32, i32, i32) {
    %c0_i32 = arith.constant 0 : i32
    %c0_i32_0 = arith.constant 0 : i32
    %c0_i32_1 = arith.constant 0 : i32
    return %arg0, %c0_i32, %c0_i32_0 : i32, i32, i32
  }
  func.func @transform_5(%arg0: i32, %arg1: i32) -> (i32, i32, i32) {
    %c0_i32 = arith.constant 0 : i32
    %c0_i32_0 = arith.constant 0 : i32
    %c0_i32_1 = arith.constant 0 : i32
    return %arg1, %c0_i32, %c0_i32_0 : i32, i32, i32
  }
  func.func @transform_6(%arg0: i32, %arg1: i32) -> (i32, i32, i32) {
    %c0_i32 = arith.constant 0 : i32
    %c0_i32_0 = arith.constant 0 : i32
    %c0_i32_1 = arith.constant 0 : i32
    return %arg0, %c0_i32, %c0_i32_0 : i32, i32, i32
  }
  func.func @transform_7(%arg0: i32, %arg1: i32) -> (i32, i32, i32) {
    %c0_i32 = arith.constant 0 : i32
    %c0_i32_0 = arith.constant 0 : i32
    %c0_i32_1 = arith.constant 0 : i32
    return %arg0, %c0_i32, %c0_i32_0 : i32, i32, i32
  }
}

module attributes {stable_mosaic.version = 11 : i64} {
  func.func @_linear_kernel(%arg0: i32, %arg1: i32, %arg2: i32, %arg3: memref<16x32xf32, #tpu.memory_space<vmem>>, %arg4: memref<32x64xbf16, #tpu.memory_space<vmem>>, %arg5: memref<16x64xbf16, #tpu.memory_space<vmem>>) attributes {dimension_semantics = [#tpu.dimension_semantics<parallel>, #tpu.dimension_semantics<parallel>, #tpu.dimension_semantics<arbitrary>], iteration_bounds = array<i64: 1, 1, 1>, scalar_prefetch = 0 : i64, scratch_operands = 0 : i64, tpu.core_type = #tpu.core_type<tc>, window_params = [{transform_indices = @transform_0, window_bounds = array<i64: 16, 32>}, {transform_indices = @transform_1, window_bounds = array<i64: 32, 64>}, {transform_indices = @transform_2, window_bounds = array<i64: 16, 64>}]} {
    %c0 = arith.constant 0 : index
    %c0_0 = arith.constant 0 : index
    %0 = vector.load %arg3[%c0, %c0_0] : memref<16x32xf32, #tpu.memory_space<vmem>>, vector<16x32xf32>
    %1 = arith.truncf %0 : vector<16x32xf32> to vector<16x32xbf16>
    %c0_1 = arith.constant 0 : index
    %c0_2 = arith.constant 0 : index
    %2 = vector.load %arg4[%c0_1, %c0_2] : memref<32x64xbf16, #tpu.memory_space<vmem>>, vector<32x64xbf16>
    %cst = arith.constant dense<0.000000e+00> : vector<16x64xf32>
    %3 = tpu.matmul %1, %2, %cst {dimension_numbers = #tpu.dot_dimension_numbers<[1], [0], [0], [1], [0, 0, 1, 1], [], []>} : vector<16x32xbf16>, vector<32x64xbf16>, vector<16x64xf32> -> vector<16x64xf32>
    %4 = arith.truncf %3 : vector<16x64xf32> to vector<16x64xbf16>
    %c0_3 = arith.constant 0 : index
    %c0_4 = arith.constant 0 : index
    %5 = vector.load %arg5[%c0_3, %c0_4] : memref<16x64xbf16, #tpu.memory_space<vmem>>, vector<16x64xbf16>
    tpu.vector_store %arg5[%c0_3, %c0_4], %4 {strides = array<i32>} : memref<16x64xbf16, #tpu.memory_space<vmem>>, vector<16x64xbf16>,
    return
  }
  func.func @transform_0(%arg0: i32, %arg1: i32, %arg2: i32) -> (i32, i32) {
    %c0_i32 = arith.constant 0 : i32
    return %arg0, %arg2 : i32, i32
  }
  func.func @transform_1(%arg0: i32, %arg1: i32, %arg2: i32) -> (i32, i32) {
    %c0_i32 = arith.constant 0 : i32
    return %arg2, %arg1 : i32, i32
  }
  func.func @transform_2(%arg0: i32, %arg1: i32, %arg2: i32) -> (i32, i32) {
    %c0_i32 = arith.constant 0 : i32
    return %arg0, %arg1 : i32, i32
  }
}

module attributes {stable_mosaic.version = 11 : i64} {
  func.func @_attn_kernel(%arg0: i32, %arg1: i32, %arg2: memref<1x1x8x8xbf16, #tpu.memory_space<vmem>>, %arg3: memref<1x1x8x8xbf16, #tpu.memory_space<vmem>>, %arg4: memref<1x1x8x8xbf16, #tpu.memory_space<vmem>>, %arg5: memref<1x8x1xf32, #tpu.memory_space<vmem>>, %arg6: memref<1x1x8xf32, #tpu.memory_space<vmem>>, %arg7: memref<1x8x32xbf16, #tpu.memory_space<vmem>>, %arg8: memref<1x8x32xf32, #tpu.memory_space<vmem>>, %arg9: memref<1x8x32xf32, #tpu.memory_space<vmem>>, %arg10: memref<8x8xf32, #tpu.memory_space<vmem>>, %arg11: memref<8x32xf32, #tpu.memory_space<vmem>>) attributes {dimension_semantics = [#tpu.dimension_semantics<parallel>, #tpu.dimension_semantics<arbitrary>], iteration_bounds = array<i64: 2, 4>, scalar_prefetch = 0 : i64, scratch_operands = 2 : i64, tpu.core_type = #tpu.core_type<tc>, window_params = [{transform_indices = @transform_0, window_bounds = array<i64: 1, 1, 8, 8>}, {transform_indices = @transform_1, window_bounds = array<i64: 1, 1, 8, 8>}, {transform_indices = @transform_2, window_bounds = array<i64: 1, 1, 8, 8>}, {transform_indices = @transform_3, window_bounds = array<i64: 1, 8, 1>}, {transform_indices = @transform_4, window_bounds = array<i64: 1, 1, 8>}, {transform_indices = @transform_5, window_bounds = array<i64: 1, 8, 32>}, {transform_indices = @transform_6, window_bounds = array<i64: 1, 8, 32>}, {transform_indices = @transform_7, window_bounds = array<i64: 1, 8, 32>}]} {
    %c0_i32 = arith.constant 0 : i32
    %0 = arith.cmpi eq, %arg1, %c0_i32 : i32
    %1 = arith.extui %0 : i1 to i32
    %c0_i32_0 = arith.constant 0 : i32
    %2 = arith.cmpi ne, %1, %c0_i32_0 : i32
    scf.if %2 {
      %cst_27 = arith.constant 0.000000e+00 : f32
      %38 = vector.broadcast %cst_27 : f32 to vector<8x32xf32>
      %c0_28 = arith.constant 0 : index
      %c0_29 = arith.constant 0 : index
      %39 = vector.load %arg11[%c0_28, %c0_29] : memref<8x32xf32, #tpu.memory_space<vmem>>, vector<8x32xf32>
      tpu.vector_store %arg11[%c0_28, %c0_29], %38 {strides = array<i32>} : memref<8x32xf32, #tpu.memory_space<vmem>>, vector<8x32xf32>,
      %c0_30 = arith.constant 0 : index
      %c0_31 = arith.constant 0 : index
      %c0_32 = arith.constant 0 : index
      %40 = vector.load %arg5[%c0_30, %c0_31, %c0_32] : memref<1x8x1xf32, #tpu.memory_space<vmem>>, vector<1x8x1xf32>
      %41 = vector.shape_cast %40 : vector<1x8x1xf32> to vector<8x1xf32>
      %c0_33 = arith.constant 0 : index
      %c0_34 = arith.constant 0 : index
      %c0_35 = arith.constant 0 : index
      %42 = vector.load %arg6[%c0_33, %c0_34, %c0_35] : memref<1x1x8xf32, #tpu.memory_space<vmem>>, vector<1x1x8xf32>
      %43 = vector.shape_cast %42 : vector<1x1x8xf32> to vector<1x8xf32>
      %cst_36 = arith.constant 5.000000e-01 : f32
      %44 = vector.broadcast %cst_36 : f32 to vector<8x1xf32>
      %45 = arith.cmpf ogt, %41, %44 : vector<8x1xf32>
      %cst_37 = arith.constant 5.000000e-01 : f32
      %46 = vector.broadcast %cst_37 : f32 to vector<1x8xf32>
      %47 = arith.cmpf ogt, %43, %46 : vector<1x8xf32>
      %48 = vector.broadcast %45 : vector<8x1xi1> to vector<8x8xi1>
      %49 = vector.broadcast %47 : vector<1x8xi1> to vector<8x8xi1>
      %50 = arith.andi %48, %49 : vector<8x8xi1>
      %cst_38 = arith.constant 0.000000e+00 : f32
      %cst_39 = arith.constant -1.000000e+10 : f32
      %51 = vector.broadcast %cst_38 : f32 to vector<8x8xf32>
      %52 = vector.broadcast %cst_39 : f32 to vector<8x8xf32>
      %53 = arith.select %50, %51, %52 : vector<8x8xi1>, vector<8x8xf32>
      %c0_40 = arith.constant 0 : index
      %c0_41 = arith.constant 0 : index
      %54 = vector.load %arg10[%c0_40, %c0_41] : memref<8x8xf32, #tpu.memory_space<vmem>>, vector<8x8xf32>
      tpu.vector_store %arg10[%c0_40, %c0_41], %53 {strides = array<i32>} : memref<8x8xf32, #tpu.memory_space<vmem>>, vector<8x8xf32>,
    } else {
    }
    %c0 = arith.constant 0 : index
    %c0_1 = arith.constant 0 : index
    %c0_2 = arith.constant 0 : index
    %c0_3 = arith.constant 0 : index
    %3 = vector.load %arg2[%c0, %c0_1, %c0_2, %c0_3] : memref<1x1x8x8xbf16, #tpu.memory_space<vmem>>, vector<1x1x8x8xbf16>
    %4 = vector.shape_cast %3 : vector<1x1x8x8xbf16> to vector<8x8xbf16>
    %5 = arith.extf %4 : vector<8x8xbf16> to vector<8x8xf32>
    %cst = arith.constant 0.353553385 : f32
    %6 = vector.broadcast %cst : f32 to vector<8x8xf32>
    %7 = arith.mulf %5, %6 : vector<8x8xf32>
    %8 = arith.truncf %7 : vector<8x8xf32> to vector<8x8xbf16>
    %c0_4 = arith.constant 0 : index
    %c0_5 = arith.constant 0 : index
    %c0_6 = arith.constant 0 : index
    %c0_7 = arith.constant 0 : index
    %9 = vector.load %arg3[%c0_4, %c0_5, %c0_6, %c0_7] : memref<1x1x8x8xbf16, #tpu.memory_space<vmem>>, vector<1x1x8x8xbf16>
    %10 = vector.shape_cast %9 : vector<1x1x8x8xbf16> to vector<8x8xbf16>
    %c0_8 = arith.constant 0 : index
    %c0_9 = arith.constant 0 : index
    %c0_10 = arith.constant 0 : index
    %c0_11 = arith.constant 0 : index
    %11 = vector.load %arg4[%c0_8, %c0_9, %c0_10, %c0_11] : memref<1x1x8x8xbf16, #tpu.memory_space<vmem>>, vector<1x1x8x8xbf16>
    %12 = vector.shape_cast %11 : vector<1x1x8x8xbf16> to vector<8x8xbf16>
    %cst_12 = arith.constant dense<0.000000e+00> : vector<8x8xf32>
    %13 = tpu.matmul %8, %10, %cst_12 {dimension_numbers = #tpu.dot_dimension_numbers<[1], [1], [0], [0], [0, 0, 1, 0], [], []>} : vector<8x8xbf16>, vector<8x8xbf16>, vector<8x8xf32> -> vector<8x8xf32>
    %c0_13 = arith.constant 0 : index
    %c0_14 = arith.constant 0 : index
    %14 = vector.load %arg10[%c0_13, %c0_14] : memref<8x8xf32, #tpu.memory_space<vmem>>, vector<8x8xf32>
    %15 = arith.addf %13, %14 : vector<8x8xf32>
    %cst_15 = arith.constant dense<0xFF800000> : vector<8xf32>
    %16 = vector.multi_reduction <maximumf>, %15, %cst_15 [1] : vector<8x8xf32> to vector<8xf32>
    %17 = vector.shape_cast %16 : vector<8xf32> to vector<8x1xf32>
    %18 = vector.broadcast %17 : vector<8x1xf32> to vector<8x8xf32>
    %19 = arith.subf %15, %18 : vector<8x8xf32>
    %20 = math.exp %19 : vector<8x8xf32>
    %cst_16 = arith.constant dense<0.000000e+00> : vector<8xf32>
    %21 = vector.multi_reduction <add>, %20, %cst_16 [1] : vector<8x8xf32> to vector<8xf32>
    %22 = vector.shape_cast %21 : vector<8xf32> to vector<8x1xf32>
    %23 = tpu.reciprocal %22 {approx = true} : vector<8x1xf32> -> vector<8x1xf32>
    %24 = vector.broadcast %23 : vector<8x1xf32> to vector<8x8xf32>
    %25 = arith.mulf %20, %24 : vector<8x8xf32>
    %26 = arith.truncf %25 : vector<8x8xf32> to vector<8x8xbf16>
    %cst_17 = arith.constant dense<0.000000e+00> : vector<8x8xf32>
    %27 = tpu.matmul %26, %12, %cst_17 {dimension_numbers = #tpu.dot_dimension_numbers<[1], [0], [0], [1], [0, 0, 1, 1], [], []>} : vector<8x8xbf16>, vector<8x8xbf16>, vector<8x8xf32> -> vector<8x8xf32>
    %c0_18 = arith.constant 0 : index
    %c0_19 = arith.constant 0 : index
    %28 = vector.load %arg11[%c0_18, %c0_19] : memref<8x32xf32, #tpu.memory_space<vmem>>, vector<8x32xf32>
    %29 = arith.truncf %27 : vector<8x8xf32> to vector<8x8xbf16>
    %c0_20 = arith.constant 0 : index
    %c0_21 = arith.constant 0 : index
    %c0_22 = arith.constant 0 : index
    %30 = vector.load %arg7[%c0_20, %c0_21, %c0_22] : memref<1x8x32xbf16, #tpu.memory_space<vmem>>, vector<1x8x32xbf16>
    %31 = vector.shape_cast %30 : vector<1x8x32xbf16> to vector<8x32xbf16>
    %cst_23 = arith.constant dense<0.000000e+00> : vector<8x32xf32>
    %32 = tpu.matmul %29, %31, %cst_23 {dimension_numbers = #tpu.dot_dimension_numbers<[1], [0], [0], [1], [0, 0, 1, 1], [], []>} : vector<8x8xbf16>, vector<8x32xbf16>, vector<8x32xf32> -> vector<8x32xf32>
    %33 = arith.addf %28, %32 : vector<8x32xf32>
    %c0_24 = arith.constant 0 : index
    %c0_25 = arith.constant 0 : index
    %34 = vector.load %arg11[%c0_24, %c0_25] : memref<8x32xf32, #tpu.memory_space<vmem>>, vector<8x32xf32>
    tpu.vector_store %arg11[%c0_24, %c0_25], %33 {strides = array<i32>} : memref<8x32xf32, #tpu.memory_space<vmem>>, vector<8x32xf32>,
    %c3_i32 = arith.constant 3 : i32
    %35 = arith.cmpi eq, %arg1, %c3_i32 : i32
    %36 = arith.extui %35 : i1 to i32
    %c0_i32_26 = arith.constant 0 : i32
    %37 = arith.cmpi ne, %36, %c0_i32_26 : i32
    scf.if %37 {
      %c0_27 = arith.constant 0 : index
      %c0_28 = arith.constant 0 : index
      %38 = vector.load %arg11[%c0_27, %c0_28] : memref<8x32xf32, #tpu.memory_space<vmem>>, vector<8x32xf32>
      %c0_29 = arith.constant 0 : index
      %c0_30 = arith.constant 0 : index
      %c0_31 = arith.constant 0 : index
      %39 = vector.load %arg8[%c0_29, %c0_30, %c0_31] : memref<1x8x32xf32, #tpu.memory_space<vmem>>, vector<1x8x32xf32>
      %40 = vector.shape_cast %39 : vector<1x8x32xf32> to vector<8x32xf32>
      %41 = arith.addf %38, %40 : vector<8x32xf32>
      %c0_32 = arith.constant 0 : index
      %c0_33 = arith.constant 0 : index
      %c0_34 = arith.constant 0 : index
      %42 = vector.load %arg9[%c0_32, %c0_33, %c0_34] : memref<1x8x32xf32, #tpu.memory_space<vmem>>, vector<1x8x32xf32>
      %43 = vector.shape_cast %42 : vector<1x8x32xf32> to vector<8x32xf32>
      %44 = vector.shape_cast %41 : vector<8x32xf32> to vector<1x8x32xf32>
      tpu.vector_store %arg9[%c0_32, %c0_33, %c0_34], %44 {strides = array<i32>} : memref<1x8x32xf32, #tpu.memory_space<vmem>>, vector<1x8x32xf32>,
    } else {
    }
    return
  }
  func.func @transform_0(%arg0: i32, %arg1: i32) -> (i32, i32, i32, i32) {
    %c0_i32 = arith.constant 0 : i32
    %c0_i32_0 = arith.constant 0 : i32
    %c0_i32_1 = arith.constant 0 : i32
    return %arg0, %arg1, %c0_i32, %c0_i32_0 : i32, i32, i32, i32
  }
  func.func @transform_1(%arg0: i32, %arg1: i32) -> (i32, i32, i32, i32) {
    %c0_i32 = arith.constant 0 : i32
    %c0_i32_0 = arith.constant 0 : i32
    %c0_i32_1 = arith.constant 0 : i32
    return %arg0, %arg1, %c0_i32, %c0_i32_0 : i32, i32, i32, i32
  }
  func.func @transform_2(%arg0: i32, %arg1: i32) -> (i32, i32, i32, i32) {
    %c0_i32 = arith.constant 0 : i32
    %c0_i32_0 = arith.constant 0 : i32
    %c0_i32_1 = arith.constant 0 : i32
    return %arg0, %arg1, %c0_i32, %c0_i32_0 : i32, i32, i32, i32
  }
  func.func @transform_3(%arg0: i32, %arg1: i32) -> (i32, i32, i32) {
    %c0_i32 = arith.constant 0 : i32
    %c0_i32_0 = arith.constant 0 : i32
    %c0_i32_1 = arith.constant 0 : i32
    return %arg0, %c0_i32, %c0_i32_0 : i32, i32, i32
  }
  func.func @transform_4(%arg0: i32, %arg1: i32) -> (i32, i32, i32) {
    %c0_i32 = arith.constant 0 : i32
    %c0_i32_0 = arith.constant 0 : i32
    %c0_i32_1 = arith.constant 0 : i32
    return %arg0, %c0_i32, %c0_i32_0 : i32, i32, i32
  }
  func.func @transform_5(%arg0: i32, %arg1: i32) -> (i32, i32, i32) {
    %c0_i32 = arith.constant 0 : i32
    %c0_i32_0 = arith.constant 0 : i32
    %c0_i32_1 = arith.constant 0 : i32
    return %arg1, %c0_i32, %c0_i32_0 : i32, i32, i32
  }
  func.func @transform_6(%arg0: i32, %arg1: i32) -> (i32, i32, i32) {
    %c0_i32 = arith.constant 0 : i32
    %c0_i32_0 = arith.constant 0 : i32
    %c0_i32_1 = arith.constant 0 : i32
    return %arg0, %c0_i32, %c0_i32_0 : i32, i32, i32
  }
  func.func @transform_7(%arg0: i32, %arg1: i32) -> (i32, i32, i32) {
    %c0_i32 = arith.constant 0 : i32
    %c0_i32_0 = arith.constant 0 : i32
    %c0_i32_1 = arith.constant 0 : i32
    return %arg0, %c0_i32, %c0_i32_0 : i32, i32, i32
  }
}

module attributes {stable_mosaic.version = 11 : i64} {
  func.func @_ffn_kernel(%arg0: i32, %arg1: i32, %arg2: memref<16x32xf32, #tpu.memory_space<vmem>>, %arg3: memref<32x64xbf16, #tpu.memory_space<vmem>>, %arg4: memref<1x64xf32, #tpu.memory_space<vmem>>, %arg5: memref<64x32xbf16, #tpu.memory_space<vmem>>, %arg6: memref<1x32xf32, #tpu.memory_space<vmem>>, %arg7: memref<1x32xf32, #tpu.memory_space<vmem>>, %arg8: memref<1x32xf32, #tpu.memory_space<vmem>>, %arg9: memref<16x32xf32, #tpu.memory_space<vmem>>, %arg10: memref<16x32xf32, #tpu.memory_space<vmem>>, %arg11: memref<16x32xbf16, #tpu.memory_space<vmem>>) attributes {dimension_semantics = [#tpu.dimension_semantics<parallel>, #tpu.dimension_semantics<arbitrary>], iteration_bounds = array<i64: 1, 1>, scalar_prefetch = 0 : i64, scratch_operands = 2 : i64, tpu.core_type = #tpu.core_type<tc>, window_params = [{transform_indices = @transform_0, window_bounds = array<i64: 16, 32>}, {transform_indices = @transform_1, window_bounds = array<i64: 32, 64>}, {transform_indices = @transform_2, window_bounds = array<i64: 1, 64>}, {transform_indices = @transform_3, window_bounds = array<i64: 64, 32>}, {pipeline_mode = #tpu.pipeline_mode<synchronous>, transform_indices = @transform_4, window_bounds = array<i64: 1, 32>}, {pipeline_mode = #tpu.pipeline_mode<synchronous>, transform_indices = @transform_5, window_bounds = array<i64: 1, 32>}, {pipeline_mode = #tpu.pipeline_mode<synchronous>, transform_indices = @transform_6, window_bounds = array<i64: 1, 32>}, {transform_indices = @transform_7, window_bounds = array<i64: 16, 32>}]} {
    %c0_i32 = arith.constant 0 : i32
    %0 = arith.cmpi eq, %arg1, %c0_i32 : i32
    %1 = arith.extui %0 : i1 to i32
    %c0_i32_0 = arith.constant 0 : i32
    %2 = arith.cmpi ne, %1, %c0_i32_0 : i32
    scf.if %2 {
      %cst_16 = arith.constant 0.000000e+00 : f32
      %20 = vector.broadcast %cst_16 : f32 to vector<16x32xf32>
      %c0_17 = arith.constant 0 : index
      %c0_18 = arith.constant 0 : index
      %21 = vector.load %arg10[%c0_17, %c0_18] : memref<16x32xf32, #tpu.memory_space<vmem>>, vector<16x32xf32>
      tpu.vector_store %arg10[%c0_17, %c0_18], %20 {strides = array<i32>} : memref<16x32xf32, #tpu.memory_space<vmem>>, vector<16x32xf32>,
      %c0_19 = arith.constant 0 : index
      %c0_20 = arith.constant 0 : index
      %22 = vector.load %arg2[%c0_19, %c0_20] : memref<16x32xf32, #tpu.memory_space<vmem>>, vector<16x32xf32>
      %cst_21 = arith.constant dense<0.000000e+00> : vector<16xf32>
      %23 = vector.multi_reduction <add>, %22, %cst_21 [1] : vector<16x32xf32> to vector<16xf32>
      %24 = vector.shape_cast %23 : vector<16xf32> to vector<16x1xf32>
      %cst_22 = arith.constant 3.200000e+01 : f32
      %25 = vector.broadcast %cst_22 : f32 to vector<16x1xf32>
      %26 = arith.divf %24, %25 : vector<16x1xf32>
      %27 = vector.broadcast %26 : vector<16x1xf32> to vector<16x32xf32>
      %28 = arith.subf %22, %27 : vector<16x32xf32>
      %29 = arith.mulf %28, %28 : vector<16x32xf32>
      %cst_23 = arith.constant dense<0.000000e+00> : vector<16xf32>
      %30 = vector.multi_reduction <add>, %29, %cst_23 [1] : vector<16x32xf32> to vector<16xf32>
      %31 = vector.shape_cast %30 : vector<16xf32> to vector<16x1xf32>
      %cst_24 = arith.constant 3.200000e+01 : f32
      %32 = vector.broadcast %cst_24 : f32 to vector<16x1xf32>
      %33 = arith.divf %31, %32 : vector<16x1xf32>
      %34 = vector.broadcast %26 : vector<16x1xf32> to vector<16x32xf32>
      %35 = arith.subf %22, %34 : vector<16x32xf32>
      %cst_25 = arith.constant 9.99999997E-7 : f32
      %36 = vector.broadcast %cst_25 : f32 to vector<16x1xf32>
      %37 = arith.addf %33, %36 : vector<16x1xf32>
      %38 = math.rsqrt %37 : vector<16x1xf32>
      %39 = vector.broadcast %38 : vector<16x1xf32> to vector<16x32xf32>
      %40 = arith.mulf %35, %39 : vector<16x32xf32>
      %c0_26 = arith.constant 0 : index
      %c0_27 = arith.constant 0 : index
      %41 = vector.load %arg7[%c0_26, %c0_27] : memref<1x32xf32, #tpu.memory_space<vmem>>, vector<1x32xf32>
      %42 = vector.broadcast %41 : vector<1x32xf32> to vector<16x32xf32>
      %43 = arith.mulf %40, %42 : vector<16x32xf32>
      %c0_28 = arith.constant 0 : index
      %c0_29 = arith.constant 0 : index
      %44 = vector.load %arg8[%c0_28, %c0_29] : memref<1x32xf32, #tpu.memory_space<vmem>>, vector<1x32xf32>
      %45 = vector.broadcast %44 : vector<1x32xf32> to vector<16x32xf32>
      %46 = arith.addf %43, %45 : vector<16x32xf32>
      %47 = arith.truncf %46 : vector<16x32xf32> to vector<16x32xbf16>
      %c0_30 = arith.constant 0 : index
      %c0_31 = arith.constant 0 : index
      %48 = vector.load %arg11[%c0_30, %c0_31] : memref<16x32xbf16, #tpu.memory_space<vmem>>, vector<16x32xbf16>
      tpu.vector_store %arg11[%c0_30, %c0_31], %47 {strides = array<i32>} : memref<16x32xbf16, #tpu.memory_space<vmem>>, vector<16x32xbf16>,
    } else {
    }
    %c0 = arith.constant 0 : index
    %c0_1 = arith.constant 0 : index
    %3 = vector.load %arg11[%c0, %c0_1] : memref<16x32xbf16, #tpu.memory_space<vmem>>, vector<16x32xbf16>
    %c0_2 = arith.constant 0 : index
    %c0_3 = arith.constant 0 : index
    %4 = vector.load %arg3[%c0_2, %c0_3] : memref<32x64xbf16, #tpu.memory_space<vmem>>, vector<32x64xbf16>
    %cst = arith.constant dense<0.000000e+00> : vector<16x64xf32>
    %5 = tpu.matmul %3, %4, %cst {dimension_numbers = #tpu.dot_dimension_numbers<[1], [0], [0], [1], [0, 0, 1, 1], [], []>} : vector<16x32xbf16>, vector<32x64xbf16>, vector<16x64xf32> -> vector<16x64xf32>
    %c0_4 = arith.constant 0 : index
    %c0_5 = arith.constant 0 : index
    %6 = vector.load %arg4[%c0_4, %c0_5] : memref<1x64xf32, #tpu.memory_space<vmem>>, vector<1x64xf32>
    %7 = vector.broadcast %6 : vector<1x64xf32> to vector<16x64xf32>
    %8 = arith.addf %5, %7 : vector<16x64xf32>
    %cst_6 = arith.constant 0.000000e+00 : f32
    %9 = vector.broadcast %cst_6 : f32 to vector<16x64xf32>
    %10 = arith.maximumf %8, %9 : vector<16x64xf32>
    %c0_7 = arith.constant 0 : index
    %c0_8 = arith.constant 0 : index
    %11 = vector.load %arg10[%c0_7, %c0_8] : memref<16x32xf32, #tpu.memory_space<vmem>>, vector<16x32xf32>
    %12 = arith.truncf %10 : vector<16x64xf32> to vector<16x64xbf16>
    %c0_9 = arith.constant 0 : index
    %c0_10 = arith.constant 0 : index
    %13 = vector.load %arg5[%c0_9, %c0_10] : memref<64x32xbf16, #tpu.memory_space<vmem>>, vector<64x32xbf16>
    %cst_11 = arith.constant dense<0.000000e+00> : vector<16x32xf32>
    %14 = tpu.matmul %12, %13, %cst_11 {dimension_numbers = #tpu.dot_dimension_numbers<[1], [0], [0], [1], [0, 0, 1, 1], [], []>} : vector<16x64xbf16>, vector<64x32xbf16>, vector<16x32xf32> -> vector<16x32xf32>
    %15 = arith.addf %11, %14 : vector<16x32xf32>
    %c0_12 = arith.constant 0 : index
    %c0_13 = arith.constant 0 : index
    %16 = vector.load %arg10[%c0_12, %c0_13] : memref<16x32xf32, #tpu.memory_space<vmem>>, vector<16x32xf32>
    tpu.vector_store %arg10[%c0_12, %c0_13], %15 {strides = array<i32>} : memref<16x32xf32, #tpu.memory_space<vmem>>, vector<16x32xf32>,
    %c0_i32_14 = arith.constant 0 : i32
    %17 = arith.cmpi eq, %arg1, %c0_i32_14 : i32
    %18 = arith.extui %17 : i1 to i32
    %c0_i32_15 = arith.constant 0 : i32
    %19 = arith.cmpi ne, %18, %c0_i32_15 : i32
    scf.if %19 {
      %c0_16 = arith.constant 0 : index
      %c0_17 = arith.constant 0 : index
      %20 = vector.load %arg10[%c0_16, %c0_17] : memref<16x32xf32, #tpu.memory_space<vmem>>, vector<16x32xf32>
      %c0_18 = arith.constant 0 : index
      %c0_19 = arith.constant 0 : index
      %21 = vector.load %arg6[%c0_18, %c0_19] : memref<1x32xf32, #tpu.memory_space<vmem>>, vector<1x32xf32>
      %22 = vector.broadcast %21 : vector<1x32xf32> to vector<16x32xf32>
      %23 = arith.addf %20, %22 : vector<16x32xf32>
      %c0_20 = arith.constant 0 : index
      %c0_21 = arith.constant 0 : index
      %24 = vector.load %arg2[%c0_20, %c0_21] : memref<16x32xf32, #tpu.memory_space<vmem>>, vector<16x32xf32>
      %25 = arith.addf %23, %24 : vector<16x32xf32>
      %c0_22 = arith.constant 0 : index
      %c0_23 = arith.constant 0 : index
      %26 = vector.load %arg9[%c0_22, %c0_23] : memref<16x32xf32, #tpu.memory_space<vmem>>, vector<16x32xf32>
      tpu.vector_store %arg9[%c0_22, %c0_23], %25 {strides = array<i32>} : memref<16x32xf32, #tpu.memory_space<vmem>>, vector<16x32xf32>,
    } else {
    }
    return
  }
  func.func @transform_0(%arg0: i32, %arg1: i32) -> (i32, i32) {
    %c0_i32 = arith.constant 0 : i32
    %c0_i32_0 = arith.constant 0 : i32
    return %arg0, %c0_i32 : i32, i32
  }
  func.func @transform_1(%arg0: i32, %arg1: i32) -> (i32, i32) {
    %c0_i32 = arith.constant 0 : i32
    %c0_i32_0 = arith.constant 0 : i32
    return %c0_i32, %arg1 : i32, i32
  }
  func.func @transform_2(%arg0: i32, %arg1: i32) -> (i32, i32) {
    %c0_i32 = arith.constant 0 : i32
    %c0_i32_0 = arith.constant 0 : i32
    return %c0_i32, %arg1 : i32, i32
  }
  func.func @transform_3(%arg0: i32, %arg1: i32) -> (i32, i32) {
    %c0_i32 = arith.constant 0 : i32
    %c0_i32_0 = arith.constant 0 : i32
    return %arg1, %c0_i32 : i32, i32
  }
  func.func @transform_4(%arg0: i32, %arg1: i32) -> (i32, i32) {
    %c0_i32 = arith.constant 0 : i32
    %c0_i32_0 = arith.constant 0 : i32
    %c0_i32_1 = arith.constant 0 : i32
    return %c0_i32, %c0_i32_0 : i32, i32
  }
  func.func @transform_5(%arg0: i32, %arg1: i32) -> (i32, i32) {
    %c0_i32 = arith.constant 0 : i32
    %c0_i32_0 = arith.constant 0 : i32
    %c0_i32_1 = arith.constant 0 : i32
    return %c0_i32, %c0_i32_0 : i32, i32
  }
  func.func @transform_6(%arg0: i32, %arg1: i32) -> (i32, i32) {
    %c0_i32 = arith.constant 0 : i32
    %c0_i32_0 = arith.constant 0 : i32
    %c0_i32_1 = arith.constant 0 : i32
    return %c0_i32, %c0_i32_0 : i32, i32
  }
  func.func @transform_7(%arg0: i32, %arg1: i32) -> (i32, i32) {
    %c0_i32 = arith.constant 0 : i32
    %c0_i32_0 = arith.constant 0 : i32
    return %arg0, %c0_i32 : i32, i32
  }
}

module attributes {stable_mosaic.version = 11 : i64} {
  func.func @_linear_kernel(%arg0: i32, %arg1: i32, %arg2: i32, %arg3: memref<16x32xf32, #tpu.memory_space<vmem>>, %arg4: memref<32x16xbf16, #tpu.memory_space<vmem>>, %arg5: memref<1x32xf32, #tpu.memory_space<vmem>>, %arg6: memref<1x32xf32, #tpu.memory_space<vmem>>, %arg7: memref<16x16xf32, #tpu.memory_space<vmem>>, %arg8: memref<16x32xbf16, #tpu.memory_space<vmem>>) attributes {dimension_semantics = [#tpu.dimension_semantics<parallel>, #tpu.dimension_semantics<arbitrary>, #tpu.dimension_semantics<arbitrary>], iteration_bounds = array<i64: 1, 1, 1>, scalar_prefetch = 0 : i64, scratch_operands = 1 : i64, tpu.core_type = #tpu.core_type<tc>, window_params = [{transform_indices = @transform_0, window_bounds = array<i64: 16, 32>}, {transform_indices = @transform_1, window_bounds = array<i64: 32, 16>}, {transform_indices = @transform_2, window_bounds = array<i64: 1, 32>}, {transform_indices = @transform_3, window_bounds = array<i64: 1, 32>}, {transform_indices = @transform_4, window_bounds = array<i64: 16, 16>}]} {
    %c0_i32 = arith.constant 0 : i32
    %0 = arith.cmpi eq, %arg1, %c0_i32 : i32
    %1 = arith.extui %0 : i1 to i32
    %c0_i32_0 = arith.constant 0 : i32
    %2 = arith.cmpi ne, %1, %c0_i32_0 : i32
    scf.if %2 {
      %c0_7 = arith.constant 0 : index
      %c0_8 = arith.constant 0 : index
      %9 = vector.load %arg3[%c0_7, %c0_8] : memref<16x32xf32, #tpu.memory_space<vmem>>, vector<16x32xf32>
      %cst_9 = arith.constant dense<0.000000e+00> : vector<16xf32>
      %10 = vector.multi_reduction <add>, %9, %cst_9 [1] : vector<16x32xf32> to vector<16xf32>
      %11 = vector.shape_cast %10 : vector<16xf32> to vector<16x1xf32>
      %cst_10 = arith.constant 3.200000e+01 : f32
      %12 = vector.broadcast %cst_10 : f32 to vector<16x1xf32>
      %13 = arith.divf %11, %12 : vector<16x1xf32>
      %14 = vector.broadcast %13 : vector<16x1xf32> to vector<16x32xf32>
      %15 = arith.subf %9, %14 : vector<16x32xf32>
      %16 = arith.mulf %15, %15 : vector<16x32xf32>
      %cst_11 = arith.constant dense<0.000000e+00> : vector<16xf32>
      %17 = vector.multi_reduction <add>, %16, %cst_11 [1] : vector<16x32xf32> to vector<16xf32>
      %18 = vector.shape_cast %17 : vector<16xf32> to vector<16x1xf32>
      %cst_12 = arith.constant 3.200000e+01 : f32
      %19 = vector.broadcast %cst_12 : f32 to vector<16x1xf32>
      %20 = arith.divf %18, %19 : vector<16x1xf32>
      %21 = vector.broadcast %13 : vector<16x1xf32> to vector<16x32xf32>
      %22 = arith.subf %9, %21 : vector<16x32xf32>
      %cst_13 = arith.constant 9.99999997E-7 : f32
      %23 = vector.broadcast %cst_13 : f32 to vector<16x1xf32>
      %24 = arith.addf %20, %23 : vector<16x1xf32>
      %25 = math.rsqrt %24 : vector<16x1xf32>
      %26 = vector.broadcast %25 : vector<16x1xf32> to vector<16x32xf32>
      %27 = arith.mulf %22, %26 : vector<16x32xf32>
      %c0_14 = arith.constant 0 : index
      %c0_15 = arith.constant 0 : index
      %28 = vector.load %arg5[%c0_14, %c0_15] : memref<1x32xf32, #tpu.memory_space<vmem>>, vector<1x32xf32>
      %29 = vector.broadcast %28 : vector<1x32xf32> to vector<16x32xf32>
      %30 = arith.mulf %27, %29 : vector<16x32xf32>
      %c0_16 = arith.constant 0 : index
      %c0_17 = arith.constant 0 : index
      %31 = vector.load %arg6[%c0_16, %c0_17] : memref<1x32xf32, #tpu.memory_space<vmem>>, vector<1x32xf32>
      %32 = vector.broadcast %31 : vector<1x32xf32> to vector<16x32xf32>
      %33 = arith.addf %30, %32 : vector<16x32xf32>
      %34 = arith.truncf %33 : vector<16x32xf32> to vector<16x32xbf16>
      %c0_18 = arith.constant 0 : index
      %c0_19 = arith.constant 0 : index
      %35 = vector.load %arg8[%c0_18, %c0_19] : memref<16x32xbf16, #tpu.memory_space<vmem>>, vector<16x32xbf16>
      tpu.vector_store %arg8[%c0_18, %c0_19], %34 {strides = array<i32>} : memref<16x32xbf16, #tpu.memory_space<vmem>>, vector<16x32xbf16>,
    } else {
    }
    %c0 = arith.constant 0 : index
    %c0_1 = arith.constant 0 : index
    %3 = vector.load %arg8[%c0, %c0_1] : memref<16x32xbf16, #tpu.memory_space<vmem>>, vector<16x32xbf16>
    %c0_2 = arith.constant 0 : index
    %c0_3 = arith.constant 0 : index
    %4 = vector.load %arg4[%c0_2, %c0_3] : memref<32x16xbf16, #tpu.memory_space<vmem>>, vector<32x16xbf16>
    %cst = arith.constant dense<0.000000e+00> : vector<16x16xf32>
    %5 = tpu.matmul %3, %4, %cst {dimension_numbers = #tpu.dot_dimension_numbers<[1], [0], [0], [1], [0, 0, 1, 1], [], []>} : vector<16x32xbf16>, vector<32x16xbf16>, vector<16x16xf32> -> vector<16x16xf32>
    %cst_4 = arith.constant 0.176776692 : f32
    %6 = vector.broadcast %cst_4 : f32 to vector<16x16xf32>
    %7 = arith.mulf %5, %6 : vector<16x16xf32>
    %c0_5 = arith.constant 0 : index
    %c0_6 = arith.constant 0 : index
    %8 = vector.load %arg7[%c0_5, %c0_6] : memref<16x16xf32, #tpu.memory_space<vmem>>, vector<16x16xf32>
    tpu.vector_store %arg7[%c0_5, %c0_6], %7 {strides = array<i32>} : memref<16x16xf32, #tpu.memory_space<vmem>>, vector<16x16xf32>,
    return
  }
  func.func @transform_0(%arg0: i32, %arg1: i32, %arg2: i32) -> (i32, i32) {
    %c0_i32 = arith.constant 0 : i32
    return %arg0, %arg2 : i32, i32
  }
  func.func @transform_1(%arg0: i32, %arg1: i32, %arg2: i32) -> (i32, i32) {
    %c0_i32 = arith.constant 0 : i32
    return %arg2, %arg1 : i32, i32
  }
  func.func @transform_2(%arg0: i32, %arg1: i32, %arg2: i32) -> (i32, i32) {
    %c0_i32 = arith.constant 0 : i32
    %c0_i32_0 = arith.constant 0 : i32
    return %c0_i32, %arg2 : i32, i32
  }
  func.func @transform_3(%arg0: i32, %arg1: i32, %arg2: i32) -> (i32, i32) {
    %c0_i32 = arith.constant 0 : i32
    %c0_i32_0 = arith.constant 0 : i32
    return %c0_i32, %arg2 : i32, i32
  }
  func.func @transform_4(%arg0: i32, %arg1: i32, %arg2: i32) -> (i32, i32) {
    %c0_i32 = arith.constant 0 : i32
    return %arg0, %arg1 : i32, i32
  }
}

</mosaic_0001>

<llo_original>
// kernel: _lambda_.13
$region0: #{_lambda_.13}
  #allocation0 [shape = 'u32[]', space=smem, size = 0x4, offset = 0x4, fixed_abs, tag = 'smem constant byte address 0x4 - core index']
  #allocation1 [shape = 'u32[144,128]{1,0:T(1,128)}', space=vmem, size = 0x12000, scoped, tag = 'internal scratch']
  #allocation2 [shape = 'bf16[16,32]{1,0:T(16,128)(2,1)}', space=vmem, size = 0x1000, scoped, tag = 'scratch operand']
  %s0 = inlined_call_operand.vmem [shape: f32[16,32], index: 0, kind: input, shape index: {}]
  %s1 = inlined_call_operand.vmem [shape: bf16[32,96], index: 1, kind: input, shape index: {}]
  %s2 = inlined_call_operand.vmem [shape: f32[1,32], index: 2, kind: input, shape index: {}]
  %s3 = inlined_call_operand.vmem [shape: f32[1,32], index: 3, kind: input, shape index: {}]
  %s4 = inlined_call_operand.vmem [shape: bf16[16,96], index: 4, kind: output, shape index: {}]
  %s5 = sld [smem:[#allocation0]]
  $region30: #{_lambda_.13} parent=0
    _
  %s7 = ssub.s32 1, %s5
  %s8 = scalar_select 0, %s7, %s5
  // Predicated region
  $region2: #{_lambda_.13} parent=0 // pred_check
    _
  $region3: #{_lambda_.13} parent=0 // pred_check_branch
    %10 = sbr.rel (0) target = $region5
  $region4: #{_lambda_.13} parent=0 // pred_region
    _
  $region5: #{_lambda_.13} parent=0 // pred_fallthru
    _
  // Predicated region
  $region6: #{_lambda_.13} parent=0 // pred_check
    _
  $region7: #{_lambda_.13} parent=0 // pred_check_branch
    %12 = sbr.rel (0) target = $region9
  $region8: #{_lambda_.13} parent=0 // pred_region
    _
  $region9: #{_lambda_.13} parent=0 // pred_fallthru
    _
  // Predicated region
  $region10: #{_lambda_.13} parent=0 // pred_check
    _
  $region11: #{_lambda_.13} parent=0 // pred_check_branch
    %14 = sbr.rel (0) target = $region13
  $region12: #{_lambda_.13} parent=0 // pred_region
    _
  $region13: #{_lambda_.13} parent=0 // pred_fallthru
    _
  // Predicated region
  $region14: #{_lambda_.13} parent=0 // pred_check
    _
  $region15: #{_lambda_.13} parent=0 // pred_check_branch
    %16 = sbr.rel (0) target = $region17
  $region16: #{_lambda_.13} parent=0 // pred_region
    _
  $region17: #{_lambda_.13} parent=0 // pred_fallthru
    _
  %p18 = scmp.eq.s32.totalorder 0, 0
  // Predicated region
  $region18: #{_lambda_.13} parent=0 // pred_check
    %p19 = pneg %p18
  $region19: #{_lambda_.13} parent=0 // pred_check_branch
    %21 = sbr.rel (%p19) target = $region21
  $region20: #{_lambda_.13} parent=0 // pred_region
    %v22 = vld [vmem:[%s0] sm:$0xff]
    %v23 = vld [vmem:[%s0 + $0x8] sm:$0xff]
    %vm24 = vcmask 261120
    %v25 = vsel %vm24, %v22, 0.0
    %26 = vadd.xlane.f32.xlu0 %v25
    %v27 = vpop.xlane.xlu0 %26
    %v28 = vsel %vm24, %v23, 0.0
    %29 = vadd.xlane.f32.xlu0 %v28
    %v30 = vpop.xlane.xlu0 %29
    %v31 = vrcp.pop 32.0
    %v32 = vmul.f32 %v27, %v31
    %v33 = vmul.f32 %v30, %v31
    %v34 = vsub.f32 %v22, %v32
    %v35 = vsub.f32 %v23, %v33
    %v36 = vmul.f32 %v34, %v34
    %v37 = vmul.f32 %v35, %v35
    %v38 = vsel %vm24, %v36, 0.0
    %39 = vadd.xlane.f32.xlu0 %v38
    %v40 = vpop.xlane.xlu0 %39
    %v41 = vsel %vm24, %v37, 0.0
    %42 = vadd.xlane.f32.xlu0 %v41
    %v43 = vpop.xlane.xlu0 %42
    %v44 = vmul.f32 %v40, %v31
    %v45 = vmul.f32 %v43, %v31
    %v46 = vadd.f32 %v44, 1e-06
    %v47 = vadd.f32 %v45, 1e-06
    %v48 = vrsqrt.pop %v46
    %v49 = vrsqrt.pop %v47
    %v50 = vmul.f32 %v34, %v48
    %v51 = vmul.f32 %v35, %v49
    %v52 = vld [vmem:[%s2] sm:$0x1]
    %v54 = vlaneseq
    %v55 = vshrl.u32 %v54, 7
    %v56 = vsub.s32 0, %v55
    %v57 = vrot.slane %v52, %v56
    %v59 = vmul.f32 %v50, %v57
    %v60 = vmul.f32 %v51, %v57
    %v61 = vld [vmem:[%s3] sm:$0x1]
    %v63 = vlaneseq
    %v64 = vshrl.u32 %v63, 7
    %v65 = vsub.s32 0, %v64
    %v66 = vrot.slane %v61, %v65
    %v68 = vadd.f32 %v59, %v66
    %v69 = vadd.f32 %v60, %v66
    %v70 = vpack.c.bf16 %v69, %v68
    %71 = vst.msk [vmem:[#allocation2] sm:$0xff] %vm24, %v70
  $region21: #{_lambda_.13} parent=0 // pred_fallthru
    _
  %v72 = vld [vmem:[#allocation2] sm:$0xff]
  %v73 = vld [vmem:[%s1] sm:$0xf]
  %v74 = vld [vmem:[%s1 + $0x4] sm:$0xf]
  %v75 = vld [vmem:[%s1 + $0x8] sm:$0xf]
  %v76 = vld [vmem:[%s1 + $0xc] sm:$0xf]
  %v81 = vunpack.c.l.b16 %v73
  %v82 = vunpack.c.l.b16 %v74
  %v83 = vunpack.c.l.b16 %v75
  %v84 = vunpack.c.l.b16 %v76
  %v85 = vpack.c.b16 %v82, %v81
  %v86 = vpack.c.b16 %v84, %v83
  %vm89 = vcmask 261120
  %v91 = vsel %vm89, %v72, 0
  %93 = vmatprep.subr.bf16.mxu0 0
  %94 = vmatpush1.bf16.msra.mxu0 %v85
  %95 = vmatprep.subr.bf16.mxu0 0
  %96 = vmatpush1.bf16.msra.mxu0 %v86
  %97 = vmatprep.subr.bf16.mxu0 0
  %98 = vmatpush1.bf16.msra.mxu0 0
  %99 = vmatprep.subr.bf16.mxu0 0
  %100 = vmatpush1.bf16.msra.mxu0 0
  %101 = vmatprep.subr.bf16.mxu0 0
  %102 = vmatpush1.bf16.msra.mxu0 0
  %103 = vmatprep.subr.bf16.mxu0 0
  %104 = vmatpush1.bf16.msra.mxu0 0
  %105 = vmatprep.subr.bf16.mxu0 0
  %106 = vmatpush1.bf16.msra.mxu0 0
  %107 = vmatprep.subr.bf16.mxu0 0
  %108 = vmatpush1.bf16.msra.mxu0 0
  %109 = vmatprep.subr.bf16.mxu0 0
  %110 = vmatpush1.bf16.msra.mxu0 0
  %111 = vmatprep.subr.bf16.mxu0 0
  %112 = vmatpush1.bf16.msra.mxu0 0
  %113 = vmatprep.subr.bf16.mxu0 0
  %114 = vmatpush1.bf16.msra.mxu0 0
  %115 = vmatprep.subr.bf16.mxu0 0
  %116 = vmatpush1.bf16.msra.mxu0 0
  %117 = vmatprep.subr.bf16.mxu0 0
  %118 = vmatpush1.bf16.msra.mxu0 0
  %119 = vmatprep.subr.bf16.mxu0 0
  %120 = vmatpush1.bf16.msra.mxu0 0
  %121 = vmatprep.subr.bf16.mxu0 0
  %122 = vmatpush1.bf16.msra.mxu0 0
  %123 = vmatprep.subr.bf16.mxu0 0
  %124 = vmatpush1.bf16.msra.mxu0 0
  %125 = vmatprep.mubr.bf16.mxu0 0
  %126 = vmatmul.mubr.bf16.gmra.mrb[0].mxu0 %v91
  %v127 = vpop.f32.mrb[0].mxu0
  %v128 = vadd.f32 0.0, %v127
  %v129 = vpop.f32.mrb[0].mxu0
  %v130 = vpop.f32.mrb[0].mxu0
  %v131 = vadd.f32 0.0, %v130
  %v132 = vpop.f32.mrb[0].mxu0
  %133 = vdwg.mxu0
  %v134 = vpack.c.bf16 %v131, %v128
  %v136 = vunpack.c.l.b16 %v134
  %v137 = vunpack.c.h.b16 %v134
  %v138 = vpack.c.b16 %v136, %v136
  %v139 = vpack.c.b16 %v137, %v137
  %vm142 = vcmask 781312
  %143 = vst.msk [vmem:[%s4] sm:$0xf] %vm142, %v138
  %144 = vst.msk [vmem:[%s4 + $0x4] sm:$0xf] %vm142, %v139
  // Predicated region
  $region22: #{_lambda_.13} parent=0 // pred_check
    _
  $region23: #{_lambda_.13} parent=0 // pred_check_branch
    %146 = sbr.rel (0) target = $region25
  $region24: #{_lambda_.13} parent=0 // pred_region
    _
  $region25: #{_lambda_.13} parent=0 // pred_fallthru
    _
  // Predicated region
  $region26: #{_lambda_.13} parent=0 // pred_check
    _
  $region27: #{_lambda_.13} parent=0 // pred_check_branch
    %148 = sbr.rel (0) target = $region29
  $region28: #{_lambda_.13} parent=0 // pred_region
    _
  $region29: #{_lambda_.13} parent=0 // pred_fallthru
    _

// kernel: _lambda_.15
$region0: #{_lambda_.15}
  #allocation0 [shape = 'u32[]', space=smem, size = 0x4, offset = 0x4, fixed_abs, tag = 'smem constant byte address 0x4 - core index']
  #allocation1 [shape = 'u32[144,128]{1,0:T(1,128)}', space=vmem, size = 0x12000, scoped, tag = 'internal scratch']
  #allocation2 [shape = 'bf16[16,32]{1,0:T(16,128)(2,1)}', space=vmem, size = 0x1000, scoped, tag = 'scratch operand']
  %s0 = inlined_call_operand.vmem [shape: f32[16,32], index: 0, kind: input, shape index: {}]
  %s1 = inlined_call_operand.vmem [shape: bf16[32,32], index: 1, kind: input, shape index: {}]
  %s2 = inlined_call_operand.vmem [shape: f32[1,32], index: 2, kind: input, shape index: {}]
  %s3 = inlined_call_operand.vmem [shape: f32[1,32], index: 3, kind: input, shape index: {}]
  %s4 = inlined_call_operand.vmem [shape: bf16[16,32], index: 4, kind: output, shape index: {}]
  %s5 = sld [smem:[#allocation0]]
  $region30: #{_lambda_.15} parent=0
    _
  %s7 = ssub.s32 1, %s5
  %s8 = scalar_select 0, %s7, %s5
  // Predicated region
  $region2: #{_lambda_.15} parent=0 // pred_check
    _
  $region3: #{_lambda_.15} parent=0 // pred_check_branch
    %10 = sbr.rel (0) target = $region5
  $region4: #{_lambda_.15} parent=0 // pred_region
    _
  $region5: #{_lambda_.15} parent=0 // pred_fallthru
    _
  // Predicated region
  $region6: #{_lambda_.15} parent=0 // pred_check
    _
  $region7: #{_lambda_.15} parent=0 // pred_check_branch
    %12 = sbr.rel (0) target = $region9
  $region8: #{_lambda_.15} parent=0 // pred_region
    _
  $region9: #{_lambda_.15} parent=0 // pred_fallthru
    _
  // Predicated region
  $region10: #{_lambda_.15} parent=0 // pred_check
    _
  $region11: #{_lambda_.15} parent=0 // pred_check_branch
    %14 = sbr.rel (0) target = $region13
  $region12: #{_lambda_.15} parent=0 // pred_region
    _
  $region13: #{_lambda_.15} parent=0 // pred_fallthru
    _
  // Predicated region
  $region14: #{_lambda_.15} parent=0 // pred_check
    _
  $region15: #{_lambda_.15} parent=0 // pred_check_branch
    %16 = sbr.rel (0) target = $region17
  $region16: #{_lambda_.15} parent=0 // pred_region
    _
  $region17: #{_lambda_.15} parent=0 // pred_fallthru
    _
  %p18 = scmp.eq.s32.totalorder 0, 0
  // Predicated region
  $region18: #{_lambda_.15} parent=0 // pred_check
    %p19 = pneg %p18
  $region19: #{_lambda_.15} parent=0 // pred_check_branch
    %21 = sbr.rel (%p19) target = $region21
  $region20: #{_lambda_.15} parent=0 // pred_region
    %v22 = vld [vmem:[%s0] sm:$0xff]
    %v23 = vld [vmem:[%s0 + $0x8] sm:$0xff]
    %vm24 = vcmask 261120
    %v25 = vsel %vm24, %v22, 0.0
    %26 = vadd.xlane.f32.xlu0 %v25
    %v27 = vpop.xlane.xlu0 %26
    %v28 = vsel %vm24, %v23, 0.0
    %29 = vadd.xlane.f32.xlu0 %v28
    %v30 = vpop.xlane.xlu0 %29
    %v31 = vrcp.pop 32.0
    %v32 = vmul.f32 %v27, %v31
    %v33 = vmul.f32 %v30, %v31
    %v34 = vsub.f32 %v22, %v32
    %v35 = vsub.f32 %v23, %v33
    %v36 = vmul.f32 %v34, %v34
    %v37 = vmul.f32 %v35, %v35
    %v38 = vsel %vm24, %v36, 0.0
    %39 = vadd.xlane.f32.xlu0 %v38
    %v40 = vpop.xlane.xlu0 %39
    %v41 = vsel %vm24, %v37, 0.0
    %42 = vadd.xlane.f32.xlu0 %v41
    %v43 = vpop.xlane.xlu0 %42
    %v44 = vmul.f32 %v40, %v31
    %v45 = vmul.f32 %v43, %v31
    %v46 = vadd.f32 %v44, 1e-06
    %v47 = vadd.f32 %v45, 1e-06
    %v48 = vrsqrt.pop %v46
    %v49 = vrsqrt.pop %v47
    %v50 = vmul.f32 %v34, %v48
    %v51 = vmul.f32 %v35, %v49
    %v52 = vld [vmem:[%s2] sm:$0x1]
    %v54 = vlaneseq
    %v55 = vshrl.u32 %v54, 7
    %v56 = vsub.s32 0, %v55
    %v57 = vrot.slane %v52, %v56
    %v59 = vmul.f32 %v50, %v57
    %v60 = vmul.f32 %v51, %v57
    %v61 = vld [vmem:[%s3] sm:$0x1]
    %v63 = vlaneseq
    %v64 = vshrl.u32 %v63, 7
    %v65 = vsub.s32 0, %v64
    %v66 = vrot.slane %v61, %v65
    %v68 = vadd.f32 %v59, %v66
    %v69 = vadd.f32 %v60, %v66
    %v70 = vpack.c.bf16 %v69, %v68
    %71 = vst.msk [vmem:[#allocation2] sm:$0xff] %vm24, %v70
  $region21: #{_lambda_.15} parent=0 // pred_fallthru
    _
  %v72 = vld [vmem:[#allocation2] sm:$0xff]
  %v73 = vld [vmem:[%s1] sm:$0xf]
  %v74 = vld [vmem:[%s1 + $0x4] sm:$0xf]
  %v75 = vld [vmem:[%s1 + $0x8] sm:$0xf]
  %v76 = vld [vmem:[%s1 + $0xc] sm:$0xf]
  %v81 = vunpack.c.l.b16 %v73
  %v82 = vunpack.c.l.b16 %v74
  %v83 = vunpack.c.l.b16 %v75
  %v84 = vunpack.c.l.b16 %v76
  %v85 = vpack.c.b16 %v82, %v81
  %v86 = vpack.c.b16 %v84, %v83
  %vm89 = vcmask 261120
  %v91 = vsel %vm89, %v72, 0
  %93 = vmatprep.subr.bf16.mxu0 0
  %94 = vmatpush1.bf16.msra.mxu0 %v85
  %95 = vmatprep.subr.bf16.mxu0 0
  %96 = vmatpush1.bf16.msra.mxu0 %v86
  %97 = vmatprep.subr.bf16.mxu0 0
  %98 = vmatpush1.bf16.msra.mxu0 0
  %99 = vmatprep.subr.bf16.mxu0 0
  %100 = vmatpush1.bf16.msra.mxu0 0
  %101 = vmatprep.subr.bf16.mxu0 0
  %102 = vmatpush1.bf16.msra.mxu0 0
  %103 = vmatprep.subr.bf16.mxu0 0
  %104 = vmatpush1.bf16.msra.mxu0 0
  %105 = vmatprep.subr.bf16.mxu0 0
  %106 = vmatpush1.bf16.msra.mxu0 0
  %107 = vmatprep.subr.bf16.mxu0 0
  %108 = vmatpush1.bf16.msra.mxu0 0
  %109 = vmatprep.subr.bf16.mxu0 0
  %110 = vmatpush1.bf16.msra.mxu0 0
  %111 = vmatprep.subr.bf16.mxu0 0
  %112 = vmatpush1.bf16.msra.mxu0 0
  %113 = vmatprep.subr.bf16.mxu0 0
  %114 = vmatpush1.bf16.msra.mxu0 0
  %115 = vmatprep.subr.bf16.mxu0 0
  %116 = vmatpush1.bf16.msra.mxu0 0
  %117 = vmatprep.subr.bf16.mxu0 0
  %118 = vmatpush1.bf16.msra.mxu0 0
  %119 = vmatprep.subr.bf16.mxu0 0
  %120 = vmatpush1.bf16.msra.mxu0 0
  %121 = vmatprep.subr.bf16.mxu0 0
  %122 = vmatpush1.bf16.msra.mxu0 0
  %123 = vmatprep.subr.bf16.mxu0 0
  %124 = vmatpush1.bf16.msra.mxu0 0
  %125 = vmatprep.mubr.bf16.mxu0 0
  %126 = vmatmul.mubr.bf16.gmra.mrb[0].mxu0 %v91
  %v127 = vpop.f32.mrb[0].mxu0
  %v128 = vadd.f32 0.0, %v127
  %v129 = vpop.f32.mrb[0].mxu0
  %v130 = vpop.f32.mrb[0].mxu0
  %v131 = vadd.f32 0.0, %v130
  %v132 = vpop.f32.mrb[0].mxu0
  %133 = vdwg.mxu0
  %v134 = vpack.c.bf16 %v131, %v128
  %v136 = vunpack.c.l.b16 %v134
  %v137 = vunpack.c.h.b16 %v134
  %v138 = vpack.c.b16 %v136, %v136
  %v139 = vpack.c.b16 %v137, %v137
  %vm142 = vcmask 257024
  %143 = vst.msk [vmem:[%s4] sm:$0xf] %vm142, %v138
  %144 = vst.msk [vmem:[%s4 + $0x4] sm:$0xf] %vm142, %v139
  // Predicated region
  $region22: #{_lambda_.15} parent=0 // pred_check
    _
  $region23: #{_lambda_.15} parent=0 // pred_check_branch
    %146 = sbr.rel (0) target = $region25
  $region24: #{_lambda_.15} parent=0 // pred_region
    _
  $region25: #{_lambda_.15} parent=0 // pred_fallthru
    _
  // Predicated region
  $region26: #{_lambda_.15} parent=0 // pred_check
    _
  $region27: #{_lambda_.15} parent=0 // pred_check_branch
    %148 = sbr.rel (0) target = $region29
  $region28: #{_lambda_.15} parent=0 // pred_region
    _
  $region29: #{_lambda_.15} parent=0 // pred_fallthru
    _

// kernel: _lambda_.14
$region0: #{_lambda_.14}
  #allocation0 [shape = 'u32[]', space=smem, size = 0x4, offset = 0x4, fixed_abs, tag = 'smem constant byte address 0x4 - core index']
  #allocation1 [shape = 'u32[144,128]{1,0:T(1,128)}', space=vmem, size = 0x12000, scoped, tag = 'internal scratch']
  #allocation2 [shape = 'f32[8,8]{1,0:T(8,128)}', space=vmem, size = 0x1000, scoped, tag = 'scratch operand']
  #allocation3 [shape = 'f32[8,32]{1,0:T(8,128)}', space=vmem, size = 0x1000, scoped, tag = 'scratch operand']
  %s0 = inlined_call_operand.vmem [shape: bf16[2,4,8,8], index: 0, kind: input, shape index: {}]
  %s1 = inlined_call_operand.vmem [shape: bf16[2,4,8,8], index: 1, kind: input, shape index: {}]
  %s2 = inlined_call_operand.vmem [shape: bf16[2,4,8,8], index: 2, kind: input, shape index: {}]
  %s3 = inlined_call_operand.vmem [shape: f32[2,8,1], index: 3, kind: input, shape index: {}]
  %s4 = inlined_call_operand.vmem [shape: f32[2,1,8], index: 4, kind: input, shape index: {}]
  %s5 = inlined_call_operand.vmem [shape: bf16[4,8,32], index: 5, kind: input, shape index: {}]
  %s6 = inlined_call_operand.vmem [shape: f32[2,8,32], index: 6, kind: input, shape index: {}]
  %s7 = inlined_call_operand.vmem [shape: f32[2,8,32], index: 7, kind: output, shape index: {}]
  %s8 = sld [smem:[#allocation0]]
  $region69: #{_lambda_.14} parent=0
    _
  %s10 = ssub.s32 1, %s8
  %s11 = scalar_select 0, %s10, %s8
  loop: start=0, step=1, limit=10
  $region2: #{_lambda_.14} parent=0 // loop_pre_header
    _
  $region3: #{_lambda_.14} parent=0 // loop_header
    %s13 = sphi 0, %s17
    %p14 = scmp.ge.s32.totalorder %s13, 10
    %s20 = sphi 0, %s32
    %s21 = sphi 0, %s28
    %s22 = sphi 0, %s20
    %s23 = sphi 0, %s21
    %s24 = sphi 0, %s22
    %s25 = sphi 0, %s23
    %s37 = sphi 0, %s39
    %s40 = sphi 0, %s37
    %s41 = sphi 0, %s40
    %s57 = sphi 0, %s41
    %s65 = sphi 0, %s67
    %s68 = sphi 0, %s65
    %s69 = sphi 0, %s68
    %s85 = sphi 0, %s69
    %s93 = sphi 0, %s95
    %s96 = sphi 0, %s93
    %s97 = sphi 0, %s96
    %s113 = sphi 0, %s97
    %s119 = sphi 0, %s121
    %s122 = sphi 0, %s119
    %s123 = sphi 0, %s122
    %s139 = sphi 0, %s123
    %s145 = sphi 0, %s147
    %s148 = sphi 0, %s145
    %s149 = sphi 0, %s148
    %s165 = sphi 0, %s149
    %s171 = sphi 0, %s173
    %s174 = sphi 0, %s171
    %s175 = sphi 0, %s174
    %s191 = sphi 0, %s175
    %s197 = sphi 0, %s199
    %s200 = sphi 0, %s197
    %s201 = sphi 0, %s200
    %s217 = sphi 0, %s201
    %s223 = sphi 0, %s225
    %s226 = sphi 0, %s223
    %s227 = sphi 0, %s226
    %s243 = sphi 0, %s227
  $region4: #{_lambda_.14} parent=0 // loop_header_branch
    %16 = sbr.rel (%p14) target = $region8
  $region5: #{_lambda_.14} parent=0 // loop_body
    %s18 = ssub.s32 %s13, 1
    %s19 = ssub.s32 %s13, 2
    %s26 = sadd.s32 1, %s21
    %p27 = scmp.ge.s32.totalorder %s26, 4
    %s28 = scalar_select %p27, 0, %s26
    %s29 = sadd.s32 1, %s20
    %s30 = scalar_select %p27, %s29, %s20
    %p31 = scmp.ge.s32.totalorder %s30, 2
    %s32 = scalar_select %p31, 0, %s30
    %s33 = ssub.s32 %s20, %s32
    %s34 = ssub.s32 %s21, %s28
    %s35 = sor.u32 %s33, %s34
    %p36 = scmp.eq.s32.totalorder %s35, 0
    %s38 = sadd.s32 %s37, 1
    %s39 = scalar_select %p36, %s37, %s38
    %p42 = pneg %p36
    %p43 = scmp.eq.s32.totalorder %s13, 7
    %p44 = por %p42, %p43
    %p45 = scmp.ne.s32.totalorder %s37, %s40
    %p46 = scmp.eq.s32.totalorder %s13, 0
    %p47 = por %p45, %p46
    %p48 = scmp.ne.s32.totalorder %s37, %s40
    %p49 = scmp.eq.s32.totalorder %s18, 7
    %p50 = por %p48, %p49
    %p51 = scmp.ne.s32.totalorder %s40, %s41
    %p52 = scmp.eq.s32.totalorder %s18, 0
    %p53 = por %p51, %p52
    %p54 = scmp.ne.s32.totalorder %s40, %s41
    %p55 = scmp.eq.s32.totalorder %s19, 7
    %p56 = por %p54, %p55
    %p58 = scmp.ne.s32.totalorder %s41, %s57
    %p59 = scmp.eq.s32.totalorder %s19, 0
    %p60 = por %p58, %p59
    %s61 = ssub.s32 %s20, %s32
    %s62 = ssub.s32 %s21, %s28
    %s63 = sor.u32 %s61, %s62
    %p64 = scmp.eq.s32.totalorder %s63, 0
    %s66 = sadd.s32 %s65, 1
    %s67 = scalar_select %p64, %s65, %s66
    %p70 = pneg %p64
    %p71 = scmp.eq.s32.totalorder %s13, 7
    %p72 = por %p70, %p71
    %p73 = scmp.ne.s32.totalorder %s65, %s68
    %p74 = scmp.eq.s32.totalorder %s13, 0
    %p75 = por %p73, %p74
    %p76 = scmp.ne.s32.totalorder %s65, %s68
    %p77 = scmp.eq.s32.totalorder %s18, 7
    %p78 = por %p76, %p77
    %p79 = scmp.ne.s32.totalorder %s68, %s69
    %p80 = scmp.eq.s32.totalorder %s18, 0
    %p81 = por %p79, %p80
    %p82 = scmp.ne.s32.totalorder %s68, %s69
    %p83 = scmp.eq.s32.totalorder %s19, 7
    %p84 = por %p82, %p83
    %p86 = scmp.ne.s32.totalorder %s69, %s85
    %p87 = scmp.eq.s32.totalorder %s19, 0
    %p88 = por %p86, %p87
    %s89 = ssub.s32 %s20, %s32
    %s90 = ssub.s32 %s21, %s28
    %s91 = sor.u32 %s89, %s90
    %p92 = scmp.eq.s32.totalorder %s91, 0
    %s94 = sadd.s32 %s93, 1
    %s95 = scalar_select %p92, %s93, %s94
    %p98 = pneg %p92
    %p99 = scmp.eq.s32.totalorder %s13, 7
    %p100 = por %p98, %p99
    %p101 = scmp.ne.s32.totalorder %s93, %s96
    %p102 = scmp.eq.s32.totalorder %s13, 0
    %p103 = por %p101, %p102
    %p104 = scmp.ne.s32.totalorder %s93, %s96
    %p105 = scmp.eq.s32.totalorder %s18, 7
    %p106 = por %p104, %p105
    %p107 = scmp.ne.s32.totalorder %s96, %s97
    %p108 = scmp.eq.s32.totalorder %s18, 0
    %p109 = por %p107, %p108
    %p110 = scmp.ne.s32.totalorder %s96, %s97
    %p111 = scmp.eq.s32.totalorder %s19, 7
    %p112 = por %p110, %p111
    %p114 = scmp.ne.s32.totalorder %s97, %s113
    %p115 = scmp.eq.s32.totalorder %s19, 0
    %p116 = por %p114, %p115
    %s117 = ssub.s32 %s20, %s32
    %p118 = scmp.eq.s32.totalorder %s117, 0
    %s120 = sadd.s32 %s119, 1
    %s121 = scalar_select %p118, %s119, %s120
    %p124 = pneg %p118
    %p125 = scmp.eq.s32.totalorder %s13, 7
    %p126 = por %p124, %p125
    %p127 = scmp.ne.s32.totalorder %s119, %s122
    %p128 = scmp.eq.s32.totalorder %s13, 0
    %p129 = por %p127, %p128
    %p130 = scmp.ne.s32.totalorder %s119, %s122
    %p131 = scmp.eq.s32.totalorder %s18, 7
    %p132 = por %p130, %p131
    %p133 = scmp.ne.s32.totalorder %s122, %s123
    %p134 = scmp.eq.s32.totalorder %s18, 0
    %p135 = por %p133, %p134
    %p136 = scmp.ne.s32.totalorder %s122, %s123
    %p137 = scmp.eq.s32.totalorder %s19, 7
    %p138 = por %p136, %p137
    %p140 = scmp.ne.s32.totalorder %s123, %s139
    %p141 = scmp.eq.s32.totalorder %s19, 0
    %p142 = por %p140, %p141
    %s143 = ssub.s32 %s20, %s32
    %p144 = scmp.eq.s32.totalorder %s143, 0
    %s146 = sadd.s32 %s145, 1
    %s147 = scalar_select %p144, %s145, %s146
    %p150 = pneg %p144
    %p151 = scmp.eq.s32.totalorder %s13, 7
    %p152 = por %p150, %p151
    %p153 = scmp.ne.s32.totalorder %s145, %s148
    %p154 = scmp.eq.s32.totalorder %s13, 0
    %p155 = por %p153, %p154
    %p156 = scmp.ne.s32.totalorder %s145, %s148
    %p157 = scmp.eq.s32.totalorder %s18, 7
    %p158 = por %p156, %p157
    %p159 = scmp.ne.s32.totalorder %s148, %s149
    %p160 = scmp.eq.s32.totalorder %s18, 0
    %p161 = por %p159, %p160
    %p162 = scmp.ne.s32.totalorder %s148, %s149
    %p163 = scmp.eq.s32.totalorder %s19, 7
    %p164 = por %p162, %p163
    %p166 = scmp.ne.s32.totalorder %s149, %s165
    %p167 = scmp.eq.s32.totalorder %s19, 0
    %p168 = por %p166, %p167
    %s169 = ssub.s32 %s21, %s28
    %p170 = scmp.eq.s32.totalorder %s169, 0
    %s172 = sadd.s32 %s171, 1
    %s173 = scalar_select %p170, %s171, %s172
    %p176 = pneg %p170
    %p177 = scmp.eq.s32.totalorder %s13, 7
    %p178 = por %p176, %p177
    %p179 = scmp.ne.s32.totalorder %s171, %s174
    %p180 = scmp.eq.s32.totalorder %s13, 0
    %p181 = por %p179, %p180
    %p182 = scmp.ne.s32.totalorder %s171, %s174
    %p183 = scmp.eq.s32.totalorder %s18, 7
    %p184 = por %p182, %p183
    %p185 = scmp.ne.s32.totalorder %s174, %s175
    %p186 = scmp.eq.s32.totalorder %s18, 0
    %p187 = por %p185, %p186
    %p188 = scmp.ne.s32.totalorder %s174, %s175
    %p189 = scmp.eq.s32.totalorder %s19, 7
    %p190 = por %p188, %p189
    %p192 = scmp.ne.s32.totalorder %s175, %s191
    %p193 = scmp.eq.s32.totalorder %s19, 0
    %p194 = por %p192, %p193
    %s195 = ssub.s32 %s20, %s32
    %p196 = scmp.eq.s32.totalorder %s195, 0
    %s198 = sadd.s32 %s197, 1
    %s199 = scalar_select %p196, %s197, %s198
    %p202 = pneg %p196
    %p203 = scmp.eq.s32.totalorder %s13, 7
    %p204 = por %p202, %p203
    %p205 = scmp.ne.s32.totalorder %s197, %s200
    %p206 = scmp.eq.s32.totalorder %s13, 0
    %p207 = por %p205, %p206
    %p208 = scmp.ne.s32.totalorder %s197, %s200
    %p209 = scmp.eq.s32.totalorder %s18, 7
    %p210 = por %p208, %p209
    %p211 = scmp.ne.s32.totalorder %s200, %s201
    %p212 = scmp.eq.s32.totalorder %s18, 0
    %p213 = por %p211, %p212
    %p214 = scmp.ne.s32.totalorder %s200, %s201
    %p215 = scmp.eq.s32.totalorder %s19, 7
    %p216 = por %p214, %p215
    %p218 = scmp.ne.s32.totalorder %s201, %s217
    %p219 = scmp.eq.s32.totalorder %s19, 0
    %p220 = por %p218, %p219
    %s221 = ssub.s32 %s20, %s32
    %p222 = scmp.eq.s32.totalorder %s221, 0
    %s224 = sadd.s32 %s223, 1
    %s225 = scalar_select %p222, %s223, %s224
    %p228 = pneg %p222
    %p229 = scmp.eq.s32.totalorder %s13, 7
    %p230 = por %p228, %p229
    %p231 = scmp.ne.s32.totalorder %s223, %s226
    %p232 = scmp.eq.s32.totalorder %s13, 0
    %p233 = por %p231, %p232
    %p234 = scmp.ne.s32.totalorder %s223, %s226
    %p235 = scmp.eq.s32.totalorder %s18, 7
    %p236 = por %p234, %p235
    %p237 = scmp.ne.s32.totalorder %s226, %s227
    %p238 = scmp.eq.s32.totalorder %s18, 0
    %p239 = por %p237, %p238
    %p240 = scmp.ne.s32.totalorder %s226, %s227
    %p241 = scmp.eq.s32.totalorder %s19, 7
    %p242 = por %p240, %p241
    %p244 = scmp.ne.s32.totalorder %s227, %s243
    %p245 = scmp.eq.s32.totalorder %s19, 0
    %p246 = por %p244, %p245
    %p247 = scmp.le.s32.totalorder 1, %s13
    %p248 = scmp.lt.s32.totalorder %s13, 9
    %p249 = pnand %p247, %p248
    %p250 = pneg %p249
    // Predicated region
    $region9: #{_lambda_.14} parent=5 // pred_check
      _
    $region10: #{_lambda_.14} parent=5 // pred_check_branch
      %252 = sbr.rel (%p249) target = $region12
    $region11: #{_lambda_.14} parent=5 // pred_region
      %s253 = ssub.s32 %s13, 1
    $region12: #{_lambda_.14} parent=5 // pred_fallthru
      _
    %p254 = scmp.lt.s32.totalorder %s13, 8
    // Predicated region
    $region13: #{_lambda_.14} parent=5 // pred_check
      %p255 = pneg %p254
    $region14: #{_lambda_.14} parent=5 // pred_check_branch
      %257 = sbr.rel (%p255) target = $region16
    $region15: #{_lambda_.14} parent=5 // pred_region
      // Predicated region
      $region17: #{_lambda_.14} parent=15 // pred_check
        %p258 = pneg %p47
      $region18: #{_lambda_.14} parent=15 // pred_check_branch
        %260 = sbr.rel (%p258) target = $region20
      $region19: #{_lambda_.14} parent=15 // pred_region
        %p261 = scmp.lt.s32.totalorder %s20, 1
        %s262 = scalar_select %p261, %s20, 1
        %p263 = scmp.lt.s32.totalorder %s21, 3
        %s264 = scalar_select %p263, %s21, 3
        %s265 = smul.addr %s262, 4
        %s266 = sadd.s32 %s264, %s265
        %s267 = smul.addr %s266, 4
        %s268 = scalar_lea.vmem %s0, %s267
      $region20: #{_lambda_.14} parent=15 // pred_fallthru
        _
      // Predicated region
      $region21: #{_lambda_.14} parent=15 // pred_check
        %p269 = pneg %p75
      $region22: #{_lambda_.14} parent=15 // pred_check_branch
        %271 = sbr.rel (%p269) target = $region24
      $region23: #{_lambda_.14} parent=15 // pred_region
        %p272 = scmp.lt.s32.totalorder %s20, 1
        %s273 = scalar_select %p272, %s20, 1
        %p274 = scmp.lt.s32.totalorder %s21, 3
        %s275 = scalar_select %p274, %s21, 3
        %s276 = smul.addr %s273, 4
        %s277 = sadd.s32 %s275, %s276
        %s278 = smul.addr %s277, 4
        %s279 = scalar_lea.vmem %s1, %s278
      $region24: #{_lambda_.14} parent=15 // pred_fallthru
        _
      // Predicated region
      $region25: #{_lambda_.14} parent=15 // pred_check
        %p280 = pneg %p103
      $region26: #{_lambda_.14} parent=15 // pred_check_branch
        %282 = sbr.rel (%p280) target = $region28
      $region27: #{_lambda_.14} parent=15 // pred_region
        %p283 = scmp.lt.s32.totalorder %s20, 1
        %s284 = scalar_select %p283, %s20, 1
        %p285 = scmp.lt.s32.totalorder %s21, 3
        %s286 = scalar_select %p285, %s21, 3
        %s287 = smul.addr %s284, 4
        %s288 = sadd.s32 %s286, %s287
        %s289 = smul.addr %s288, 4
        %s290 = scalar_lea.vmem %s2, %s289
      $region28: #{_lambda_.14} parent=15 // pred_fallthru
        _
      // Predicated region
      $region29: #{_lambda_.14} parent=15 // pred_check
        %p291 = pneg %p129
      $region30: #{_lambda_.14} parent=15 // pred_check_branch
        %293 = sbr.rel (%p291) target = $region32
      $region31: #{_lambda_.14} parent=15 // pred_region
        %p294 = scmp.lt.s32.totalorder %s20, 1
        %s295 = scalar_select %p294, %s20, 1
        %s296 = smul.addr %s295, 8
        %s297 = scalar_lea.vmem %s3, %s296
      $region32: #{_lambda_.14} parent=15 // pred_fallthru
        _
      // Predicated region
      $region33: #{_lambda_.14} parent=15 // pred_check
        %p298 = pneg %p155
      $region34: #{_lambda_.14} parent=15 // pred_check_branch
        %300 = sbr.rel (%p298) target = $region36
      $region35: #{_lambda_.14} parent=15 // pred_region
        %p301 = scmp.lt.s32.totalorder %s20, 1
        %s302 = scalar_select %p301, %s20, 1
        %s303 = scalar_lea.vmem %s4, %s302
      $region36: #{_lambda_.14} parent=15 // pred_fallthru
        _
      // Predicated region
      $region37: #{_lambda_.14} parent=15 // pred_check
        %p304 = pneg %p181
      $region38: #{_lambda_.14} parent=15 // pred_check_branch
        %306 = sbr.rel (%p304) target = $region40
      $region39: #{_lambda_.14} parent=15 // pred_region
        %p307 = scmp.lt.s32.totalorder %s21, 3
        %s308 = scalar_select %p307, %s21, 3
        %s309 = smul.addr %s308, 4
        %s310 = scalar_lea.vmem %s5, %s309
      $region40: #{_lambda_.14} parent=15 // pred_fallthru
        _
      // Predicated region
      $region41: #{_lambda_.14} parent=15 // pred_check
        %p311 = pneg %p207
      $region42: #{_lambda_.14} parent=15 // pred_check_branch
        %313 = sbr.rel (%p311) target = $region44
      $region43: #{_lambda_.14} parent=15 // pred_region
        %p314 = scmp.lt.s32.totalorder %s20, 1
        %s315 = scalar_select %p314, %s20, 1
        %s316 = smul.addr %s315, 8
        %s317 = scalar_lea.vmem %s6, %s316
      $region44: #{_lambda_.14} parent=15 // pred_fallthru
        _
    $region16: #{_lambda_.14} parent=5 // pred_fallthru
      _
    %p318 = scmp.le.s32.totalorder 1, %s13
    %p319 = scmp.lt.s32.totalorder %s13, 9
    %p320 = pnand %p318, %p319
    %p321 = pneg %p320
    // Predicated region
    $region45: #{_lambda_.14} parent=5 // pred_check
      _
    $region46: #{_lambda_.14} parent=5 // pred_check_branch
      %323 = sbr.rel (%p320) target = $region48
    $region47: #{_lambda_.14} parent=5 // pred_region
      %s324 = ssub.s32 %s13, 1
      %p325 = scmp.lt.s32.totalorder %s22, 1
      %s326 = scalar_select %p325, %s22, 1
      %p327 = scmp.lt.s32.totalorder %s23, 3
      %s328 = scalar_select %p327, %s23, 3
      %s329 = smul.addr %s326, 4
      %s330 = sadd.s32 %s328, %s329
      %s331 = smul.addr %s330, 4
      %s332 = scalar_lea.vmem %s0, %s331
      %p333 = pneg %p53
      %p334 = pneg %p50
      %p335 = scmp.lt.s32.totalorder %s22, 1
      %s336 = scalar_select %p335, %s22, 1
      %p337 = scmp.lt.s32.totalorder %s23, 3
      %s338 = scalar_select %p337, %s23, 3
      %s339 = smul.addr %s336, 4
      %s340 = sadd.s32 %s338, %s339
      %s341 = smul.addr %s340, 4
      %s342 = scalar_lea.vmem %s1, %s341
      %p343 = pneg %p81
      %p344 = pneg %p78
      %p345 = scmp.lt.s32.totalorder %s22, 1
      %s346 = scalar_select %p345, %s22, 1
      %p347 = scmp.lt.s32.totalorder %s23, 3
      %s348 = scalar_select %p347, %s23, 3
      %s349 = smul.addr %s346, 4
      %s350 = sadd.s32 %s348, %s349
      %s351 = smul.addr %s350, 4
      %s352 = scalar_lea.vmem %s2, %s351
      %p353 = pneg %p109
      %p354 = pneg %p106
      %p355 = scmp.lt.s32.totalorder %s22, 1
      %s356 = scalar_select %p355, %s22, 1
      %s357 = smul.addr %s356, 8
      %s358 = scalar_lea.vmem %s3, %s357
      %p359 = pneg %p135
      %p360 = pneg %p132
      %p361 = scmp.lt.s32.totalorder %s22, 1
      %s362 = scalar_select %p361, %s22, 1
      %s363 = scalar_lea.vmem %s4, %s362
      %p364 = pneg %p161
      %p365 = pneg %p158
      %p366 = scmp.lt.s32.totalorder %s23, 3
      %s367 = scalar_select %p366, %s23, 3
      %s368 = smul.addr %s367, 4
      %s369 = scalar_lea.vmem %s5, %s368
      %p370 = pneg %p187
      %p371 = pneg %p184
      %p372 = scmp.lt.s32.totalorder %s22, 1
      %s373 = scalar_select %p372, %s22, 1
      %s374 = smul.addr %s373, 8
      %s375 = scalar_lea.vmem %s6, %s374
      %p376 = pneg %p213
      %p377 = pneg %p210
      %p378 = pneg %p239
      %p379 = pneg %p236
      %p380 = scmp.lt.s32.totalorder %s22, 1
      %s381 = scalar_select %p380, %s22, 1
      %s382 = smul.addr %s381, 8
      %s383 = scalar_lea.vmem %s7, %s382
      %p384 = scmp.lt.s32.totalorder %s22, 1
      %s385 = scalar_select %p384, %s22, 1
      %p386 = scmp.lt.s32.totalorder %s23, 3
      %s387 = scalar_select %p386, %s23, 3
      %s388 = smul.addr %s385, 4
      %s389 = sadd.s32 %s387, %s388
      %s390 = smul.addr %s389, 4
      %s391 = scalar_lea.vmem %s0, %s390
      %p392 = scmp.lt.s32.totalorder %s22, 1
      %s393 = scalar_select %p392, %s22, 1
      %p394 = scmp.lt.s32.totalorder %s23, 3
      %s395 = scalar_select %p394, %s23, 3
      %s396 = smul.addr %s393, 4
      %s397 = sadd.s32 %s395, %s396
      %s398 = smul.addr %s397, 4
      %s399 = scalar_lea.vmem %s1, %s398
      %p400 = scmp.lt.s32.totalorder %s22, 1
      %s401 = scalar_select %p400, %s22, 1
      %p402 = scmp.lt.s32.totalorder %s23, 3
      %s403 = scalar_select %p402, %s23, 3
      %s404 = smul.addr %s401, 4
      %s405 = sadd.s32 %s403, %s404
      %s406 = smul.addr %s405, 4
      %s407 = scalar_lea.vmem %s2, %s406
      %p408 = scmp.lt.s32.totalorder %s22, 1
      %s409 = scalar_select %p408, %s22, 1
      %s410 = smul.addr %s409, 8
      %s411 = scalar_lea.vmem %s3, %s410
      %p412 = scmp.lt.s32.totalorder %s22, 1
      %s413 = scalar_select %p412, %s22, 1
      %s414 = scalar_lea.vmem %s4, %s413
      %p415 = scmp.lt.s32.totalorder %s23, 3
      %s416 = scalar_select %p415, %s23, 3
      %s417 = smul.addr %s416, 4
      %s418 = scalar_lea.vmem %s5, %s417
      %p419 = scmp.lt.s32.totalorder %s22, 1
      %s420 = scalar_select %p419, %s22, 1
      %s421 = smul.addr %s420, 8
      %s422 = scalar_lea.vmem %s6, %s421
      %p423 = scmp.lt.s32.totalorder %s22, 1
      %s424 = scalar_select %p423, %s22, 1
      %s425 = smul.addr %s424, 8
      %s426 = scalar_lea.vmem %s7, %s425
      %p428 = scmp.eq.s32.totalorder %s23, 0
      // Predicated region
      $region49: #{_lambda_.14} parent=47 // pred_check
        %p429 = pneg %p428
      $region50: #{_lambda_.14} parent=47 // pred_check_branch
        %431 = sbr.rel (%p429) target = $region52
      $region51: #{_lambda_.14} parent=47 // pred_region
        %vm432 = vcmask 261120
        %433 = vst.msk [vmem:[#allocation3] sm:$0xff] %vm432, 0.0
        %v434 = vld [vmem:[%s411] sm:$0xff]
        %v435 = vld [vmem:[%s414] sm:$0x1]
        %vm436 = vcmp.gt.f32.partialorder %v434, 0.5
        %vm437 = vcmp.gt.f32.partialorder %v435, 0.5
        %v438 = vsel %vm436, 1, 0
        %439 = vset.pattern.permute.xlu0 0
        %440 = vperm.xlu0 %439, %v438
        %v441 = vpop.permute.xlu0 %440
        %vm442 = vcmp.eq.s32.totalorder %v441, 1
        %v443 = vsel %vm437, 1, 0
        %v444 = vlaneseq
        %v445 = vshrl.u32 %v444, 7
        %v446 = vsub.s32 0, %v445
        %v447 = vrot.slane %v443, %v446
        %vm448 = vcmp.eq.s32.totalorder %v447, 1
        %vm449 = vmand %vm442, %vm448
        %v450 = vlaneseq
        %v451 = vshrl.u32 %v450, 7
        %v452 = vlaneseq
        %v453 = vand.u32 %v452, 127
        %vm454 = vcmp.ge.s32.totalorder %v451, %v453
        %vm455 = vmand %vm449, %vm454
        %v456 = vsel %vm455, 0.0, -1e+10
        %vm457 = vcmask 64512
        %458 = vst.msk [vmem:[#allocation2] sm:$0xff] %vm457, %v456
      $region52: #{_lambda_.14} parent=47 // pred_fallthru
        _
      %v459 = vld [vmem:[%s391] sm:$0xf]
      %v460 = vunpack.c.l.bf16 %v459
      %v461 = vmul.f32 %v460, 0.35355338
      %v462 = vpack.c.bf16 %v461, %v461
      %v463 = vld [vmem:[%s399] sm:$0xf]
      %v464 = vld [vmem:[%s407] sm:$0xf]
      %v465 = vld [vmem:[#allocation2] sm:$0xff]
      %vm466 = vcmask 64512
      %v468 = vsel %vm466, %v462, 0
      %v471 = vsel %vm466, %v463, 0
      %473 = vmatprep.subr.bf16.mxu0 0
      %474 = vmatpush1.bf16.xpose.msra.mxu0 %v471
      %475 = vmatprep.subr.bf16.mxu0 0
      %476 = vmatpush1.bf16.xpose.msra.mxu0 0
      %477 = vmatprep.subr.bf16.mxu0 0
      %478 = vmatpush1.bf16.xpose.msra.mxu0 0
      %479 = vmatprep.subr.bf16.mxu0 0
      %480 = vmatpush1.bf16.xpose.msra.mxu0 0
      %481 = vmatprep.subr.bf16.mxu0 0
      %482 = vmatpush1.bf16.xpose.msra.mxu0 0
      %483 = vmatprep.subr.bf16.mxu0 0
      %484 = vmatpush1.bf16.xpose.msra.mxu0 0
      %485 = vmatprep.subr.bf16.mxu0 0
      %486 = vmatpush1.bf16.xpose.msra.mxu0 0
      %487 = vmatprep.subr.bf16.mxu0 0
      %488 = vmatpush1.bf16.xpose.msra.mxu0 0
      %489 = vmatprep.subr.bf16.mxu0 0
      %490 = vmatpush1.bf16.xpose.msra.mxu0 0
      %491 = vmatprep.subr.bf16.mxu0 0
      %492 = vmatpush1.bf16.xpose.msra.mxu0 0
      %493 = vmatprep.subr.bf16.mxu0 0
      %494 = vmatpush1.bf16.xpose.msra.mxu0 0
      %495 = vmatprep.subr.bf16.mxu0 0
      %496 = vmatpush1.bf16.xpose.msra.mxu0 0
      %497 = vmatprep.subr.bf16.mxu0 0
      %498 = vmatpush1.bf16.xpose.msra.mxu0 0
      %499 = vmatprep.subr.bf16.mxu0 0
      %500 = vmatpush1.bf16.xpose.msra.mxu0 0
      %501 = vmatprep.subr.bf16.mxu0 0
      %502 = vmatpush1.bf16.xpose.msra.mxu0 0
      %503 = vmatprep.subr.bf16.mxu0 0
      %504 = vmatpush1.bf16.xpose.msra.mxu0 0
      %505 = vmatprep.mubr.bf16.mxu0 0
      %506 = vmatmul.mubr.bf16.gmra.mrb[0].mxu0 %v468
      %v507 = vpop.f32.mrb[0].mxu0
      %v508 = vadd.f32 %v465, %v507
      %v509 = vpop.f32.mrb[0].mxu0
      %v510 = vpop.f32.mrb[0].mxu0
      %v511 = vpop.f32.mrb[0].mxu0
      %512 = vdwg.mxu0
      %v513 = vsel %vm466, %v508, -inf
      %514 = vmax.xlane.f32.xlu0 %v513
      %v515 = vpop.xlane.xlu0 %514
      %v516 = vsub.f32 %v508, %v515
      %v517 = vmul.f32 %v516, 1.442695
      %v518 = vpow.pop %v517
      %v519 = vsel %vm466, %v518, 0.0
      %520 = vadd.xlane.f32.xlu0 %v519
      %v521 = vpop.xlane.xlu0 %520
      %v522 = vrcp.pop %v521
      %v523 = vmul.f32 %v518, %v522
      %v524 = vpack.c.bf16 %v523, %v523
      %v526 = vsel %vm466, %v524, 0
      %vm528 = vcmask 1043456
      %v530 = vsel %vm528, %v464, 0
      %532 = vmatprep.subr.bf16.mxu0 0
      %533 = vmatpush1.bf16.msra.mxu0 %v530
      %534 = vmatprep.subr.bf16.mxu0 0
      %535 = vmatpush1.bf16.msra.mxu0 0
      %536 = vmatprep.subr.bf16.mxu0 0
      %537 = vmatpush1.bf16.msra.mxu0 0
      %538 = vmatprep.subr.bf16.mxu0 0
      %539 = vmatpush1.bf16.msra.mxu0 0
      %540 = vmatprep.subr.bf16.mxu0 0
      %541 = vmatpush1.bf16.msra.mxu0 0
      %542 = vmatprep.subr.bf16.mxu0 0
      %543 = vmatpush1.bf16.msra.mxu0 0
      %544 = vmatprep.subr.bf16.mxu0 0
      %545 = vmatpush1.bf16.msra.mxu0 0
      %546 = vmatprep.subr.bf16.mxu0 0
      %547 = vmatpush1.bf16.msra.mxu0 0
      %548 = vmatprep.subr.bf16.mxu0 0
      %549 = vmatpush1.bf16.msra.mxu0 0
      %550 = vmatprep.subr.bf16.mxu0 0
      %551 = vmatpush1.bf16.msra.mxu0 0
      %552 = vmatprep.subr.bf16.mxu0 0
      %553 = vmatpush1.bf16.msra.mxu0 0
      %554 = vmatprep.subr.bf16.mxu0 0
      %555 = vmatpush1.bf16.msra.mxu0 0
      %556 = vmatprep.subr.bf16.mxu0 0
      %557 = vmatpush1.bf16.msra.mxu0 0
      %558 = vmatprep.subr.bf16.mxu0 0
      %559 = vmatpush1.bf16.msra.mxu0 0
      %560 = vmatprep.subr.bf16.mxu0 0
      %561 = vmatpush1.bf16.msra.mxu0 0
      %562 = vmatprep.subr.bf16.mxu0 0
      %563 = vmatpush1.bf16.msra.mxu0 0
      %564 = vmatprep.mubr.bf16.mxu0 0
      %565 = vmatmul.mubr.bf16.gmra.mrb[0].mxu0 %v526
      %v566 = vpop.f32.mrb[0].mxu0
      %v567 = vadd.f32 0.0, %v566
      %v568 = vpop.f32.mrb[0].mxu0
      %v569 = vpop.f32.mrb[0].mxu0
      %v570 = vpop.f32.mrb[0].mxu0
      %571 = vdwg.mxu0
      %v572 = vld [vmem:[#allocation3] sm:$0xff]
      %v573 = vpack.c.bf16 %v567, %v567
      %v574 = vld [vmem:[%s418] sm:$0xf]
      %v576 = vsel %vm466, %v573, 0
      %v579 = vsel %vm528, %v574, 0
      %581 = vmatprep.subr.bf16.mxu0 0
      %582 = vmatpush1.bf16.msra.mxu0 %v579
      %583 = vmatprep.subr.bf16.mxu0 0
      %584 = vmatpush1.bf16.msra.mxu0 0
      %585 = vmatprep.subr.bf16.mxu0 0
      %586 = vmatpush1.bf16.msra.mxu0 0
      %587 = vmatprep.subr.bf16.mxu0 0
      %588 = vmatpush1.bf16.msra.mxu0 0
      %589 = vmatprep.subr.bf16.mxu0 0
      %590 = vmatpush1.bf16.msra.mxu0 0
      %591 = vmatprep.subr.bf16.mxu0 0
      %592 = vmatpush1.bf16.msra.mxu0 0
      %593 = vmatprep.subr.bf16.mxu0 0
      %594 = vmatpush1.bf16.msra.mxu0 0
      %595 = vmatprep.subr.bf16.mxu0 0
      %596 = vmatpush1.bf16.msra.mxu0 0
      %597 = vmatprep.subr.bf16.mxu0 0
      %598 = vmatpush1.bf16.msra.mxu0 0
      %599 = vmatprep.subr.bf16.mxu0 0
      %600 = vmatpush1.bf16.msra.mxu0 0
      %601 = vmatprep.subr.bf16.mxu0 0
      %602 = vmatpush1.bf16.msra.mxu0 0
      %603 = vmatprep.subr.bf16.mxu0 0
      %604 = vmatpush1.bf16.msra.mxu0 0
      %605 = vmatprep.subr.bf16.mxu0 0
      %606 = vmatpush1.bf16.msra.mxu0 0
      %607 = vmatprep.subr.bf16.mxu0 0
      %608 = vmatpush1.bf16.msra.mxu0 0
      %609 = vmatprep.subr.bf16.mxu0 0
      %610 = vmatpush1.bf16.msra.mxu0 0
      %611 = vmatprep.subr.bf16.mxu0 0
      %612 = vmatpush1.bf16.msra.mxu0 0
      %613 = vmatprep.mubr.bf16.mxu0 0
      %614 = vmatmul.mubr.bf16.gmra.mrb[0].mxu0 %v576
      %v615 = vpop.f32.mrb[0].mxu0
      %v616 = vadd.f32 0.0, %v615
      %v617 = vpop.f32.mrb[0].mxu0
      %v618 = vpop.f32.mrb[0].mxu0
      %v619 = vpop.f32.mrb[0].mxu0
      %620 = vdwg.mxu0
      %v621 = vadd.f32 %v572, %v616
      %vm622 = vcmask 261120
      %623 = vst.msk [vmem:[#allocation3] sm:$0xff] %vm622, %v621
      %p624 = scmp.eq.s32.totalorder %s23, 3
      // Predicated region
      $region53: #{_lambda_.14} parent=47 // pred_check
        %p625 = pneg %p624
      $region54: #{_lambda_.14} parent=47 // pred_check_branch
        %627 = sbr.rel (%p625) target = $region56
      $region55: #{_lambda_.14} parent=47 // pred_region
        %v628 = vld [vmem:[#allocation3] sm:$0xff]
        %v629 = vld [vmem:[%s422] sm:$0xff]
        %v630 = vadd.f32 %v628, %v629
        %631 = vst.msk [vmem:[%s426] sm:$0xff] %vm622, %v630
      $region56: #{_lambda_.14} parent=47 // pred_fallthru
        _
      %p632 = scmp.lt.s32.totalorder %s22, 1
      %s633 = scalar_select %p632, %s22, 1
      %s634 = smul.addr %s633, 8
      %s635 = scalar_lea.vmem %s7, %s634
      // Predicated region
      $region57: #{_lambda_.14} parent=47 // pred_check
        %p636 = pneg %p236
      $region58: #{_lambda_.14} parent=47 // pred_check_branch
        %638 = sbr.rel (%p636) target = $region60
      $region59: #{_lambda_.14} parent=47 // pred_region
        _
      $region60: #{_lambda_.14} parent=47 // pred_fallthru
        _
    $region48: #{_lambda_.14} parent=5 // pred_fallthru
      _
    %p639 = scmp.le.s32.totalorder 2, %s13
    // Predicated region
    $region61: #{_lambda_.14} parent=5 // pred_check
      %p640 = pneg %p639
    $region62: #{_lambda_.14} parent=5 // pred_check_branch
      %642 = sbr.rel (%p640) target = $region64
    $region63: #{_lambda_.14} parent=5 // pred_region
      %s643 = ssub.s32 %s13, 2
      // Predicated region
      $region65: #{_lambda_.14} parent=63 // pred_check
        %p644 = pneg %p242
      $region66: #{_lambda_.14} parent=63 // pred_check_branch
        %646 = sbr.rel (%p644) target = $region68
      $region67: #{_lambda_.14} parent=63 // pred_region
        %p647 = scmp.lt.s32.totalorder %s24, 1
        %s648 = scalar_select %p647, %s24, 1
        %s649 = smul.addr %s648, 8
        %s650 = scalar_lea.vmem %s7, %s649
      $region68: #{_lambda_.14} parent=63 // pred_fallthru
        _
    $region64: #{_lambda_.14} parent=5 // pred_fallthru
      _
  $region6: #{_lambda_.14} parent=0 // loop_footer
    %s17 = sadd.s32 1, %s13
  $region7: #{_lambda_.14} parent=0 // loop_footer_branch
    %12 = sbr.rel target = $region3
  $region8: #{_lambda_.14} parent=0 // loop_exit
    _

// kernel: _lambda_.16
$region0: #{_lambda_.16}
  #allocation0 [shape = 'u32[]', space=smem, size = 0x4, offset = 0x4, fixed_abs, tag = 'smem constant byte address 0x4 - core index']
  #allocation1 [shape = 'u32[144,128]{1,0:T(1,128)}', space=vmem, size = 0x12000, scoped, tag = 'internal scratch']
  %s0 = inlined_call_operand.vmem [shape: f32[16,32], index: 0, kind: input, shape index: {}]
  %s1 = inlined_call_operand.vmem [shape: bf16[32,64], index: 1, kind: input, shape index: {}]
  %s2 = inlined_call_operand.vmem [shape: bf16[16,64], index: 2, kind: output, shape index: {}]
  %s3 = sld [smem:[#allocation0]]
  $region18: #{_lambda_.16} parent=0
    _
  %s5 = ssub.s32 1, %s3
  %s6 = scalar_select 0, %s5, %s3
  // Predicated region
  $region2: #{_lambda_.16} parent=0 // pred_check
    _
  $region3: #{_lambda_.16} parent=0 // pred_check_branch
    %8 = sbr.rel (0) target = $region5
  $region4: #{_lambda_.16} parent=0 // pred_region
    _
  $region5: #{_lambda_.16} parent=0 // pred_fallthru
    _
  // Predicated region
  $region6: #{_lambda_.16} parent=0 // pred_check
    _
  $region7: #{_lambda_.16} parent=0 // pred_check_branch
    %10 = sbr.rel (0) target = $region9
  $region8: #{_lambda_.16} parent=0 // pred_region
    _
  $region9: #{_lambda_.16} parent=0 // pred_fallthru
    _
  %v12 = vld [vmem:[%s0] sm:$0xff]
  %v13 = vld [vmem:[%s0 + $0x8] sm:$0xff]
  %v14 = vpack.c.bf16 %v13, %v12
  %v15 = vld [vmem:[%s1] sm:$0xf]
  %v16 = vld [vmem:[%s1 + $0x4] sm:$0xf]
  %v17 = vld [vmem:[%s1 + $0x8] sm:$0xf]
  %v18 = vld [vmem:[%s1 + $0xc] sm:$0xf]
  %v23 = vunpack.c.l.b16 %v15
  %v24 = vunpack.c.l.b16 %v16
  %v25 = vunpack.c.l.b16 %v17
  %v26 = vunpack.c.l.b16 %v18
  %v27 = vpack.c.b16 %v24, %v23
  %v28 = vpack.c.b16 %v26, %v25
  %vm31 = vcmask 261120
  %v33 = vsel %vm31, %v14, 0
  %35 = vmatprep.subr.bf16.mxu0 0
  %36 = vmatpush1.bf16.msra.mxu0 %v27
  %37 = vmatprep.subr.bf16.mxu0 0
  %38 = vmatpush1.bf16.msra.mxu0 %v28
  %39 = vmatprep.subr.bf16.mxu0 0
  %40 = vmatpush1.bf16.msra.mxu0 0
  %41 = vmatprep.subr.bf16.mxu0 0
  %42 = vmatpush1.bf16.msra.mxu0 0
  %43 = vmatprep.subr.bf16.mxu0 0
  %44 = vmatpush1.bf16.msra.mxu0 0
  %45 = vmatprep.subr.bf16.mxu0 0
  %46 = vmatpush1.bf16.msra.mxu0 0
  %47 = vmatprep.subr.bf16.mxu0 0
  %48 = vmatpush1.bf16.msra.mxu0 0
  %49 = vmatprep.subr.bf16.mxu0 0
  %50 = vmatpush1.bf16.msra.mxu0 0
  %51 = vmatprep.subr.bf16.mxu0 0
  %52 = vmatpush1.bf16.msra.mxu0 0
  %53 = vmatprep.subr.bf16.mxu0 0
  %54 = vmatpush1.bf16.msra.mxu0 0
  %55 = vmatprep.subr.bf16.mxu0 0
  %56 = vmatpush1.bf16.msra.mxu0 0
  %57 = vmatprep.subr.bf16.mxu0 0
  %58 = vmatpush1.bf16.msra.mxu0 0
  %59 = vmatprep.subr.bf16.mxu0 0
  %60 = vmatpush1.bf16.msra.mxu0 0
  %61 = vmatprep.subr.bf16.mxu0 0
  %62 = vmatpush1.bf16.msra.mxu0 0
  %63 = vmatprep.subr.bf16.mxu0 0
  %64 = vmatpush1.bf16.msra.mxu0 0
  %65 = vmatprep.subr.bf16.mxu0 0
  %66 = vmatpush1.bf16.msra.mxu0 0
  %67 = vmatprep.mubr.bf16.mxu0 0
  %68 = vmatmul.mubr.bf16.gmra.mrb[0].mxu0 %v33
  %v69 = vpop.f32.mrb[0].mxu0
  %v70 = vadd.f32 0.0, %v69
  %v71 = vpop.f32.mrb[0].mxu0
  %v72 = vpop.f32.mrb[0].mxu0
  %v73 = vadd.f32 0.0, %v72
  %v74 = vpop.f32.mrb[0].mxu0
  %75 = vdwg.mxu0
  %v76 = vpack.c.bf16 %v73, %v70
  %v78 = vunpack.c.l.b16 %v76
  %v79 = vunpack.c.h.b16 %v76
  %v80 = vpack.c.b16 %v78, %v78
  %v81 = vpack.c.b16 %v79, %v79
  %vm84 = vcmask 519168
  %85 = vst.msk [vmem:[%s2] sm:$0xf] %vm84, %v80
  %86 = vst.msk [vmem:[%s2 + $0x4] sm:$0xf] %vm84, %v81
  // Predicated region
  $region10: #{_lambda_.16} parent=0 // pred_check
    _
  $region11: #{_lambda_.16} parent=0 // pred_check_branch
    %88 = sbr.rel (0) target = $region13
  $region12: #{_lambda_.16} parent=0 // pred_region
    _
  $region13: #{_lambda_.16} parent=0 // pred_fallthru
    _
  // Predicated region
  $region14: #{_lambda_.16} parent=0 // pred_check
    _
  $region15: #{_lambda_.16} parent=0 // pred_check_branch
    %90 = sbr.rel (0) target = $region17
  $region16: #{_lambda_.16} parent=0 // pred_region
    _
  $region17: #{_lambda_.16} parent=0 // pred_fallthru
    _

// kernel: _lambda_.17
$region0: #{_lambda_.17}
  #allocation0 [shape = 'u32[]', space=smem, size = 0x4, offset = 0x4, fixed_abs, tag = 'smem constant byte address 0x4 - core index']
  #allocation1 [shape = 'u32[144,128]{1,0:T(1,128)}', space=vmem, size = 0x12000, scoped, tag = 'internal scratch']
  #allocation2 [shape = 'f32[8,8]{1,0:T(8,128)}', space=vmem, size = 0x1000, scoped, tag = 'scratch operand']
  #allocation3 [shape = 'f32[8,32]{1,0:T(8,128)}', space=vmem, size = 0x1000, scoped, tag = 'scratch operand']
  %s0 = inlined_call_operand.vmem [shape: bf16[2,4,8,8], index: 0, kind: input, shape index: {}]
  %s1 = inlined_call_operand.vmem [shape: bf16[2,4,8,8], index: 1, kind: input, shape index: {}]
  %s2 = inlined_call_operand.vmem [shape: bf16[2,4,8,8], index: 2, kind: input, shape index: {}]
  %s3 = inlined_call_operand.vmem [shape: f32[2,8,1], index: 3, kind: input, shape index: {}]
  %s4 = inlined_call_operand.vmem [shape: f32[2,1,8], index: 4, kind: input, shape index: {}]
  %s5 = inlined_call_operand.vmem [shape: bf16[4,8,32], index: 5, kind: input, shape index: {}]
  %s6 = inlined_call_operand.vmem [shape: f32[2,8,32], index: 6, kind: input, shape index: {}]
  %s7 = inlined_call_operand.vmem [shape: f32[2,8,32], index: 7, kind: output, shape index: {}]
  %s8 = sld [smem:[#allocation0]]
  $region69: #{_lambda_.17} parent=0
    _
  %s10 = ssub.s32 1, %s8
  %s11 = scalar_select 0, %s10, %s8
  loop: start=0, step=1, limit=10
  $region2: #{_lambda_.17} parent=0 // loop_pre_header
    _
  $region3: #{_lambda_.17} parent=0 // loop_header
    %s13 = sphi 0, %s17
    %p14 = scmp.ge.s32.totalorder %s13, 10
    %s20 = sphi 0, %s32
    %s21 = sphi 0, %s28
    %s22 = sphi 0, %s20
    %s23 = sphi 0, %s21
    %s24 = sphi 0, %s22
    %s25 = sphi 0, %s23
    %s37 = sphi 0, %s39
    %s40 = sphi 0, %s37
    %s41 = sphi 0, %s40
    %s57 = sphi 0, %s41
    %s65 = sphi 0, %s67
    %s68 = sphi 0, %s65
    %s69 = sphi 0, %s68
    %s85 = sphi 0, %s69
    %s93 = sphi 0, %s95
    %s96 = sphi 0, %s93
    %s97 = sphi 0, %s96
    %s113 = sphi 0, %s97
    %s119 = sphi 0, %s121
    %s122 = sphi 0, %s119
    %s123 = sphi 0, %s122
    %s139 = sphi 0, %s123
    %s145 = sphi 0, %s147
    %s148 = sphi 0, %s145
    %s149 = sphi 0, %s148
    %s165 = sphi 0, %s149
    %s171 = sphi 0, %s173
    %s174 = sphi 0, %s171
    %s175 = sphi 0, %s174
    %s191 = sphi 0, %s175
    %s197 = sphi 0, %s199
    %s200 = sphi 0, %s197
    %s201 = sphi 0, %s200
    %s217 = sphi 0, %s201
    %s223 = sphi 0, %s225
    %s226 = sphi 0, %s223
    %s227 = sphi 0, %s226
    %s243 = sphi 0, %s227
  $region4: #{_lambda_.17} parent=0 // loop_header_branch
    %16 = sbr.rel (%p14) target = $region8
  $region5: #{_lambda_.17} parent=0 // loop_body
    %s18 = ssub.s32 %s13, 1
    %s19 = ssub.s32 %s13, 2
    %s26 = sadd.s32 1, %s21
    %p27 = scmp.ge.s32.totalorder %s26, 4
    %s28 = scalar_select %p27, 0, %s26
    %s29 = sadd.s32 1, %s20
    %s30 = scalar_select %p27, %s29, %s20
    %p31 = scmp.ge.s32.totalorder %s30, 2
    %s32 = scalar_select %p31, 0, %s30
    %s33 = ssub.s32 %s20, %s32
    %s34 = ssub.s32 %s21, %s28
    %s35 = sor.u32 %s33, %s34
    %p36 = scmp.eq.s32.totalorder %s35, 0
    %s38 = sadd.s32 %s37, 1
    %s39 = scalar_select %p36, %s37, %s38
    %p42 = pneg %p36
    %p43 = scmp.eq.s32.totalorder %s13, 7
    %p44 = por %p42, %p43
    %p45 = scmp.ne.s32.totalorder %s37, %s40
    %p46 = scmp.eq.s32.totalorder %s13, 0
    %p47 = por %p45, %p46
    %p48 = scmp.ne.s32.totalorder %s37, %s40
    %p49 = scmp.eq.s32.totalorder %s18, 7
    %p50 = por %p48, %p49
    %p51 = scmp.ne.s32.totalorder %s40, %s41
    %p52 = scmp.eq.s32.totalorder %s18, 0
    %p53 = por %p51, %p52
    %p54 = scmp.ne.s32.totalorder %s40, %s41
    %p55 = scmp.eq.s32.totalorder %s19, 7
    %p56 = por %p54, %p55
    %p58 = scmp.ne.s32.totalorder %s41, %s57
    %p59 = scmp.eq.s32.totalorder %s19, 0
    %p60 = por %p58, %p59
    %s61 = ssub.s32 %s20, %s32
    %s62 = ssub.s32 %s21, %s28
    %s63 = sor.u32 %s61, %s62
    %p64 = scmp.eq.s32.totalorder %s63, 0
    %s66 = sadd.s32 %s65, 1
    %s67 = scalar_select %p64, %s65, %s66
    %p70 = pneg %p64
    %p71 = scmp.eq.s32.totalorder %s13, 7
    %p72 = por %p70, %p71
    %p73 = scmp.ne.s32.totalorder %s65, %s68
    %p74 = scmp.eq.s32.totalorder %s13, 0
    %p75 = por %p73, %p74
    %p76 = scmp.ne.s32.totalorder %s65, %s68
    %p77 = scmp.eq.s32.totalorder %s18, 7
    %p78 = por %p76, %p77
    %p79 = scmp.ne.s32.totalorder %s68, %s69
    %p80 = scmp.eq.s32.totalorder %s18, 0
    %p81 = por %p79, %p80
    %p82 = scmp.ne.s32.totalorder %s68, %s69
    %p83 = scmp.eq.s32.totalorder %s19, 7
    %p84 = por %p82, %p83
    %p86 = scmp.ne.s32.totalorder %s69, %s85
    %p87 = scmp.eq.s32.totalorder %s19, 0
    %p88 = por %p86, %p87
    %s89 = ssub.s32 %s20, %s32
    %s90 = ssub.s32 %s21, %s28
    %s91 = sor.u32 %s89, %s90
    %p92 = scmp.eq.s32.totalorder %s91, 0
    %s94 = sadd.s32 %s93, 1
    %s95 = scalar_select %p92, %s93, %s94
    %p98 = pneg %p92
    %p99 = scmp.eq.s32.totalorder %s13, 7
    %p100 = por %p98, %p99
    %p101 = scmp.ne.s32.totalorder %s93, %s96
    %p102 = scmp.eq.s32.totalorder %s13, 0
    %p103 = por %p101, %p102
    %p104 = scmp.ne.s32.totalorder %s93, %s96
    %p105 = scmp.eq.s32.totalorder %s18, 7
    %p106 = por %p104, %p105
    %p107 = scmp.ne.s32.totalorder %s96, %s97
    %p108 = scmp.eq.s32.totalorder %s18, 0
    %p109 = por %p107, %p108
    %p110 = scmp.ne.s32.totalorder %s96, %s97
    %p111 = scmp.eq.s32.totalorder %s19, 7
    %p112 = por %p110, %p111
    %p114 = scmp.ne.s32.totalorder %s97, %s113
    %p115 = scmp.eq.s32.totalorder %s19, 0
    %p116 = por %p114, %p115
    %s117 = ssub.s32 %s20, %s32
    %p118 = scmp.eq.s32.totalorder %s117, 0
    %s120 = sadd.s32 %s119, 1
    %s121 = scalar_select %p118, %s119, %s120
    %p124 = pneg %p118
    %p125 = scmp.eq.s32.totalorder %s13, 7
    %p126 = por %p124, %p125
    %p127 = scmp.ne.s32.totalorder %s119, %s122
    %p128 = scmp.eq.s32.totalorder %s13, 0
    %p129 = por %p127, %p128
    %p130 = scmp.ne.s32.totalorder %s119, %s122
    %p131 = scmp.eq.s32.totalorder %s18, 7
    %p132 = por %p130, %p131
    %p133 = scmp.ne.s32.totalorder %s122, %s123
    %p134 = scmp.eq.s32.totalorder %s18, 0
    %p135 = por %p133, %p134
    %p136 = scmp.ne.s32.totalorder %s122, %s123
    %p137 = scmp.eq.s32.totalorder %s19, 7
    %p138 = por %p136, %p137
    %p140 = scmp.ne.s32.totalorder %s123, %s139
    %p141 = scmp.eq.s32.totalorder %s19, 0
    %p142 = por %p140, %p141
    %s143 = ssub.s32 %s20, %s32
    %p144 = scmp.eq.s32.totalorder %s143, 0
    %s146 = sadd.s32 %s145, 1
    %s147 = scalar_select %p144, %s145, %s146
    %p150 = pneg %p144
    %p151 = scmp.eq.s32.totalorder %s13, 7
    %p152 = por %p150, %p151
    %p153 = scmp.ne.s32.totalorder %s145, %s148
    %p154 = scmp.eq.s32.totalorder %s13, 0
    %p155 = por %p153, %p154
    %p156 = scmp.ne.s32.totalorder %s145, %s148
    %p157 = scmp.eq.s32.totalorder %s18, 7
    %p158 = por %p156, %p157
    %p159 = scmp.ne.s32.totalorder %s148, %s149
    %p160 = scmp.eq.s32.totalorder %s18, 0
    %p161 = por %p159, %p160
    %p162 = scmp.ne.s32.totalorder %s148, %s149
    %p163 = scmp.eq.s32.totalorder %s19, 7
    %p164 = por %p162, %p163
    %p166 = scmp.ne.s32.totalorder %s149, %s165
    %p167 = scmp.eq.s32.totalorder %s19, 0
    %p168 = por %p166, %p167
    %s169 = ssub.s32 %s21, %s28
    %p170 = scmp.eq.s32.totalorder %s169, 0
    %s172 = sadd.s32 %s171, 1
    %s173 = scalar_select %p170, %s171, %s172
    %p176 = pneg %p170
    %p177 = scmp.eq.s32.totalorder %s13, 7
    %p178 = por %p176, %p177
    %p179 = scmp.ne.s32.totalorder %s171, %s174
    %p180 = scmp.eq.s32.totalorder %s13, 0
    %p181 = por %p179, %p180
    %p182 = scmp.ne.s32.totalorder %s171, %s174
    %p183 = scmp.eq.s32.totalorder %s18, 7
    %p184 = por %p182, %p183
    %p185 = scmp.ne.s32.totalorder %s174, %s175
    %p186 = scmp.eq.s32.totalorder %s18, 0
    %p187 = por %p185, %p186
    %p188 = scmp.ne.s32.totalorder %s174, %s175
    %p189 = scmp.eq.s32.totalorder %s19, 7
    %p190 = por %p188, %p189
    %p192 = scmp.ne.s32.totalorder %s175, %s191
    %p193 = scmp.eq.s32.totalorder %s19, 0
    %p194 = por %p192, %p193
    %s195 = ssub.s32 %s20, %s32
    %p196 = scmp.eq.s32.totalorder %s195, 0
    %s198 = sadd.s32 %s197, 1
    %s199 = scalar_select %p196, %s197, %s198
    %p202 = pneg %p196
    %p203 = scmp.eq.s32.totalorder %s13, 7
    %p204 = por %p202, %p203
    %p205 = scmp.ne.s32.totalorder %s197, %s200
    %p206 = scmp.eq.s32.totalorder %s13, 0
    %p207 = por %p205, %p206
    %p208 = scmp.ne.s32.totalorder %s197, %s200
    %p209 = scmp.eq.s32.totalorder %s18, 7
    %p210 = por %p208, %p209
    %p211 = scmp.ne.s32.totalorder %s200, %s201
    %p212 = scmp.eq.s32.totalorder %s18, 0
    %p213 = por %p211, %p212
    %p214 = scmp.ne.s32.totalorder %s200, %s201
    %p215 = scmp.eq.s32.totalorder %s19, 7
    %p216 = por %p214, %p215
    %p218 = scmp.ne.s32.totalorder %s201, %s217
    %p219 = scmp.eq.s32.totalorder %s19, 0
    %p220 = por %p218, %p219
    %s221 = ssub.s32 %s20, %s32
    %p222 = scmp.eq.s32.totalorder %s221, 0
    %s224 = sadd.s32 %s223, 1
    %s225 = scalar_select %p222, %s223, %s224
    %p228 = pneg %p222
    %p229 = scmp.eq.s32.totalorder %s13, 7
    %p230 = por %p228, %p229
    %p231 = scmp.ne.s32.totalorder %s223, %s226
    %p232 = scmp.eq.s32.totalorder %s13, 0
    %p233 = por %p231, %p232
    %p234 = scmp.ne.s32.totalorder %s223, %s226
    %p235 = scmp.eq.s32.totalorder %s18, 7
    %p236 = por %p234, %p235
    %p237 = scmp.ne.s32.totalorder %s226, %s227
    %p238 = scmp.eq.s32.totalorder %s18, 0
    %p239 = por %p237, %p238
    %p240 = scmp.ne.s32.totalorder %s226, %s227
    %p241 = scmp.eq.s32.totalorder %s19, 7
    %p242 = por %p240, %p241
    %p244 = scmp.ne.s32.totalorder %s227, %s243
    %p245 = scmp.eq.s32.totalorder %s19, 0
    %p246 = por %p244, %p245
    %p247 = scmp.le.s32.totalorder 1, %s13
    %p248 = scmp.lt.s32.totalorder %s13, 9
    %p249 = pnand %p247, %p248
    %p250 = pneg %p249
    // Predicated region
    $region9: #{_lambda_.17} parent=5 // pred_check
      _
    $region10: #{_lambda_.17} parent=5 // pred_check_branch
      %252 = sbr.rel (%p249) target = $region12
    $region11: #{_lambda_.17} parent=5 // pred_region
      %s253 = ssub.s32 %s13, 1
    $region12: #{_lambda_.17} parent=5 // pred_fallthru
      _
    %p254 = scmp.lt.s32.totalorder %s13, 8
    // Predicated region
    $region13: #{_lambda_.17} parent=5 // pred_check
      %p255 = pneg %p254
    $region14: #{_lambda_.17} parent=5 // pred_check_branch
      %257 = sbr.rel (%p255) target = $region16
    $region15: #{_lambda_.17} parent=5 // pred_region
      // Predicated region
      $region17: #{_lambda_.17} parent=15 // pred_check
        %p258 = pneg %p47
      $region18: #{_lambda_.17} parent=15 // pred_check_branch
        %260 = sbr.rel (%p258) target = $region20
      $region19: #{_lambda_.17} parent=15 // pred_region
        %p261 = scmp.lt.s32.totalorder %s20, 1
        %s262 = scalar_select %p261, %s20, 1
        %p263 = scmp.lt.s32.totalorder %s21, 3
        %s264 = scalar_select %p263, %s21, 3
        %s265 = smul.addr %s262, 4
        %s266 = sadd.s32 %s264, %s265
        %s267 = smul.addr %s266, 4
        %s268 = scalar_lea.vmem %s0, %s267
      $region20: #{_lambda_.17} parent=15 // pred_fallthru
        _
      // Predicated region
      $region21: #{_lambda_.17} parent=15 // pred_check
        %p269 = pneg %p75
      $region22: #{_lambda_.17} parent=15 // pred_check_branch
        %271 = sbr.rel (%p269) target = $region24
      $region23: #{_lambda_.17} parent=15 // pred_region
        %p272 = scmp.lt.s32.totalorder %s20, 1
        %s273 = scalar_select %p272, %s20, 1
        %p274 = scmp.lt.s32.totalorder %s21, 3
        %s275 = scalar_select %p274, %s21, 3
        %s276 = smul.addr %s273, 4
        %s277 = sadd.s32 %s275, %s276
        %s278 = smul.addr %s277, 4
        %s279 = scalar_lea.vmem %s1, %s278
      $region24: #{_lambda_.17} parent=15 // pred_fallthru
        _
      // Predicated region
      $region25: #{_lambda_.17} parent=15 // pred_check
        %p280 = pneg %p103
      $region26: #{_lambda_.17} parent=15 // pred_check_branch
        %282 = sbr.rel (%p280) target = $region28
      $region27: #{_lambda_.17} parent=15 // pred_region
        %p283 = scmp.lt.s32.totalorder %s20, 1
        %s284 = scalar_select %p283, %s20, 1
        %p285 = scmp.lt.s32.totalorder %s21, 3
        %s286 = scalar_select %p285, %s21, 3
        %s287 = smul.addr %s284, 4
        %s288 = sadd.s32 %s286, %s287
        %s289 = smul.addr %s288, 4
        %s290 = scalar_lea.vmem %s2, %s289
      $region28: #{_lambda_.17} parent=15 // pred_fallthru
        _
      // Predicated region
      $region29: #{_lambda_.17} parent=15 // pred_check
        %p291 = pneg %p129
      $region30: #{_lambda_.17} parent=15 // pred_check_branch
        %293 = sbr.rel (%p291) target = $region32
      $region31: #{_lambda_.17} parent=15 // pred_region
        %p294 = scmp.lt.s32.totalorder %s20, 1
        %s295 = scalar_select %p294, %s20, 1
        %s296 = smul.addr %s295, 8
        %s297 = scalar_lea.vmem %s3, %s296
      $region32: #{_lambda_.17} parent=15 // pred_fallthru
        _
      // Predicated region
      $region33: #{_lambda_.17} parent=15 // pred_check
        %p298 = pneg %p155
      $region34: #{_lambda_.17} parent=15 // pred_check_branch
        %300 = sbr.rel (%p298) target = $region36
      $region35: #{_lambda_.17} parent=15 // pred_region
        %p301 = scmp.lt.s32.totalorder %s20, 1
        %s302 = scalar_select %p301, %s20, 1
        %s303 = scalar_lea.vmem %s4, %s302
      $region36: #{_lambda_.17} parent=15 // pred_fallthru
        _
      // Predicated region
      $region37: #{_lambda_.17} parent=15 // pred_check
        %p304 = pneg %p181
      $region38: #{_lambda_.17} parent=15 // pred_check_branch
        %306 = sbr.rel (%p304) target = $region40
      $region39: #{_lambda_.17} parent=15 // pred_region
        %p307 = scmp.lt.s32.totalorder %s21, 3
        %s308 = scalar_select %p307, %s21, 3
        %s309 = smul.addr %s308, 4
        %s310 = scalar_lea.vmem %s5, %s309
      $region40: #{_lambda_.17} parent=15 // pred_fallthru
        _
      // Predicated region
      $region41: #{_lambda_.17} parent=15 // pred_check
        %p311 = pneg %p207
      $region42: #{_lambda_.17} parent=15 // pred_check_branch
        %313 = sbr.rel (%p311) target = $region44
      $region43: #{_lambda_.17} parent=15 // pred_region
        %p314 = scmp.lt.s32.totalorder %s20, 1
        %s315 = scalar_select %p314, %s20, 1
        %s316 = smul.addr %s315, 8
        %s317 = scalar_lea.vmem %s6, %s316
      $region44: #{_lambda_.17} parent=15 // pred_fallthru
        _
    $region16: #{_lambda_.17} parent=5 // pred_fallthru
      _
    %p318 = scmp.le.s32.totalorder 1, %s13
    %p319 = scmp.lt.s32.totalorder %s13, 9
    %p320 = pnand %p318, %p319
    %p321 = pneg %p320
    // Predicated region
    $region45: #{_lambda_.17} parent=5 // pred_check
      _
    $region46: #{_lambda_.17} parent=5 // pred_check_branch
      %323 = sbr.rel (%p320) target = $region48
    $region47: #{_lambda_.17} parent=5 // pred_region
      %s324 = ssub.s32 %s13, 1
      %p325 = scmp.lt.s32.totalorder %s22, 1
      %s326 = scalar_select %p325, %s22, 1
      %p327 = scmp.lt.s32.totalorder %s23, 3
      %s328 = scalar_select %p327, %s23, 3
      %s329 = smul.addr %s326, 4
      %s330 = sadd.s32 %s328, %s329
      %s331 = smul.addr %s330, 4
      %s332 = scalar_lea.vmem %s0, %s331
      %p333 = pneg %p53
      %p334 = pneg %p50
      %p335 = scmp.lt.s32.totalorder %s22, 1
      %s336 = scalar_select %p335, %s22, 1
      %p337 = scmp.lt.s32.totalorder %s23, 3
      %s338 = scalar_select %p337, %s23, 3
      %s339 = smul.addr %s336, 4
      %s340 = sadd.s32 %s338, %s339
      %s341 = smul.addr %s340, 4
      %s342 = scalar_lea.vmem %s1, %s341
      %p343 = pneg %p81
      %p344 = pneg %p78
      %p345 = scmp.lt.s32.totalorder %s22, 1
      %s346 = scalar_select %p345, %s22, 1
      %p347 = scmp.lt.s32.totalorder %s23, 3
      %s348 = scalar_select %p347, %s23, 3
      %s349 = smul.addr %s346, 4
      %s350 = sadd.s32 %s348, %s349
      %s351 = smul.addr %s350, 4
      %s352 = scalar_lea.vmem %s2, %s351
      %p353 = pneg %p109
      %p354 = pneg %p106
      %p355 = scmp.lt.s32.totalorder %s22, 1
      %s356 = scalar_select %p355, %s22, 1
      %s357 = smul.addr %s356, 8
      %s358 = scalar_lea.vmem %s3, %s357
      %p359 = pneg %p135
      %p360 = pneg %p132
      %p361 = scmp.lt.s32.totalorder %s22, 1
      %s362 = scalar_select %p361, %s22, 1
      %s363 = scalar_lea.vmem %s4, %s362
      %p364 = pneg %p161
      %p365 = pneg %p158
      %p366 = scmp.lt.s32.totalorder %s23, 3
      %s367 = scalar_select %p366, %s23, 3
      %s368 = smul.addr %s367, 4
      %s369 = scalar_lea.vmem %s5, %s368
      %p370 = pneg %p187
      %p371 = pneg %p184
      %p372 = scmp.lt.s32.totalorder %s22, 1
      %s373 = scalar_select %p372, %s22, 1
      %s374 = smul.addr %s373, 8
      %s375 = scalar_lea.vmem %s6, %s374
      %p376 = pneg %p213
      %p377 = pneg %p210
      %p378 = pneg %p239
      %p379 = pneg %p236
      %p380 = scmp.lt.s32.totalorder %s22, 1
      %s381 = scalar_select %p380, %s22, 1
      %s382 = smul.addr %s381, 8
      %s383 = scalar_lea.vmem %s7, %s382
      %p384 = scmp.lt.s32.totalorder %s22, 1
      %s385 = scalar_select %p384, %s22, 1
      %p386 = scmp.lt.s32.totalorder %s23, 3
      %s387 = scalar_select %p386, %s23, 3
      %s388 = smul.addr %s385, 4
      %s389 = sadd.s32 %s387, %s388
      %s390 = smul.addr %s389, 4
      %s391 = scalar_lea.vmem %s0, %s390
      %p392 = scmp.lt.s32.totalorder %s22, 1
      %s393 = scalar_select %p392, %s22, 1
      %p394 = scmp.lt.s32.totalorder %s23, 3
      %s395 = scalar_select %p394, %s23, 3
      %s396 = smul.addr %s393, 4
      %s397 = sadd.s32 %s395, %s396
      %s398 = smul.addr %s397, 4
      %s399 = scalar_lea.vmem %s1, %s398
      %p400 = scmp.lt.s32.totalorder %s22, 1
      %s401 = scalar_select %p400, %s22, 1
      %p402 = scmp.lt.s32.totalorder %s23, 3
      %s403 = scalar_select %p402, %s23, 3
      %s404 = smul.addr %s401, 4
      %s405 = sadd.s32 %s403, %s404
      %s406 = smul.addr %s405, 4
      %s407 = scalar_lea.vmem %s2, %s406
      %p408 = scmp.lt.s32.totalorder %s22, 1
      %s409 = scalar_select %p408, %s22, 1
      %s410 = smul.addr %s409, 8
      %s411 = scalar_lea.vmem %s3, %s410
      %p412 = scmp.lt.s32.totalorder %s22, 1
      %s413 = scalar_select %p412, %s22, 1
      %s414 = scalar_lea.vmem %s4, %s413
      %p415 = scmp.lt.s32.totalorder %s23, 3
      %s416 = scalar_select %p415, %s23, 3
      %s417 = smul.addr %s416, 4
      %s418 = scalar_lea.vmem %s5, %s417
      %p419 = scmp.lt.s32.totalorder %s22, 1
      %s420 = scalar_select %p419, %s22, 1
      %s421 = smul.addr %s420, 8
      %s422 = scalar_lea.vmem %s6, %s421
      %p423 = scmp.lt.s32.totalorder %s22, 1
      %s424 = scalar_select %p423, %s22, 1
      %s425 = smul.addr %s424, 8
      %s426 = scalar_lea.vmem %s7, %s425
      %p428 = scmp.eq.s32.totalorder %s23, 0
      // Predicated region
      $region49: #{_lambda_.17} parent=47 // pred_check
        %p429 = pneg %p428
      $region50: #{_lambda_.17} parent=47 // pred_check_branch
        %431 = sbr.rel (%p429) target = $region52
      $region51: #{_lambda_.17} parent=47 // pred_region
        %vm432 = vcmask 261120
        %433 = vst.msk [vmem:[#allocation3] sm:$0xff] %vm432, 0.0
        %v434 = vld [vmem:[%s411] sm:$0xff]
        %v435 = vld [vmem:[%s414] sm:$0x1]
        %vm436 = vcmp.gt.f32.partialorder %v434, 0.5
        %vm437 = vcmp.gt.f32.partialorder %v435, 0.5
        %v438 = vsel %vm436, 1, 0
        %439 = vset.pattern.permute.xlu0 0
        %440 = vperm.xlu0 %439, %v438
        %v441 = vpop.permute.xlu0 %440
        %vm442 = vcmp.eq.s32.totalorder %v441, 1
        %v443 = vsel %vm437, 1, 0
        %v444 = vlaneseq
        %v445 = vshrl.u32 %v444, 7
        %v446 = vsub.s32 0, %v445
        %v447 = vrot.slane %v443, %v446
        %vm448 = vcmp.eq.s32.totalorder %v447, 1
        %vm449 = vmand %vm442, %vm448
        %v450 = vsel %vm449, 0.0, -1e+10
        %vm451 = vcmask 64512
        %452 = vst.msk [vmem:[#allocation2] sm:$0xff] %vm451, %v450
      $region52: #{_lambda_.17} parent=47 // pred_fallthru
        _
      %v453 = vld [vmem:[%s391] sm:$0xf]
      %v454 = vunpack.c.l.bf16 %v453
      %v455 = vmul.f32 %v454, 0.35355338
      %v456 = vpack.c.bf16 %v455, %v455
      %v457 = vld [vmem:[%s399] sm:$0xf]
      %v458 = vld [vmem:[%s407] sm:$0xf]
      %v459 = vld [vmem:[#allocation2] sm:$0xff]
      %vm460 = vcmask 64512
      %v462 = vsel %vm460, %v456, 0
      %v465 = vsel %vm460, %v457, 0
      %467 = vmatprep.subr.bf16.mxu0 0
      %468 = vmatpush1.bf16.xpose.msra.mxu0 %v465
      %469 = vmatprep.subr.bf16.mxu0 0
      %470 = vmatpush1.bf16.xpose.msra.mxu0 0
      %471 = vmatprep.subr.bf16.mxu0 0
      %472 = vmatpush1.bf16.xpose.msra.mxu0 0
      %473 = vmatprep.subr.bf16.mxu0 0
      %474 = vmatpush1.bf16.xpose.msra.mxu0 0
      %475 = vmatprep.subr.bf16.mxu0 0
      %476 = vmatpush1.bf16.xpose.msra.mxu0 0
      %477 = vmatprep.subr.bf16.mxu0 0
      %478 = vmatpush1.bf16.xpose.msra.mxu0 0
      %479 = vmatprep.subr.bf16.mxu0 0
      %480 = vmatpush1.bf16.xpose.msra.mxu0 0
      %481 = vmatprep.subr.bf16.mxu0 0
      %482 = vmatpush1.bf16.xpose.msra.mxu0 0
      %483 = vmatprep.subr.bf16.mxu0 0
      %484 = vmatpush1.bf16.xpose.msra.mxu0 0
      %485 = vmatprep.subr.bf16.mxu0 0
      %486 = vmatpush1.bf16.xpose.msra.mxu0 0
      %487 = vmatprep.subr.bf16.mxu0 0
      %488 = vmatpush1.bf16.xpose.msra.mxu0 0
      %489 = vmatprep.subr.bf16.mxu0 0
      %490 = vmatpush1.bf16.xpose.msra.mxu0 0
      %491 = vmatprep.subr.bf16.mxu0 0
      %492 = vmatpush1.bf16.xpose.msra.mxu0 0
      %493 = vmatprep.subr.bf16.mxu0 0
      %494 = vmatpush1.bf16.xpose.msra.mxu0 0
      %495 = vmatprep.subr.bf16.mxu0 0
      %496 = vmatpush1.bf16.xpose.msra.mxu0 0
      %497 = vmatprep.subr.bf16.mxu0 0
      %498 = vmatpush1.bf16.xpose.msra.mxu0 0
      %499 = vmatprep.mubr.bf16.mxu0 0
      %500 = vmatmul.mubr.bf16.gmra.mrb[0].mxu0 %v462
      %v501 = vpop.f32.mrb[0].mxu0
      %v502 = vadd.f32 %v459, %v501
      %v503 = vpop.f32.mrb[0].mxu0
      %v504 = vpop.f32.mrb[0].mxu0
      %v505 = vpop.f32.mrb[0].mxu0
      %506 = vdwg.mxu0
      %v507 = vsel %vm460, %v502, -inf
      %508 = vmax.xlane.f32.xlu0 %v507
      %v509 = vpop.xlane.xlu0 %508
      %v510 = vsub.f32 %v502, %v509
      %v511 = vmul.f32 %v510, 1.442695
      %v512 = vpow.pop %v511
      %v513 = vsel %vm460, %v512, 0.0
      %514 = vadd.xlane.f32.xlu0 %v513
      %v515 = vpop.xlane.xlu0 %514
      %v516 = vrcp.pop %v515
      %v517 = vmul.f32 %v512, %v516
      %v518 = vpack.c.bf16 %v517, %v517
      %v520 = vsel %vm460, %v518, 0
      %vm522 = vcmask 1043456
      %v524 = vsel %vm522, %v458, 0
      %526 = vmatprep.subr.bf16.mxu0 0
      %527 = vmatpush1.bf16.msra.mxu0 %v524
      %528 = vmatprep.subr.bf16.mxu0 0
      %529 = vmatpush1.bf16.msra.mxu0 0
      %530 = vmatprep.subr.bf16.mxu0 0
      %531 = vmatpush1.bf16.msra.mxu0 0
      %532 = vmatprep.subr.bf16.mxu0 0
      %533 = vmatpush1.bf16.msra.mxu0 0
      %534 = vmatprep.subr.bf16.mxu0 0
      %535 = vmatpush1.bf16.msra.mxu0 0
      %536 = vmatprep.subr.bf16.mxu0 0
      %537 = vmatpush1.bf16.msra.mxu0 0
      %538 = vmatprep.subr.bf16.mxu0 0
      %539 = vmatpush1.bf16.msra.mxu0 0
      %540 = vmatprep.subr.bf16.mxu0 0
      %541 = vmatpush1.bf16.msra.mxu0 0
      %542 = vmatprep.subr.bf16.mxu0 0
      %543 = vmatpush1.bf16.msra.mxu0 0
      %544 = vmatprep.subr.bf16.mxu0 0
      %545 = vmatpush1.bf16.msra.mxu0 0
      %546 = vmatprep.subr.bf16.mxu0 0
      %547 = vmatpush1.bf16.msra.mxu0 0
      %548 = vmatprep.subr.bf16.mxu0 0
      %549 = vmatpush1.bf16.msra.mxu0 0
      %550 = vmatprep.subr.bf16.mxu0 0
      %551 = vmatpush1.bf16.msra.mxu0 0
      %552 = vmatprep.subr.bf16.mxu0 0
      %553 = vmatpush1.bf16.msra.mxu0 0
      %554 = vmatprep.subr.bf16.mxu0 0
      %555 = vmatpush1.bf16.msra.mxu0 0
      %556 = vmatprep.subr.bf16.mxu0 0
      %557 = vmatpush1.bf16.msra.mxu0 0
      %558 = vmatprep.mubr.bf16.mxu0 0
      %559 = vmatmul.mubr.bf16.gmra.mrb[0].mxu0 %v520
      %v560 = vpop.f32.mrb[0].mxu0
      %v561 = vadd.f32 0.0, %v560
      %v562 = vpop.f32.mrb[0].mxu0
      %v563 = vpop.f32.mrb[0].mxu0
      %v564 = vpop.f32.mrb[0].mxu0
      %565 = vdwg.mxu0
      %v566 = vld [vmem:[#allocation3] sm:$0xff]
      %v567 = vpack.c.bf16 %v561, %v561
      %v568 = vld [vmem:[%s418] sm:$0xf]
      %v570 = vsel %vm460, %v567, 0
      %v573 = vsel %vm522, %v568, 0
      %575 = vmatprep.subr.bf16.mxu0 0
      %576 = vmatpush1.bf16.msra.mxu0 %v573
      %577 = vmatprep.subr.bf16.mxu0 0
      %578 = vmatpush1.bf16.msra.mxu0 0
      %579 = vmatprep.subr.bf16.mxu0 0
      %580 = vmatpush1.bf16.msra.mxu0 0
      %581 = vmatprep.subr.bf16.mxu0 0
      %582 = vmatpush1.bf16.msra.mxu0 0
      %583 = vmatprep.subr.bf16.mxu0 0
      %584 = vmatpush1.bf16.msra.mxu0 0
      %585 = vmatprep.subr.bf16.mxu0 0
      %586 = vmatpush1.bf16.msra.mxu0 0
      %587 = vmatprep.subr.bf16.mxu0 0
      %588 = vmatpush1.bf16.msra.mxu0 0
      %589 = vmatprep.subr.bf16.mxu0 0
      %590 = vmatpush1.bf16.msra.mxu0 0
      %591 = vmatprep.subr.bf16.mxu0 0
      %592 = vmatpush1.bf16.msra.mxu0 0
      %593 = vmatprep.subr.bf16.mxu0 0
      %594 = vmatpush1.bf16.msra.mxu0 0
      %595 = vmatprep.subr.bf16.mxu0 0
      %596 = vmatpush1.bf16.msra.mxu0 0
      %597 = vmatprep.subr.bf16.mxu0 0
      %598 = vmatpush1.bf16.msra.mxu0 0
      %599 = vmatprep.subr.bf16.mxu0 0
      %600 = vmatpush1.bf16.msra.mxu0 0
      %601 = vmatprep.subr.bf16.mxu0 0
      %602 = vmatpush1.bf16.msra.mxu0 0
      %603 = vmatprep.subr.bf16.mxu0 0
      %604 = vmatpush1.bf16.msra.mxu0 0
      %605 = vmatprep.subr.bf16.mxu0 0
      %606 = vmatpush1.bf16.msra.mxu0 0
      %607 = vmatprep.mubr.bf16.mxu0 0
      %608 = vmatmul.mubr.bf16.gmra.mrb[0].mxu0 %v570
      %v609 = vpop.f32.mrb[0].mxu0
      %v610 = vadd.f32 0.0, %v609
      %v611 = vpop.f32.mrb[0].mxu0
      %v612 = vpop.f32.mrb[0].mxu0
      %v613 = vpop.f32.mrb[0].mxu0
      %614 = vdwg.mxu0
      %v615 = vadd.f32 %v566, %v610
      %vm616 = vcmask 261120
      %617 = vst.msk [vmem:[#allocation3] sm:$0xff] %vm616, %v615
      %p618 = scmp.eq.s32.totalorder %s23, 3
      // Predicated region
      $region53: #{_lambda_.17} parent=47 // pred_check
        %p619 = pneg %p618
      $region54: #{_lambda_.17} parent=47 // pred_check_branch
        %621 = sbr.rel (%p619) target = $region56
      $region55: #{_lambda_.17} parent=47 // pred_region
        %v622 = vld [vmem:[#allocation3] sm:$0xff]
        %v623 = vld [vmem:[%s422] sm:$0xff]
        %v624 = vadd.f32 %v622, %v623
        %625 = vst.msk [vmem:[%s426] sm:$0xff] %vm616, %v624
      $region56: #{_lambda_.17} parent=47 // pred_fallthru
        _
      %p626 = scmp.lt.s32.totalorder %s22, 1
      %s627 = scalar_select %p626, %s22, 1
      %s628 = smul.addr %s627, 8
      %s629 = scalar_lea.vmem %s7, %s628
      // Predicated region
      $region57: #{_lambda_.17} parent=47 // pred_check
        %p630 = pneg %p236
      $region58: #{_lambda_.17} parent=47 // pred_check_branch
        %632 = sbr.rel (%p630) target = $region60
      $region59: #{_lambda_.17} parent=47 // pred_region
        _
      $region60: #{_lambda_.17} parent=47 // pred_fallthru
        _
    $region48: #{_lambda_.17} parent=5 // pred_fallthru
      _
    %p633 = scmp.le.s32.totalorder 2, %s13
    // Predicated region
    $region61: #{_lambda_.17} parent=5 // pred_check
      %p634 = pneg %p633
    $region62: #{_lambda_.17} parent=5 // pred_check_branch
      %636 = sbr.rel (%p634) target = $region64
    $region63: #{_lambda_.17} parent=5 // pred_region
      %s637 = ssub.s32 %s13, 2
      // Predicated region
      $region65: #{_lambda_.17} parent=63 // pred_check
        %p638 = pneg %p242
      $region66: #{_lambda_.17} parent=63 // pred_check_branch
        %640 = sbr.rel (%p638) target = $region68
      $region67: #{_lambda_.17} parent=63 // pred_region
        %p641 = scmp.lt.s32.totalorder %s24, 1
        %s642 = scalar_select %p641, %s24, 1
        %s643 = smul.addr %s642, 8
        %s644 = scalar_lea.vmem %s7, %s643
      $region68: #{_lambda_.17} parent=63 // pred_fallthru
        _
    $region64: #{_lambda_.17} parent=5 // pred_fallthru
      _
  $region6: #{_lambda_.17} parent=0 // loop_footer
    %s17 = sadd.s32 1, %s13
  $region7: #{_lambda_.17} parent=0 // loop_footer_branch
    %12 = sbr.rel target = $region3
  $region8: #{_lambda_.17} parent=0 // loop_exit
    _

// kernel: _lambda_.25
$region0: #{_lambda_.25}
  #allocation0 [shape = 'u32[]', space=smem, size = 0x4, offset = 0x4, fixed_abs, tag = 'smem constant byte address 0x4 - core index']
  #allocation1 [shape = 'u32[144,128]{1,0:T(1,128)}', space=vmem, size = 0x12000, scoped, tag = 'internal scratch']
  #allocation2 [shape = 'bf16[16,32]{1,0:T(16,128)(2,1)}', space=vmem, size = 0x1000, scoped, tag = 'scratch operand']
  %s0 = inlined_call_operand.vmem [shape: f32[16,32], index: 0, kind: input, shape index: {}]
  %s1 = inlined_call_operand.vmem [shape: bf16[32,16], index: 1, kind: input, shape index: {}]
  %s2 = inlined_call_operand.vmem [shape: f32[1,32], index: 2, kind: input, shape index: {}]
  %s3 = inlined_call_operand.vmem [shape: f32[1,32], index: 3, kind: input, shape index: {}]
  %s4 = inlined_call_operand.hbm [shape: f32[16,16], index: 4, kind: output, shape index: {}]
  %s5 = sld [smem:[#allocation0]]
  $region30: #{_lambda_.25} parent=0
    _
  %s7 = ssub.s32 1, %s5
  %s8 = scalar_select 0, %s7, %s5
  $region1: #{_lambda_.25} parent=0
    #allocation3 [shape = 'u8[8192]{0}', space=vmem, size = 0x2000, scoped, tag = 'output window, operand 0, single buffered']
    #allocation4 [shape = 's32[1]{0}', space=sflag, size = 0x4, scoped, tag = 'scoped memory for _lambda_.25']
    %9 = vsyncpa [#allocation4], 0
    // Predicated region
    $region2: #{_lambda_.25} parent=1 // pred_check
      _
    $region3: #{_lambda_.25} parent=1 // pred_check_branch
      %11 = sbr.rel (0) target = $region5
    $region4: #{_lambda_.25} parent=1 // pred_region
      _
    $region5: #{_lambda_.25} parent=1 // pred_fallthru
      _
    // Predicated region
    $region6: #{_lambda_.25} parent=1 // pred_check
      _
    $region7: #{_lambda_.25} parent=1 // pred_check_branch
      %13 = sbr.rel (0) target = $region9
    $region8: #{_lambda_.25} parent=1 // pred_region
      _
    $region9: #{_lambda_.25} parent=1 // pred_fallthru
      _
    // Predicated region
    $region10: #{_lambda_.25} parent=1 // pred_check
      _
    $region11: #{_lambda_.25} parent=1 // pred_check_branch
      %15 = sbr.rel (0) target = $region13
    $region12: #{_lambda_.25} parent=1 // pred_region
      _
    $region13: #{_lambda_.25} parent=1 // pred_fallthru
      _
    // Predicated region
    $region14: #{_lambda_.25} parent=1 // pred_check
      _
    $region15: #{_lambda_.25} parent=1 // pred_check_branch
      %17 = sbr.rel (0) target = $region17
    $region16: #{_lambda_.25} parent=1 // pred_region
      _
    $region17: #{_lambda_.25} parent=1 // pred_fallthru
      _
    %p19 = scmp.eq.s32.totalorder 0, 0
    // Predicated region
    $region18: #{_lambda_.25} parent=1 // pred_check
      %p20 = pneg %p19
    $region19: #{_lambda_.25} parent=1 // pred_check_branch
      %22 = sbr.rel (%p20) target = $region21
    $region20: #{_lambda_.25} parent=1 // pred_region
      %v23 = vld [vmem:[%s0] sm:$0xff]
      %v24 = vld [vmem:[%s0 + $0x8] sm:$0xff]
      %vm25 = vcmask 261120
      %v26 = vsel %vm25, %v23, 0.0
      %27 = vadd.xlane.f32.xlu0 %v26
      %v28 = vpop.xlane.xlu0 %27
      %v29 = vsel %vm25, %v24, 0.0
      %30 = vadd.xlane.f32.xlu0 %v29
      %v31 = vpop.xlane.xlu0 %30
      %v32 = vrcp.pop 32.0
      %v33 = vmul.f32 %v28, %v32
      %v34 = vmul.f32 %v31, %v32
      %v35 = vsub.f32 %v23, %v33
      %v36 = vsub.f32 %v24, %v34
      %v37 = vmul.f32 %v35, %v35
      %v38 = vmul.f32 %v36, %v36
      %v39 = vsel %vm25, %v37, 0.0
      %40 = vadd.xlane.f32.xlu0 %v39
      %v41 = vpop.xlane.xlu0 %40
      %v42 = vsel %vm25, %v38, 0.0
      %43 = vadd.xlane.f32.xlu0 %v42
      %v44 = vpop.xlane.xlu0 %43
      %v45 = vmul.f32 %v41, %v32
      %v46 = vmul.f32 %v44, %v32
      %v47 = vadd.f32 %v45, 1e-06
      %v48 = vadd.f32 %v46, 1e-06
      %v49 = vrsqrt.pop %v47
      %v50 = vrsqrt.pop %v48
      %v51 = vmul.f32 %v35, %v49
      %v52 = vmul.f32 %v36, %v50
      %v53 = vld [vmem:[%s2] sm:$0x1]
      %v55 = vlaneseq
      %v56 = vshrl.u32 %v55, 7
      %v57 = vsub.s32 0, %v56
      %v58 = vrot.slane %v53, %v57
      %v60 = vmul.f32 %v51, %v58
      %v61 = vmul.f32 %v52, %v58
      %v62 = vld [vmem:[%s3] sm:$0x1]
      %v64 = vlaneseq
      %v65 = vshrl.u32 %v64, 7
      %v66 = vsub.s32 0, %v65
      %v67 = vrot.slane %v62, %v66
      %v69 = vadd.f32 %v60, %v67
      %v70 = vadd.f32 %v61, %v67
      %v71 = vpack.c.bf16 %v70, %v69
      %72 = vst.msk [vmem:[#allocation2] sm:$0xff] %vm25, %v71
    $region21: #{_lambda_.25} parent=1 // pred_fallthru
      _
    %v73 = vld [vmem:[#allocation2] sm:$0xff]
    %v74 = vld [vmem:[%s1] sm:$0xf]
    %v75 = vld [vmem:[%s1 + $0x4] sm:$0xf]
    %v76 = vld [vmem:[%s1 + $0x8] sm:$0xf]
    %v77 = vld [vmem:[%s1 + $0xc] sm:$0xf]
    %v82 = vunpack.c.l.b16 %v74
    %v83 = vunpack.c.l.b16 %v75
    %v84 = vunpack.c.l.b16 %v76
    %v85 = vunpack.c.l.b16 %v77
    %v86 = vpack.c.b16 %v83, %v82
    %v87 = vpack.c.b16 %v85, %v84
    %vm90 = vcmask 261120
    %v92 = vsel %vm90, %v73, 0
    %94 = vmatprep.subr.bf16.mxu0 0
    %95 = vmatpush1.bf16.msra.mxu0 %v86
    %96 = vmatprep.subr.bf16.mxu0 0
    %97 = vmatpush1.bf16.msra.mxu0 %v87
    %98 = vmatprep.subr.bf16.mxu0 0
    %99 = vmatpush1.bf16.msra.mxu0 0
    %100 = vmatprep.subr.bf16.mxu0 0
    %101 = vmatpush1.bf16.msra.mxu0 0
    %102 = vmatprep.subr.bf16.mxu0 0
    %103 = vmatpush1.bf16.msra.mxu0 0
    %104 = vmatprep.subr.bf16.mxu0 0
    %105 = vmatpush1.bf16.msra.mxu0 0
    %106 = vmatprep.subr.bf16.mxu0 0
    %107 = vmatpush1.bf16.msra.mxu0 0
    %108 = vmatprep.subr.bf16.mxu0 0
    %109 = vmatpush1.bf16.msra.mxu0 0
    %110 = vmatprep.subr.bf16.mxu0 0
    %111 = vmatpush1.bf16.msra.mxu0 0
    %112 = vmatprep.subr.bf16.mxu0 0
    %113 = vmatpush1.bf16.msra.mxu0 0
    %114 = vmatprep.subr.bf16.mxu0 0
    %115 = vmatpush1.bf16.msra.mxu0 0
    %116 = vmatprep.subr.bf16.mxu0 0
    %117 = vmatpush1.bf16.msra.mxu0 0
    %118 = vmatprep.subr.bf16.mxu0 0
    %119 = vmatpush1.bf16.msra.mxu0 0
    %120 = vmatprep.subr.bf16.mxu0 0
    %121 = vmatpush1.bf16.msra.mxu0 0
    %122 = vmatprep.subr.bf16.mxu0 0
    %123 = vmatpush1.bf16.msra.mxu0 0
    %124 = vmatprep.subr.bf16.mxu0 0
    %125 = vmatpush1.bf16.msra.mxu0 0
    %126 = vmatprep.mubr.bf16.mxu0 0
    %127 = vmatmul.mubr.bf16.gmra.mrb[0].mxu0 %v92
    %v128 = vpop.f32.mrb[0].mxu0
    %v129 = vadd.f32 0.0, %v128
    %v130 = vpop.f32.mrb[0].mxu0
    %v131 = vpop.f32.mrb[0].mxu0
    %v132 = vadd.f32 0.0, %v131
    %v133 = vpop.f32.mrb[0].mxu0
    %134 = vdwg.mxu0
    %v135 = vmul.f32 %v129, 0.17677669
    %v136 = vmul.f32 %v132, 0.17677669
    %vm137 = vcmask 130048
    %138 = vst.msk [vmem:[#allocation3] sm:$0xff] %vm137, %v135
    %139 = vst.msk [vmem:[#allocation3 + $0x8] sm:$0xff] %vm137, %v136
    // Predicated region
    $region22: #{_lambda_.25} parent=1 // pred_check
      _
    $region23: #{_lambda_.25} parent=1 // pred_check_branch
      %141 = sbr.rel (0) target = $region25
    $region24: #{_lambda_.25} parent=1 // pred_region
      %s143 = ssub.s32 256, 256
      %144 = vsyncadd [#allocation4], %s143
      %s145 = sshll.u32 [#allocation3], 4
      %s146 = int_to_ptr.vmem [resolvable:$true] %s145
      %151 = dma.vmem_to_hbm [thread:$0]  %s146, 256, %s4, [#allocation4], 128, 128, 8
    $region25: #{_lambda_.25} parent=1 // pred_fallthru
      _
    // Predicated region
    $region26: #{_lambda_.25} parent=1 // pred_check
      _
    $region27: #{_lambda_.25} parent=1 // pred_check_branch
      %153 = sbr.rel (0) target = $region29
    $region28: #{_lambda_.25} parent=1 // pred_region
      %154 = dma.done [#allocation4], 256
    $region29: #{_lambda_.25} parent=1 // pred_fallthru
      _
    %155 = vsyncpa [#allocation4], 1

// kernel: _lambda_.18
$region0: #{_lambda_.18}
  #allocation0 [shape = 'u32[]', space=smem, size = 0x4, offset = 0x4, fixed_abs, tag = 'smem constant byte address 0x4 - core index']
  #allocation1 [shape = 'u32[144,128]{1,0:T(1,128)}', space=vmem, size = 0x12000, scoped, tag = 'internal scratch']
  #allocation2 [shape = 'f32[16,32]{1,0:T(8,128)}', space=vmem, size = 0x2000, scoped, tag = 'scratch operand']
  #allocation3 [shape = 'bf16[16,32]{1,0:T(16,128)(2,1)}', space=vmem, size = 0x1000, scoped, tag = 'scratch operand']
  %s0 = inlined_call_operand.vmem [shape: f32[16,32], index: 0, kind: input, shape index: {}]
  %s1 = inlined_call_operand.vmem [shape: bf16[32,64], index: 1, kind: input, shape index: {}]
  %s2 = inlined_call_operand.vmem [shape: f32[1,64], index: 2, kind: input, shape index: {}]
  %s3 = inlined_call_operand.vmem [shape: bf16[64,32], index: 3, kind: input, shape index: {}]
  %s4 = inlined_call_operand.vmem [shape: f32[1,32], index: 4, kind: input, shape index: {}]
  %s5 = inlined_call_operand.vmem [shape: f32[1,32], index: 5, kind: input, shape index: {}]
  %s6 = inlined_call_operand.vmem [shape: f32[1,32], index: 6, kind: input, shape index: {}]
  %s7 = inlined_call_operand.vmem [shape: f32[16,32], index: 7, kind: output, shape index: {}]
  %s8 = sld [smem:[#allocation0]]
  $region46: #{_lambda_.18} parent=0
    _
  %s10 = ssub.s32 1, %s8
  %s11 = scalar_select 0, %s10, %s8
  // Predicated region
  $region2: #{_lambda_.18} parent=0 // pred_check
    _
  $region3: #{_lambda_.18} parent=0 // pred_check_branch
    %13 = sbr.rel (0) target = $region5
  $region4: #{_lambda_.18} parent=0 // pred_region
    _
  $region5: #{_lambda_.18} parent=0 // pred_fallthru
    _
  // Predicated region
  $region6: #{_lambda_.18} parent=0 // pred_check
    _
  $region7: #{_lambda_.18} parent=0 // pred_check_branch
    %15 = sbr.rel (0) target = $region9
  $region8: #{_lambda_.18} parent=0 // pred_region
    _
  $region9: #{_lambda_.18} parent=0 // pred_fallthru
    _
  // Predicated region
  $region10: #{_lambda_.18} parent=0 // pred_check
    _
  $region11: #{_lambda_.18} parent=0 // pred_check_branch
    %17 = sbr.rel (0) target = $region13
  $region12: #{_lambda_.18} parent=0 // pred_region
    _
  $region13: #{_lambda_.18} parent=0 // pred_fallthru
    _
  // Predicated region
  $region14: #{_lambda_.18} parent=0 // pred_check
    _
  $region15: #{_lambda_.18} parent=0 // pred_check_branch
    %19 = sbr.rel (0) target = $region17
  $region16: #{_lambda_.18} parent=0 // pred_region
    _
  $region17: #{_lambda_.18} parent=0 // pred_fallthru
    _
  // Predicated region
  $region18: #{_lambda_.18} parent=0 // pred_check
    _
  $region19: #{_lambda_.18} parent=0 // pred_check_branch
    %21 = sbr.rel (0) target = $region21
  $region20: #{_lambda_.18} parent=0 // pred_region
    _
  $region21: #{_lambda_.18} parent=0 // pred_fallthru
    _
  // Predicated region
  $region22: #{_lambda_.18} parent=0 // pred_check
    _
  $region23: #{_lambda_.18} parent=0 // pred_check_branch
    %23 = sbr.rel (0) target = $region25
  $region24: #{_lambda_.18} parent=0 // pred_region
    _
  $region25: #{_lambda_.18} parent=0 // pred_fallthru
    _
  // Predicated region
  $region26: #{_lambda_.18} parent=0 // pred_check
    _
  $region27: #{_lambda_.18} parent=0 // pred_check_branch
    %25 = sbr.rel (0) target = $region29
  $region28: #{_lambda_.18} parent=0 // pred_region
    _
  $region29: #{_lambda_.18} parent=0 // pred_fallthru
    _
  %p27 = scmp.eq.s32.totalorder 0, 0
  // Predicated region
  $region30: #{_lambda_.18} parent=0 // pred_check
    %p28 = pneg %p27
  $region31: #{_lambda_.18} parent=0 // pred_check_branch
    %30 = sbr.rel (%p28) target = $region33
  $region32: #{_lambda_.18} parent=0 // pred_region
    %vm31 = vcmask 261120
    %32 = vst.msk [vmem:[#allocation2] sm:$0xff] %vm31, 0.0
    %33 = vst.msk [vmem:[#allocation2 + $0x8] sm:$0xff] %vm31, 0.0
    %v34 = vld [vmem:[%s0] sm:$0xff]
    %v35 = vld [vmem:[%s0 + $0x8] sm:$0xff]
    %v36 = vsel %vm31, %v34, 0.0
    %37 = vadd.xlane.f32.xlu0 %v36
    %v38 = vpop.xlane.xlu0 %37
    %v39 = vsel %vm31, %v35, 0.0
    %40 = vadd.xlane.f32.xlu0 %v39
    %v41 = vpop.xlane.xlu0 %40
    %v42 = vrcp.pop 32.0
    %v43 = vmul.f32 %v38, %v42
    %v44 = vmul.f32 %v41, %v42
    %v45 = vsub.f32 %v34, %v43
    %v46 = vsub.f32 %v35, %v44
    %v47 = vmul.f32 %v45, %v45
    %v48 = vmul.f32 %v46, %v46
    %v49 = vsel %vm31, %v47, 0.0
    %50 = vadd.xlane.f32.xlu0 %v49
    %v51 = vpop.xlane.xlu0 %50
    %v52 = vsel %vm31, %v48, 0.0
    %53 = vadd.xlane.f32.xlu0 %v52
    %v54 = vpop.xlane.xlu0 %53
    %v55 = vmul.f32 %v51, %v42
    %v56 = vmul.f32 %v54, %v42
    %v57 = vadd.f32 %v55, 1e-06
    %v58 = vadd.f32 %v56, 1e-06
    %v59 = vrsqrt.pop %v57
    %v60 = vrsqrt.pop %v58
    %v61 = vmul.f32 %v45, %v59
    %v62 = vmul.f32 %v46, %v60
    %v63 = vld [vmem:[%s5] sm:$0x1]
    %v65 = vlaneseq
    %v66 = vshrl.u32 %v65, 7
    %v67 = vsub.s32 0, %v66
    %v68 = vrot.slane %v63, %v67
    %v70 = vmul.f32 %v61, %v68
    %v71 = vmul.f32 %v62, %v68
    %v72 = vld [vmem:[%s6] sm:$0x1]
    %v74 = vlaneseq
    %v75 = vshrl.u32 %v74, 7
    %v76 = vsub.s32 0, %v75
    %v77 = vrot.slane %v72, %v76
    %v79 = vadd.f32 %v70, %v77
    %v80 = vadd.f32 %v71, %v77
    %v81 = vpack.c.bf16 %v80, %v79
    %82 = vst.msk [vmem:[#allocation3] sm:$0xff] %vm31, %v81
  $region33: #{_lambda_.18} parent=0 // pred_fallthru
    _
  %v83 = vld [vmem:[#allocation3] sm:$0xff]
  %v84 = vld [vmem:[%s1] sm:$0xf]
  %v85 = vld [vmem:[%s1 + $0x4] sm:$0xf]
  %v86 = vld [vmem:[%s1 + $0x8] sm:$0xf]
  %v87 = vld [vmem:[%s1 + $0xc] sm:$0xf]
  %v88 = vld [vmem:[%s2] sm:$0x1]
  %v90 = vlaneseq
  %v91 = vshrl.u32 %v90, 7
  %v92 = vsub.s32 0, %v91
  %v93 = vrot.slane %v88, %v92
  %v99 = vunpack.c.l.b16 %v84
  %v100 = vunpack.c.l.b16 %v85
  %v101 = vunpack.c.l.b16 %v86
  %v102 = vunpack.c.l.b16 %v87
  %v103 = vpack.c.b16 %v100, %v99
  %v104 = vpack.c.b16 %v102, %v101
  %vm107 = vcmask 261120
  %v109 = vsel %vm107, %v83, 0
  %111 = vmatprep.subr.bf16.mxu0 0
  %112 = vmatpush1.bf16.msra.mxu0 %v103
  %113 = vmatprep.subr.bf16.mxu0 0
  %114 = vmatpush1.bf16.msra.mxu0 %v104
  %115 = vmatprep.subr.bf16.mxu0 0
  %116 = vmatpush1.bf16.msra.mxu0 0
  %117 = vmatprep.subr.bf16.mxu0 0
  %118 = vmatpush1.bf16.msra.mxu0 0
  %119 = vmatprep.subr.bf16.mxu0 0
  %120 = vmatpush1.bf16.msra.mxu0 0
  %121 = vmatprep.subr.bf16.mxu0 0
  %122 = vmatpush1.bf16.msra.mxu0 0
  %123 = vmatprep.subr.bf16.mxu0 0
  %124 = vmatpush1.bf16.msra.mxu0 0
  %125 = vmatprep.subr.bf16.mxu0 0
  %126 = vmatpush1.bf16.msra.mxu0 0
  %127 = vmatprep.subr.bf16.mxu0 0
  %128 = vmatpush1.bf16.msra.mxu0 0
  %129 = vmatprep.subr.bf16.mxu0 0
  %130 = vmatpush1.bf16.msra.mxu0 0
  %131 = vmatprep.subr.bf16.mxu0 0
  %132 = vmatpush1.bf16.msra.mxu0 0
  %133 = vmatprep.subr.bf16.mxu0 0
  %134 = vmatpush1.bf16.msra.mxu0 0
  %135 = vmatprep.subr.bf16.mxu0 0
  %136 = vmatpush1.bf16.msra.mxu0 0
  %137 = vmatprep.subr.bf16.mxu0 0
  %138 = vmatpush1.bf16.msra.mxu0 0
  %139 = vmatprep.subr.bf16.mxu0 0
  %140 = vmatpush1.bf16.msra.mxu0 0
  %141 = vmatprep.subr.bf16.mxu0 0
  %142 = vmatpush1.bf16.msra.mxu0 0
  %143 = vmatprep.mubr.bf16.mxu0 0
  %144 = vmatmul.mubr.bf16.gmra.mrb[0].mxu0 %v109
  %v145 = vpop.f32.mrb[0].mxu0
  %v146 = vadd.f32 %v93, %v145
  %v147 = vpop.f32.mrb[0].mxu0
  %v148 = vpop.f32.mrb[0].mxu0
  %v149 = vadd.f32 %v93, %v148
  %v150 = vpop.f32.mrb[0].mxu0
  %151 = vdwg.mxu0
  %v152 = vmax.f32 %v146, 0.0
  %v153 = vmax.f32 %v149, 0.0
  %v154 = vld [vmem:[#allocation2] sm:$0xff]
  %v155 = vld [vmem:[#allocation2 + $0x8] sm:$0xff]
  %v156 = vpack.c.bf16 %v153, %v152
  %v157 = vld [vmem:[%s3] sm:$0xf]
  %v158 = vld [vmem:[%s3 + $0x4] sm:$0xf]
  %v159 = vld [vmem:[%s3 + $0x8] sm:$0xf]
  %v160 = vld [vmem:[%s3 + $0xc] sm:$0xf]
  %v161 = vld [vmem:[%s3 + $0x10] sm:$0xf]
  %v162 = vld [vmem:[%s3 + $0x14] sm:$0xf]
  %v163 = vld [vmem:[%s3 + $0x18] sm:$0xf]
  %v164 = vld [vmem:[%s3 + $0x1c] sm:$0xf]
  %v173 = vunpack.c.l.b16 %v157
  %v174 = vunpack.c.l.b16 %v158
  %v175 = vunpack.c.l.b16 %v159
  %v176 = vunpack.c.l.b16 %v160
  %v177 = vunpack.c.l.b16 %v161
  %v178 = vunpack.c.l.b16 %v162
  %v179 = vunpack.c.l.b16 %v163
  %v180 = vunpack.c.l.b16 %v164
  %v181 = vpack.c.b16 %v174, %v173
  %v182 = vpack.c.b16 %v176, %v175
  %v183 = vpack.c.b16 %v178, %v177
  %v184 = vpack.c.b16 %v180, %v179
  %vm189 = vcmask 523264
  %v191 = vsel %vm189, %v156, 0
  %193 = vmatprep.subr.bf16.mxu0 0
  %194 = vmatpush1.bf16.msra.mxu0 %v181
  %195 = vmatprep.subr.bf16.mxu0 0
  %196 = vmatpush1.bf16.msra.mxu0 %v182
  %197 = vmatprep.subr.bf16.mxu0 0
  %198 = vmatpush1.bf16.msra.mxu0 %v183
  %199 = vmatprep.subr.bf16.mxu0 0
  %200 = vmatpush1.bf16.msra.mxu0 %v184
  %201 = vmatprep.subr.bf16.mxu0 0
  %202 = vmatpush1.bf16.msra.mxu0 0
  %203 = vmatprep.subr.bf16.mxu0 0
  %204 = vmatpush1.bf16.msra.mxu0 0
  %205 = vmatprep.subr.bf16.mxu0 0
  %206 = vmatpush1.bf16.msra.mxu0 0
  %207 = vmatprep.subr.bf16.mxu0 0
  %208 = vmatpush1.bf16.msra.mxu0 0
  %209 = vmatprep.subr.bf16.mxu0 0
  %210 = vmatpush1.bf16.msra.mxu0 0
  %211 = vmatprep.subr.bf16.mxu0 0
  %212 = vmatpush1.bf16.msra.mxu0 0
  %213 = vmatprep.subr.bf16.mxu0 0
  %214 = vmatpush1.bf16.msra.mxu0 0
  %215 = vmatprep.subr.bf16.mxu0 0
  %216 = vmatpush1.bf16.msra.mxu0 0
  %217 = vmatprep.subr.bf16.mxu0 0
  %218 = vmatpush1.bf16.msra.mxu0 0
  %219 = vmatprep.subr.bf16.mxu0 0
  %220 = vmatpush1.bf16.msra.mxu0 0
  %221 = vmatprep.subr.bf16.mxu0 0
  %222 = vmatpush1.bf16.msra.mxu0 0
  %223 = vmatprep.subr.bf16.mxu0 0
  %224 = vmatpush1.bf16.msra.mxu0 0
  %225 = vmatprep.mubr.bf16.mxu0 0
  %226 = vmatmul.mubr.bf16.gmra.mrb[0].mxu0 %v191
  %v227 = vpop.f32.mrb[0].mxu0
  %v228 = vadd.f32 0.0, %v227
  %v229 = vpop.f32.mrb[0].mxu0
  %v230 = vpop.f32.mrb[0].mxu0
  %v231 = vadd.f32 0.0, %v230
  %v232 = vpop.f32.mrb[0].mxu0
  %233 = vdwg.mxu0
  %v234 = vadd.f32 %v154, %v228
  %v235 = vadd.f32 %v155, %v231
  %236 = vst.msk [vmem:[#allocation2] sm:$0xff] %vm107, %v234
  %237 = vst.msk [vmem:[#allocation2 + $0x8] sm:$0xff] %vm107, %v235
  // Predicated region
  $region34: #{_lambda_.18} parent=0 // pred_check
    %p238 = pneg %p27
  $region35: #{_lambda_.18} parent=0 // pred_check_branch
    %240 = sbr.rel (%p238) target = $region37
  $region36: #{_lambda_.18} parent=0 // pred_region
    %v241 = vld [vmem:[#allocation2] sm:$0xff]
    %v242 = vld [vmem:[#allocation2 + $0x8] sm:$0xff]
    %v243 = vld [vmem:[%s4] sm:$0x1]
    %v245 = vlaneseq
    %v246 = vshrl.u32 %v245, 7
    %v247 = vsub.s32 0, %v246
    %v248 = vrot.slane %v243, %v247
    %v250 = vadd.f32 %v241, %v248
    %v251 = vadd.f32 %v242, %v248
    %v252 = vld [vmem:[%s0] sm:$0xff]
    %v253 = vld [vmem:[%s0 + $0x8] sm:$0xff]
    %v254 = vadd.f32 %v250, %v252
    %v255 = vadd.f32 %v251, %v253
    %256 = vst.msk [vmem:[%s7] sm:$0xff] %vm107, %v254
    %257 = vst.msk [vmem:[%s7 + $0x8] sm:$0xff] %vm107, %v255
  $region37: #{_lambda_.18} parent=0 // pred_fallthru
    _
  // Predicated region
  $region38: #{_lambda_.18} parent=0 // pred_check
    _
  $region39: #{_lambda_.18} parent=0 // pred_check_branch
    %259 = sbr.rel (0) target = $region41
  $region40: #{_lambda_.18} parent=0 // pred_region
    _
  $region41: #{_lambda_.18} parent=0 // pred_fallthru
    _
  // Predicated region
  $region42: #{_lambda_.18} parent=0 // pred_check
    _
  $region43: #{_lambda_.18} parent=0 // pred_check_branch
    %261 = sbr.rel (0) target = $region45
  $region44: #{_lambda_.18} parent=0 // pred_region
    _
  $region45: #{_lambda_.18} parent=0 // pred_fallthru
    _

</llo_original>
